<compile_context>
chip_gen: v6e
topology: v6e:2x2x1
jax: 0.10.0
libtpu: 0.0.40
codegen_flags: <defaults>
</compile_context>

<pallas_src>
import jax
import jax.numpy as jnp
from jax.experimental import pallas as pl
from jax.experimental.pallas import tpu as pltpu


# ----------------------------- Pallas kernel ------------------------------ #
def _make_fused_lstm_kernel(L, T, B, H):
    """Build a kernel computing the full multi-layer LSTM forward in one call.

    Kernel refs (in order):
      x_ref          : (T*B, D_in)           bfloat16
      h0_ref, c0_ref : (L, B, H)             float32
      layer 0        : w_ih0_t (D_in, 4H) bf16, w_hh0_t (H, 4H) bf16, b0 (1,4H) f32
      layer l >= 1   : w_cat_l (2H, 4H) bf16 (= [W_ih^T; W_hh^T]), b_l (1,4H) f32
      out_ref        : (B, H) f32  -- h_T of the last layer == out[-1]
    Gate order follows PyTorch: [i, f, g, o].
    """
    n_w = 3 + 2 * (L - 1)

    def kernel(*refs):
        x_ref, h0_ref, c0_ref = refs[0], refs[1], refs[2]
        w_refs = refs[3:3 + n_w]
        out_ref = refs[3 + n_w]

        def gate_update(gates, c_prev):
            # H is a multiple of 128, so every gate slice is lane-aligned
            # (no cross-lane relayout / XLU shifts).
            i = jax.nn.sigmoid(gates[:, 0 * H:1 * H])
            f = jax.nn.sigmoid(gates[:, 1 * H:2 * H])
            g = jnp.tanh(gates[:, 2 * H:3 * H])
            o = jax.nn.sigmoid(gates[:, 3 * H:4 * H])
            c_new = f * c_prev + i * g                    # f32 elementwise
            return o * jnp.tanh(c_new), c_new

        # Layer 0 input contribution for ALL time steps: one bf16 MXU matmul,
        # off the serial h_{t-1}->h_t chain, bias broadcast folded in once.
        xw0 = jnp.dot(x_ref[...], w_refs[0][...],
                      preferred_element_type=jnp.float32) + w_refs[2][...]

        h = [h0_ref[l] for l in range(L)]                 # (B, H) f32 each
        c = [c0_ref[l] for l in range(L)]
        # feed[l] = latest h emitted by layer l-1 (input to layer l's next step)
        feed = [None] * (L + 1)

        # Wavefront over time + layers, fully unrolled at trace time.
        # At iteration s every active layer's matmul depends only on state
        # produced at iteration s-1, so the matmuls are mutually independent.
        for s in range(T + L - 1):
            nh, nc, nf = list(h), list(c), list(feed)

            if s < T:                                     # layer 0, step s
                gates0 = xw0[s * B:(s + 1) * B, :] + jnp.dot(
                    h[0].astype(jnp.bfloat16), w_refs[1][...],
                    preferred_element_type=jnp.float32)
                nh[0], nc[0] = gate_update(gates0, c[0])
                nf[1] = nh[0]

            for l in range(1, L):                         # layer l, step s-l
                t = s - l
                if 0 <= t < T:
                    w_cat_ref = w_refs[3 + 2 * (l - 1)]
                    b_ref = w_refs[3 + 2 * (l - 1) + 1]
                    # Fused input+recurrent matmul: (B,2H) x (2H,4H).
                    inp = jnp.concatenate(
                        [feed[l].astype(jnp.bfloat16),
                         h[l].astype(jnp.bfloat16)], axis=1)
                    gates = jnp.dot(inp, w_cat_ref[...],
                                    preferred_element_type=jnp.float32) + b_ref[...]
                    nh[l], nc[l] = gate_update(gates, c[l])
                    nf[l + 1] = nh[l]

            h, c, feed = nh, nc, nf

        out_ref[...] = h[L - 1].astype(out_ref.dtype)     # out[-1]

    return kernel


# --------------------------- parameter preparation ------------------------- #
def prepare_params(params):
    """One-time prep, hoisted out of the per-forward path (perf review):
    transpose, fuse b_ih+b_hh, stack layer>=1 [W_ih^T; W_hh^T], cast to bf16."""
    prepped = []
    for layer, (w_ih, w_hh, b_ih, b_hh) in enumerate(params):
        bias = (b_ih + b_hh).reshape(1, -1).astype(jnp.float32)
        if layer == 0:
            prepped.append(jnp.transpose(w_ih).astype(jnp.bfloat16))   # (D_in, 4H)
            prepped.append(jnp.transpose(w_hh).astype(jnp.bfloat16))   # (H, 4H)
            prepped.append(bias)                                       # (1, 4H) f32
        else:
            w_cat = jnp.concatenate(
                [jnp.transpose(w_ih), jnp.transpose(w_hh)], axis=0)    # (2H, 4H)
            prepped.append(w_cat.astype(jnp.bfloat16))
            prepped.append(bias)
    return [jax.block_until_ready(w) for w in prepped]


def lstm_tagger_forward(x, h0, c0, prepped):
    """Equivalent of LSTMTagger.forward: multi-layer LSTM, return out[-1]."""
    T, B, D_in = x.shape
    L, _, H = h0.shape
    # Gate slicing assumes lane-aligned (no XLU relayout) gate columns.
    assert H % 128 == 0, "hidden_dim must be a multiple of 128"

    kernel = _make_fused_lstm_kernel(L, T, B, H)
    n_in = 3 + len(prepped)

    return pl.pallas_call(
        kernel,
        out_shape=jax.ShapeDtypeStruct((B, H), jnp.float32),
        in_specs=[pl.BlockSpec(memory_space=pltpu.MemorySpace.VMEM)] * n_in,
        out_specs=pl.BlockSpec(memory_space=pltpu.MemorySpace.VMEM),
    )(x.reshape(T * B, D_in).astype(jnp.bfloat16), h0, c0, *prepped)


# --------------------------- parameter init -------------------------------- #
def init_lstm_params(key, input_dim, hidden_dim, layer_nums):
    """PyTorch-style uniform(-1/sqrt(H), 1/sqrt(H)) init for every tensor."""
    k = 1.0 / jnp.sqrt(jnp.float32(hidden_dim))
    params = []
    for layer in range(layer_nums):
        d_in = input_dim if layer == 0 else hidden_dim
        key, k1, k2, k3, k4 = jax.random.split(key, 5)
        w_ih = jax.random.uniform(k1, (4 * hidden_dim, d_in), jnp.float32, -k, k)
        w_hh = jax.random.uniform(k2, (4 * hidden_dim, hidden_dim), jnp.float32, -k, k)
        b_ih = jax.random.uniform(k3, (4 * hidden_dim,), jnp.float32, -k, k)
        b_hh = jax.random.uniform(k4, (4 * hidden_dim,), jnp.float32, -k, k)
        params.append((w_ih, w_hh, b_ih, b_hh))
    return params


# ----------------------------- pure-JAX reference -------------------------- #
def lstm_tagger_ref(x, h0, c0, params):
    T, B, _ = x.shape
    layer_in = x
    for layer, (w_ih, w_hh, b_ih, b_hh) in enumerate(params):
        H = w_hh.shape[1]
        h = h0[layer]
        c = c0[layer]
        outs = []
        for t in range(T):
            gates = (jnp.dot(layer_in[t], w_ih.T,
                             precision=jax.lax.Precision.HIGHEST)
                     + jnp.dot(h, w_hh.T, precision=jax.lax.Precision.HIGHEST)
                     + b_ih + b_hh)
            i = jax.nn.sigmoid(gates[:, 0 * H:1 * H])
            f = jax.nn.sigmoid(gates[:, 1 * H:2 * H])
            g = jnp.tanh(gates[:, 2 * H:3 * H])
            o = jax.nn.sigmoid(gates[:, 3 * H:4 * H])
            c = f * c + i * g
            h = o * jnp.tanh(c)
            outs.append(h)
        layer_in = jnp.stack(outs, axis=0)
    return layer_in[-1]


# ---------------------------------- main ----------------------------------- #
if __name__ == "__main__":
    batch_size = 1        # hard-coded in the reference module
    input_dim = 16
    hidden_dim = 128      # classes_no tied to hidden_dim (module's init_hidden);
                          # 128 keeps every gate slice a full 128-lane vreg.
    layer_nums = 2
    seq_len = 8

    key = jax.random.PRNGKey(0)
    key, kx, kh, kc, kp = jax.random.split(key, 5)

    x = jax.random.normal(kx, (seq_len, batch_size, input_dim), jnp.float32)
    # init_hidden(): randn hidden/cell states (deterministic here via PRNG).
    h0 = jax.random.normal(kh, (layer_nums, batch_size, hidden_dim), jnp.float32)
    c0 = jax.random.normal(kc, (layer_nums, batch_size, hidden_dim), jnp.float32)

    params = init_lstm_params(kp, input_dim, hidden_dim, layer_nums)
    prepped = prepare_params(params)   # one-time prep, outside the forward path

    last_out = lstm_tagger_forward(x, h0, c0, prepped)
    last_out = jax.block_until_ready(last_out)

    ref = lstm_tagger_ref(x, h0, c0, params)
    assert last_out.shape == (batch_size, hidden_dim)
    # Tolerance is precision-driven, not a correctness bug: the kernel runs the
    # matmuls with bf16 weights/activations (f32 accumulation), while the
    # reference uses f32 HIGHEST; bf16 rounding accumulated through T=8
    # recurrent steps across 2 layers motivates the 3e-2 bound.
    assert jnp.allclose(last_out, ref, rtol=3e-2, atol=3e-2), (
        f"max abs err = {jnp.max(jnp.abs(last_out - ref))}")

    # TODO(synk): register_backward_hook is an autograd-time side effect with
    # no forward-pass equivalent; intentionally not modeled.
    print("KERNEL_OK")
</pallas_src>

<mosaic_0001>
module attributes {stable_mosaic.version = 11 : i64} {
  func.func @kernel(%arg0: memref<8x16xbf16, #tpu.memory_space<vmem>>, %arg1: memref<2x1x128xf32, #tpu.memory_space<vmem>>, %arg2: memref<2x1x128xf32, #tpu.memory_space<vmem>>, %arg3: memref<16x512xbf16, #tpu.memory_space<vmem>>, %arg4: memref<128x512xbf16, #tpu.memory_space<vmem>>, %arg5: memref<1x512xf32, #tpu.memory_space<vmem>>, %arg6: memref<256x512xbf16, #tpu.memory_space<vmem>>, %arg7: memref<1x512xf32, #tpu.memory_space<vmem>>, %arg8: memref<1x128xf32, #tpu.memory_space<vmem>>) attributes {dimension_semantics = [], scalar_prefetch = 0 : i64, scratch_operands = 0 : i64, tpu.core_type = #tpu.core_type<tc>} {
    %c0 = arith.constant 0 : index
    %c0_0 = arith.constant 0 : index
    %0 = vector.load %arg0[%c0, %c0_0] : memref<8x16xbf16, #tpu.memory_space<vmem>>, vector<8x16xbf16>
    %c0_1 = arith.constant 0 : index
    %c0_2 = arith.constant 0 : index
    %1 = vector.load %arg3[%c0_1, %c0_2] : memref<16x512xbf16, #tpu.memory_space<vmem>>, vector<16x512xbf16>
    %cst = arith.constant dense<0.000000e+00> : vector<8x512xf32>
    %2 = tpu.matmul %0, %1, %cst {dimension_numbers = #tpu.dot_dimension_numbers<[1], [0], [0], [1], [0, 0, 1, 1], [], []>} : vector<8x16xbf16>, vector<16x512xbf16>, vector<8x512xf32> -> vector<8x512xf32>
    %c0_3 = arith.constant 0 : index
    %c0_4 = arith.constant 0 : index
    %3 = vector.load %arg5[%c0_3, %c0_4] : memref<1x512xf32, #tpu.memory_space<vmem>>, vector<1x512xf32>
    %4 = vector.broadcast %3 : vector<1x512xf32> to vector<8x512xf32>
    %5 = arith.addf %2, %4 : vector<8x512xf32>
    %c0_5 = arith.constant 0 : index
    %c0_6 = arith.constant 0 : index
    %c0_7 = arith.constant 0 : index
    %6 = vector.load %arg1[%c0_5, %c0_6, %c0_7] : memref<2x1x128xf32, #tpu.memory_space<vmem>>, vector<1x1x128xf32>
    %7 = vector.shape_cast %6 : vector<1x1x128xf32> to vector<1x128xf32>
    %c1 = arith.constant 1 : index
    %c0_8 = arith.constant 0 : index
    %c0_9 = arith.constant 0 : index
    %8 = vector.load %arg1[%c1, %c0_8, %c0_9] : memref<2x1x128xf32, #tpu.memory_space<vmem>>, vector<1x1x128xf32>
    %9 = vector.shape_cast %8 : vector<1x1x128xf32> to vector<1x128xf32>
    %c0_10 = arith.constant 0 : index
    %c0_11 = arith.constant 0 : index
    %c0_12 = arith.constant 0 : index
    %10 = vector.load %arg2[%c0_10, %c0_11, %c0_12] : memref<2x1x128xf32, #tpu.memory_space<vmem>>, vector<1x1x128xf32>
    %11 = vector.shape_cast %10 : vector<1x1x128xf32> to vector<1x128xf32>
    %c1_13 = arith.constant 1 : index
    %c0_14 = arith.constant 0 : index
    %c0_15 = arith.constant 0 : index
    %12 = vector.load %arg2[%c1_13, %c0_14, %c0_15] : memref<2x1x128xf32, #tpu.memory_space<vmem>>, vector<1x1x128xf32>
    %13 = vector.shape_cast %12 : vector<1x1x128xf32> to vector<1x128xf32>
    %14 = vector.extract_strided_slice %5 {offsets = [0, 0], sizes = [1, 512], strides = [1, 1]} : vector<8x512xf32> to vector<1x512xf32>
    %15 = arith.truncf %7 : vector<1x128xf32> to vector<1x128xbf16>
    %c0_16 = arith.constant 0 : index
    %c0_17 = arith.constant 0 : index
    %16 = vector.load %arg4[%c0_16, %c0_17] : memref<128x512xbf16, #tpu.memory_space<vmem>>, vector<128x512xbf16>
    %cst_18 = arith.constant dense<0.000000e+00> : vector<1x512xf32>
    %17 = tpu.matmul %15, %16, %cst_18 {dimension_numbers = #tpu.dot_dimension_numbers<[1], [0], [0], [1], [0, 0, 1, 1], [], []>} : vector<1x128xbf16>, vector<128x512xbf16>, vector<1x512xf32> -> vector<1x512xf32>
    %18 = arith.addf %14, %17 : vector<1x512xf32>
    %19 = vector.extract_strided_slice %18 {offsets = [0, 0], sizes = [1, 128], strides = [1, 1]} : vector<1x512xf32> to vector<1x128xf32>
    %20 = arith.negf %19 : vector<1x128xf32>
    %21 = math.exp %20 : vector<1x128xf32>
    %cst_19 = arith.constant 1.000000e+00 : f32
    %22 = vector.broadcast %cst_19 : f32 to vector<1x128xf32>
    %23 = arith.addf %22, %21 : vector<1x128xf32>
    %24 = arith.divf %22, %23 : vector<1x128xf32>
    %25 = vector.extract_strided_slice %18 {offsets = [0, 128], sizes = [1, 128], strides = [1, 1]} : vector<1x512xf32> to vector<1x128xf32>
    %26 = arith.negf %25 : vector<1x128xf32>
    %27 = math.exp %26 : vector<1x128xf32>
    %cst_20 = arith.constant 1.000000e+00 : f32
    %28 = vector.broadcast %cst_20 : f32 to vector<1x128xf32>
    %29 = arith.addf %28, %27 : vector<1x128xf32>
    %30 = arith.divf %28, %29 : vector<1x128xf32>
    %31 = vector.extract_strided_slice %18 {offsets = [0, 256], sizes = [1, 128], strides = [1, 1]} : vector<1x512xf32> to vector<1x128xf32>
    %32 = math.tanh %31 : vector<1x128xf32>
    %33 = vector.extract_strided_slice %18 {offsets = [0, 384], sizes = [1, 128], strides = [1, 1]} : vector<1x512xf32> to vector<1x128xf32>
    %34 = arith.negf %33 : vector<1x128xf32>
    %35 = math.exp %34 : vector<1x128xf32>
    %cst_21 = arith.constant 1.000000e+00 : f32
    %36 = vector.broadcast %cst_21 : f32 to vector<1x128xf32>
    %37 = arith.addf %36, %35 : vector<1x128xf32>
    %38 = arith.divf %36, %37 : vector<1x128xf32>
    %39 = arith.mulf %30, %11 : vector<1x128xf32>
    %40 = arith.mulf %24, %32 : vector<1x128xf32>
    %41 = arith.addf %39, %40 : vector<1x128xf32>
    %42 = math.tanh %41 : vector<1x128xf32>
    %43 = arith.mulf %38, %42 : vector<1x128xf32>
    %44 = vector.extract_strided_slice %5 {offsets = [1, 0], sizes = [1, 512], strides = [1, 1]} : vector<8x512xf32> to vector<1x512xf32>
    %45 = arith.truncf %43 : vector<1x128xf32> to vector<1x128xbf16>
    %c0_22 = arith.constant 0 : index
    %c0_23 = arith.constant 0 : index
    %46 = vector.load %arg4[%c0_22, %c0_23] : memref<128x512xbf16, #tpu.memory_space<vmem>>, vector<128x512xbf16>
    %cst_24 = arith.constant dense<0.000000e+00> : vector<1x512xf32>
    %47 = tpu.matmul %45, %46, %cst_24 {dimension_numbers = #tpu.dot_dimension_numbers<[1], [0], [0], [1], [0, 0, 1, 1], [], []>} : vector<1x128xbf16>, vector<128x512xbf16>, vector<1x512xf32> -> vector<1x512xf32>
    %48 = arith.addf %44, %47 : vector<1x512xf32>
    %49 = vector.extract_strided_slice %48 {offsets = [0, 0], sizes = [1, 128], strides = [1, 1]} : vector<1x512xf32> to vector<1x128xf32>
    %50 = arith.negf %49 : vector<1x128xf32>
    %51 = math.exp %50 : vector<1x128xf32>
    %cst_25 = arith.constant 1.000000e+00 : f32
    %52 = vector.broadcast %cst_25 : f32 to vector<1x128xf32>
    %53 = arith.addf %52, %51 : vector<1x128xf32>
    %54 = arith.divf %52, %53 : vector<1x128xf32>
    %55 = vector.extract_strided_slice %48 {offsets = [0, 128], sizes = [1, 128], strides = [1, 1]} : vector<1x512xf32> to vector<1x128xf32>
    %56 = arith.negf %55 : vector<1x128xf32>
    %57 = math.exp %56 : vector<1x128xf32>
    %cst_26 = arith.constant 1.000000e+00 : f32
    %58 = vector.broadcast %cst_26 : f32 to vector<1x128xf32>
    %59 = arith.addf %58, %57 : vector<1x128xf32>
    %60 = arith.divf %58, %59 : vector<1x128xf32>
    %61 = vector.extract_strided_slice %48 {offsets = [0, 256], sizes = [1, 128], strides = [1, 1]} : vector<1x512xf32> to vector<1x128xf32>
    %62 = math.tanh %61 : vector<1x128xf32>
    %63 = vector.extract_strided_slice %48 {offsets = [0, 384], sizes = [1, 128], strides = [1, 1]} : vector<1x512xf32> to vector<1x128xf32>
    %64 = arith.negf %63 : vector<1x128xf32>
    %65 = math.exp %64 : vector<1x128xf32>
    %cst_27 = arith.constant 1.000000e+00 : f32
    %66 = vector.broadcast %cst_27 : f32 to vector<1x128xf32>
    %67 = arith.addf %66, %65 : vector<1x128xf32>
    %68 = arith.divf %66, %67 : vector<1x128xf32>
    %69 = arith.mulf %60, %41 : vector<1x128xf32>
    %70 = arith.mulf %54, %62 : vector<1x128xf32>
    %71 = arith.addf %69, %70 : vector<1x128xf32>
    %72 = math.tanh %71 : vector<1x128xf32>
    %73 = arith.mulf %68, %72 : vector<1x128xf32>
    %74 = arith.truncf %43 : vector<1x128xf32> to vector<1x128xbf16>
    %75 = arith.truncf %9 : vector<1x128xf32> to vector<1x128xbf16>
    %76 = tpu.concatenate %74, %75 in 1 : vector<1x128xbf16>, vector<1x128xbf16> -> vector<1x256xbf16>
    %c0_28 = arith.constant 0 : index
    %c0_29 = arith.constant 0 : index
    %77 = vector.load %arg6[%c0_28, %c0_29] : memref<256x512xbf16, #tpu.memory_space<vmem>>, vector<256x512xbf16>
    %cst_30 = arith.constant dense<0.000000e+00> : vector<1x512xf32>
    %78 = tpu.matmul %76, %77, %cst_30 {dimension_numbers = #tpu.dot_dimension_numbers<[1], [0], [0], [1], [0, 0, 1, 1], [], []>} : vector<1x256xbf16>, vector<256x512xbf16>, vector<1x512xf32> -> vector<1x512xf32>
    %c0_31 = arith.constant 0 : index
    %c0_32 = arith.constant 0 : index
    %79 = vector.load %arg7[%c0_31, %c0_32] : memref<1x512xf32, #tpu.memory_space<vmem>>, vector<1x512xf32>
    %80 = arith.addf %78, %79 : vector<1x512xf32>
    %81 = vector.extract_strided_slice %80 {offsets = [0, 0], sizes = [1, 128], strides = [1, 1]} : vector<1x512xf32> to vector<1x128xf32>
    %82 = arith.negf %81 : vector<1x128xf32>
    %83 = math.exp %82 : vector<1x128xf32>
    %cst_33 = arith.constant 1.000000e+00 : f32
    %84 = vector.broadcast %cst_33 : f32 to vector<1x128xf32>
    %85 = arith.addf %84, %83 : vector<1x128xf32>
    %86 = arith.divf %84, %85 : vector<1x128xf32>
    %87 = vector.extract_strided_slice %80 {offsets = [0, 128], sizes = [1, 128], strides = [1, 1]} : vector<1x512xf32> to vector<1x128xf32>
    %88 = arith.negf %87 : vector<1x128xf32>
    %89 = math.exp %88 : vector<1x128xf32>
    %cst_34 = arith.constant 1.000000e+00 : f32
    %90 = vector.broadcast %cst_34 : f32 to vector<1x128xf32>
    %91 = arith.addf %90, %89 : vector<1x128xf32>
    %92 = arith.divf %90, %91 : vector<1x128xf32>
    %93 = vector.extract_strided_slice %80 {offsets = [0, 256], sizes = [1, 128], strides = [1, 1]} : vector<1x512xf32> to vector<1x128xf32>
    %94 = math.tanh %93 : vector<1x128xf32>
    %95 = vector.extract_strided_slice %80 {offsets = [0, 384], sizes = [1, 128], strides = [1, 1]} : vector<1x512xf32> to vector<1x128xf32>
    %96 = arith.negf %95 : vector<1x128xf32>
    %97 = math.exp %96 : vector<1x128xf32>
    %cst_35 = arith.constant 1.000000e+00 : f32
    %98 = vector.broadcast %cst_35 : f32 to vector<1x128xf32>
    %99 = arith.addf %98, %97 : vector<1x128xf32>
    %100 = arith.divf %98, %99 : vector<1x128xf32>
    %101 = arith.mulf %92, %13 : vector<1x128xf32>
    %102 = arith.mulf %86, %94 : vector<1x128xf32>
    %103 = arith.addf %101, %102 : vector<1x128xf32>
    %104 = math.tanh %103 : vector<1x128xf32>
    %105 = arith.mulf %100, %104 : vector<1x128xf32>
    %106 = vector.extract_strided_slice %5 {offsets = [2, 0], sizes = [1, 512], strides = [1, 1]} : vector<8x512xf32> to vector<1x512xf32>
    %107 = arith.truncf %73 : vector<1x128xf32> to vector<1x128xbf16>
    %c0_36 = arith.constant 0 : index
    %c0_37 = arith.constant 0 : index
    %108 = vector.load %arg4[%c0_36, %c0_37] : memref<128x512xbf16, #tpu.memory_space<vmem>>, vector<128x512xbf16>
    %cst_38 = arith.constant dense<0.000000e+00> : vector<1x512xf32>
    %109 = tpu.matmul %107, %108, %cst_38 {dimension_numbers = #tpu.dot_dimension_numbers<[1], [0], [0], [1], [0, 0, 1, 1], [], []>} : vector<1x128xbf16>, vector<128x512xbf16>, vector<1x512xf32> -> vector<1x512xf32>
    %110 = arith.addf %106, %109 : vector<1x512xf32>
    %111 = vector.extract_strided_slice %110 {offsets = [0, 0], sizes = [1, 128], strides = [1, 1]} : vector<1x512xf32> to vector<1x128xf32>
    %112 = arith.negf %111 : vector<1x128xf32>
    %113 = math.exp %112 : vector<1x128xf32>
    %cst_39 = arith.constant 1.000000e+00 : f32
    %114 = vector.broadcast %cst_39 : f32 to vector<1x128xf32>
    %115 = arith.addf %114, %113 : vector<1x128xf32>
    %116 = arith.divf %114, %115 : vector<1x128xf32>
    %117 = vector.extract_strided_slice %110 {offsets = [0, 128], sizes = [1, 128], strides = [1, 1]} : vector<1x512xf32> to vector<1x128xf32>
    %118 = arith.negf %117 : vector<1x128xf32>
    %119 = math.exp %118 : vector<1x128xf32>
    %cst_40 = arith.constant 1.000000e+00 : f32
    %120 = vector.broadcast %cst_40 : f32 to vector<1x128xf32>
    %121 = arith.addf %120, %119 : vector<1x128xf32>
    %122 = arith.divf %120, %121 : vector<1x128xf32>
    %123 = vector.extract_strided_slice %110 {offsets = [0, 256], sizes = [1, 128], strides = [1, 1]} : vector<1x512xf32> to vector<1x128xf32>
    %124 = math.tanh %123 : vector<1x128xf32>
    %125 = vector.extract_strided_slice %110 {offsets = [0, 384], sizes = [1, 128], strides = [1, 1]} : vector<1x512xf32> to vector<1x128xf32>
    %126 = arith.negf %125 : vector<1x128xf32>
    %127 = math.exp %126 : vector<1x128xf32>
    %cst_41 = arith.constant 1.000000e+00 : f32
    %128 = vector.broadcast %cst_41 : f32 to vector<1x128xf32>
    %129 = arith.addf %128, %127 : vector<1x128xf32>
    %130 = arith.divf %128, %129 : vector<1x128xf32>
    %131 = arith.mulf %122, %71 : vector<1x128xf32>
    %132 = arith.mulf %116, %124 : vector<1x128xf32>
    %133 = arith.addf %131, %132 : vector<1x128xf32>
    %134 = math.tanh %133 : vector<1x128xf32>
    %135 = arith.mulf %130, %134 : vector<1x128xf32>
    %136 = arith.truncf %73 : vector<1x128xf32> to vector<1x128xbf16>
    %137 = arith.truncf %105 : vector<1x128xf32> to vector<1x128xbf16>
    %138 = tpu.concatenate %136, %137 in 1 : vector<1x128xbf16>, vector<1x128xbf16> -> vector<1x256xbf16>
    %c0_42 = arith.constant 0 : index
    %c0_43 = arith.constant 0 : index
    %139 = vector.load %arg6[%c0_42, %c0_43] : memref<256x512xbf16, #tpu.memory_space<vmem>>, vector<256x512xbf16>
    %cst_44 = arith.constant dense<0.000000e+00> : vector<1x512xf32>
    %140 = tpu.matmul %138, %139, %cst_44 {dimension_numbers = #tpu.dot_dimension_numbers<[1], [0], [0], [1], [0, 0, 1, 1], [], []>} : vector<1x256xbf16>, vector<256x512xbf16>, vector<1x512xf32> -> vector<1x512xf32>
    %c0_45 = arith.constant 0 : index
    %c0_46 = arith.constant 0 : index
    %141 = vector.load %arg7[%c0_45, %c0_46] : memref<1x512xf32, #tpu.memory_space<vmem>>, vector<1x512xf32>
    %142 = arith.addf %140, %141 : vector<1x512xf32>
    %143 = vector.extract_strided_slice %142 {offsets = [0, 0], sizes = [1, 128], strides = [1, 1]} : vector<1x512xf32> to vector<1x128xf32>
    %144 = arith.negf %143 : vector<1x128xf32>
    %145 = math.exp %144 : vector<1x128xf32>
    %cst_47 = arith.constant 1.000000e+00 : f32
    %146 = vector.broadcast %cst_47 : f32 to vector<1x128xf32>
    %147 = arith.addf %146, %145 : vector<1x128xf32>
    %148 = arith.divf %146, %147 : vector<1x128xf32>
    %149 = vector.extract_strided_slice %142 {offsets = [0, 128], sizes = [1, 128], strides = [1, 1]} : vector<1x512xf32> to vector<1x128xf32>
    %150 = arith.negf %149 : vector<1x128xf32>
    %151 = math.exp %150 : vector<1x128xf32>
    %cst_48 = arith.constant 1.000000e+00 : f32
    %152 = vector.broadcast %cst_48 : f32 to vector<1x128xf32>
    %153 = arith.addf %152, %151 : vector<1x128xf32>
    %154 = arith.divf %152, %153 : vector<1x128xf32>
    %155 = vector.extract_strided_slice %142 {offsets = [0, 256], sizes = [1, 128], strides = [1, 1]} : vector<1x512xf32> to vector<1x128xf32>
    %156 = math.tanh %155 : vector<1x128xf32>
    %157 = vector.extract_strided_slice %142 {offsets = [0, 384], sizes = [1, 128], strides = [1, 1]} : vector<1x512xf32> to vector<1x128xf32>
    %158 = arith.negf %157 : vector<1x128xf32>
    %159 = math.exp %158 : vector<1x128xf32>
    %cst_49 = arith.constant 1.000000e+00 : f32
    %160 = vector.broadcast %cst_49 : f32 to vector<1x128xf32>
    %161 = arith.addf %160, %159 : vector<1x128xf32>
    %162 = arith.divf %160, %161 : vector<1x128xf32>
    %163 = arith.mulf %154, %103 : vector<1x128xf32>
    %164 = arith.mulf %148, %156 : vector<1x128xf32>
    %165 = arith.addf %163, %164 : vector<1x128xf32>
    %166 = math.tanh %165 : vector<1x128xf32>
    %167 = arith.mulf %162, %166 : vector<1x128xf32>
    %168 = vector.extract_strided_slice %5 {offsets = [3, 0], sizes = [1, 512], strides = [1, 1]} : vector<8x512xf32> to vector<1x512xf32>
    %169 = arith.truncf %135 : vector<1x128xf32> to vector<1x128xbf16>
    %c0_50 = arith.constant 0 : index
    %c0_51 = arith.constant 0 : index
    %170 = vector.load %arg4[%c0_50, %c0_51] : memref<128x512xbf16, #tpu.memory_space<vmem>>, vector<128x512xbf16>
    %cst_52 = arith.constant dense<0.000000e+00> : vector<1x512xf32>
    %171 = tpu.matmul %169, %170, %cst_52 {dimension_numbers = #tpu.dot_dimension_numbers<[1], [0], [0], [1], [0, 0, 1, 1], [], []>} : vector<1x128xbf16>, vector<128x512xbf16>, vector<1x512xf32> -> vector<1x512xf32>
    %172 = arith.addf %168, %171 : vector<1x512xf32>
    %173 = vector.extract_strided_slice %172 {offsets = [0, 0], sizes = [1, 128], strides = [1, 1]} : vector<1x512xf32> to vector<1x128xf32>
    %174 = arith.negf %173 : vector<1x128xf32>
    %175 = math.exp %174 : vector<1x128xf32>
    %cst_53 = arith.constant 1.000000e+00 : f32
    %176 = vector.broadcast %cst_53 : f32 to vector<1x128xf32>
    %177 = arith.addf %176, %175 : vector<1x128xf32>
    %178 = arith.divf %176, %177 : vector<1x128xf32>
    %179 = vector.extract_strided_slice %172 {offsets = [0, 128], sizes = [1, 128], strides = [1, 1]} : vector<1x512xf32> to vector<1x128xf32>
    %180 = arith.negf %179 : vector<1x128xf32>
    %181 = math.exp %180 : vector<1x128xf32>
    %cst_54 = arith.constant 1.000000e+00 : f32
    %182 = vector.broadcast %cst_54 : f32 to vector<1x128xf32>
    %183 = arith.addf %182, %181 : vector<1x128xf32>
    %184 = arith.divf %182, %183 : vector<1x128xf32>
    %185 = vector.extract_strided_slice %172 {offsets = [0, 256], sizes = [1, 128], strides = [1, 1]} : vector<1x512xf32> to vector<1x128xf32>
    %186 = math.tanh %185 : vector<1x128xf32>
    %187 = vector.extract_strided_slice %172 {offsets = [0, 384], sizes = [1, 128], strides = [1, 1]} : vector<1x512xf32> to vector<1x128xf32>
    %188 = arith.negf %187 : vector<1x128xf32>
    %189 = math.exp %188 : vector<1x128xf32>
    %cst_55 = arith.constant 1.000000e+00 : f32
    %190 = vector.broadcast %cst_55 : f32 to vector<1x128xf32>
    %191 = arith.addf %190, %189 : vector<1x128xf32>
    %192 = arith.divf %190, %191 : vector<1x128xf32>
    %193 = arith.mulf %184, %133 : vector<1x128xf32>
    %194 = arith.mulf %178, %186 : vector<1x128xf32>
    %195 = arith.addf %193, %194 : vector<1x128xf32>
    %196 = math.tanh %195 : vector<1x128xf32>
    %197 = arith.mulf %192, %196 : vector<1x128xf32>
    %198 = arith.truncf %135 : vector<1x128xf32> to vector<1x128xbf16>
    %199 = arith.truncf %167 : vector<1x128xf32> to vector<1x128xbf16>
    %200 = tpu.concatenate %198, %199 in 1 : vector<1x128xbf16>, vector<1x128xbf16> -> vector<1x256xbf16>
    %c0_56 = arith.constant 0 : index
    %c0_57 = arith.constant 0 : index
    %201 = vector.load %arg6[%c0_56, %c0_57] : memref<256x512xbf16, #tpu.memory_space<vmem>>, vector<256x512xbf16>
    %cst_58 = arith.constant dense<0.000000e+00> : vector<1x512xf32>
    %202 = tpu.matmul %200, %201, %cst_58 {dimension_numbers = #tpu.dot_dimension_numbers<[1], [0], [0], [1], [0, 0, 1, 1], [], []>} : vector<1x256xbf16>, vector<256x512xbf16>, vector<1x512xf32> -> vector<1x512xf32>
    %c0_59 = arith.constant 0 : index
    %c0_60 = arith.constant 0 : index
    %203 = vector.load %arg7[%c0_59, %c0_60] : memref<1x512xf32, #tpu.memory_space<vmem>>, vector<1x512xf32>
    %204 = arith.addf %202, %203 : vector<1x512xf32>
    %205 = vector.extract_strided_slice %204 {offsets = [0, 0], sizes = [1, 128], strides = [1, 1]} : vector<1x512xf32> to vector<1x128xf32>
    %206 = arith.negf %205 : vector<1x128xf32>
    %207 = math.exp %206 : vector<1x128xf32>
    %cst_61 = arith.constant 1.000000e+00 : f32
    %208 = vector.broadcast %cst_61 : f32 to vector<1x128xf32>
    %209 = arith.addf %208, %207 : vector<1x128xf32>
    %210 = arith.divf %208, %209 : vector<1x128xf32>
    %211 = vector.extract_strided_slice %204 {offsets = [0, 128], sizes = [1, 128], strides = [1, 1]} : vector<1x512xf32> to vector<1x128xf32>
    %212 = arith.negf %211 : vector<1x128xf32>
    %213 = math.exp %212 : vector<1x128xf32>
    %cst_62 = arith.constant 1.000000e+00 : f32
    %214 = vector.broadcast %cst_62 : f32 to vector<1x128xf32>
    %215 = arith.addf %214, %213 : vector<1x128xf32>
    %216 = arith.divf %214, %215 : vector<1x128xf32>
    %217 = vector.extract_strided_slice %204 {offsets = [0, 256], sizes = [1, 128], strides = [1, 1]} : vector<1x512xf32> to vector<1x128xf32>
    %218 = math.tanh %217 : vector<1x128xf32>
    %219 = vector.extract_strided_slice %204 {offsets = [0, 384], sizes = [1, 128], strides = [1, 1]} : vector<1x512xf32> to vector<1x128xf32>
    %220 = arith.negf %219 : vector<1x128xf32>
    %221 = math.exp %220 : vector<1x128xf32>
    %cst_63 = arith.constant 1.000000e+00 : f32
    %222 = vector.broadcast %cst_63 : f32 to vector<1x128xf32>
    %223 = arith.addf %222, %221 : vector<1x128xf32>
    %224 = arith.divf %222, %223 : vector<1x128xf32>
    %225 = arith.mulf %216, %165 : vector<1x128xf32>
    %226 = arith.mulf %210, %218 : vector<1x128xf32>
    %227 = arith.addf %225, %226 : vector<1x128xf32>
    %228 = math.tanh %227 : vector<1x128xf32>
    %229 = arith.mulf %224, %228 : vector<1x128xf32>
    %230 = vector.extract_strided_slice %5 {offsets = [4, 0], sizes = [1, 512], strides = [1, 1]} : vector<8x512xf32> to vector<1x512xf32>
    %231 = arith.truncf %197 : vector<1x128xf32> to vector<1x128xbf16>
    %c0_64 = arith.constant 0 : index
    %c0_65 = arith.constant 0 : index
    %232 = vector.load %arg4[%c0_64, %c0_65] : memref<128x512xbf16, #tpu.memory_space<vmem>>, vector<128x512xbf16>
    %cst_66 = arith.constant dense<0.000000e+00> : vector<1x512xf32>
    %233 = tpu.matmul %231, %232, %cst_66 {dimension_numbers = #tpu.dot_dimension_numbers<[1], [0], [0], [1], [0, 0, 1, 1], [], []>} : vector<1x128xbf16>, vector<128x512xbf16>, vector<1x512xf32> -> vector<1x512xf32>
    %234 = arith.addf %230, %233 : vector<1x512xf32>
    %235 = vector.extract_strided_slice %234 {offsets = [0, 0], sizes = [1, 128], strides = [1, 1]} : vector<1x512xf32> to vector<1x128xf32>
    %236 = arith.negf %235 : vector<1x128xf32>
    %237 = math.exp %236 : vector<1x128xf32>
    %cst_67 = arith.constant 1.000000e+00 : f32
    %238 = vector.broadcast %cst_67 : f32 to vector<1x128xf32>
    %239 = arith.addf %238, %237 : vector<1x128xf32>
    %240 = arith.divf %238, %239 : vector<1x128xf32>
    %241 = vector.extract_strided_slice %234 {offsets = [0, 128], sizes = [1, 128], strides = [1, 1]} : vector<1x512xf32> to vector<1x128xf32>
    %242 = arith.negf %241 : vector<1x128xf32>
    %243 = math.exp %242 : vector<1x128xf32>
    %cst_68 = arith.constant 1.000000e+00 : f32
    %244 = vector.broadcast %cst_68 : f32 to vector<1x128xf32>
    %245 = arith.addf %244, %243 : vector<1x128xf32>
    %246 = arith.divf %244, %245 : vector<1x128xf32>
    %247 = vector.extract_strided_slice %234 {offsets = [0, 256], sizes = [1, 128], strides = [1, 1]} : vector<1x512xf32> to vector<1x128xf32>
    %248 = math.tanh %247 : vector<1x128xf32>
    %249 = vector.extract_strided_slice %234 {offsets = [0, 384], sizes = [1, 128], strides = [1, 1]} : vector<1x512xf32> to vector<1x128xf32>
    %250 = arith.negf %249 : vector<1x128xf32>
    %251 = math.exp %250 : vector<1x128xf32>
    %cst_69 = arith.constant 1.000000e+00 : f32
    %252 = vector.broadcast %cst_69 : f32 to vector<1x128xf32>
    %253 = arith.addf %252, %251 : vector<1x128xf32>
    %254 = arith.divf %252, %253 : vector<1x128xf32>
    %255 = arith.mulf %246, %195 : vector<1x128xf32>
    %256 = arith.mulf %240, %248 : vector<1x128xf32>
    %257 = arith.addf %255, %256 : vector<1x128xf32>
    %258 = math.tanh %257 : vector<1x128xf32>
    %259 = arith.mulf %254, %258 : vector<1x128xf32>
    %260 = arith.truncf %197 : vector<1x128xf32> to vector<1x128xbf16>
    %261 = arith.truncf %229 : vector<1x128xf32> to vector<1x128xbf16>
    %262 = tpu.concatenate %260, %261 in 1 : vector<1x128xbf16>, vector<1x128xbf16> -> vector<1x256xbf16>
    %c0_70 = arith.constant 0 : index
    %c0_71 = arith.constant 0 : index
    %263 = vector.load %arg6[%c0_70, %c0_71] : memref<256x512xbf16, #tpu.memory_space<vmem>>, vector<256x512xbf16>
    %cst_72 = arith.constant dense<0.000000e+00> : vector<1x512xf32>
    %264 = tpu.matmul %262, %263, %cst_72 {dimension_numbers = #tpu.dot_dimension_numbers<[1], [0], [0], [1], [0, 0, 1, 1], [], []>} : vector<1x256xbf16>, vector<256x512xbf16>, vector<1x512xf32> -> vector<1x512xf32>
    %c0_73 = arith.constant 0 : index
    %c0_74 = arith.constant 0 : index
    %265 = vector.load %arg7[%c0_73, %c0_74] : memref<1x512xf32, #tpu.memory_space<vmem>>, vector<1x512xf32>
    %266 = arith.addf %264, %265 : vector<1x512xf32>
    %267 = vector.extract_strided_slice %266 {offsets = [0, 0], sizes = [1, 128], strides = [1, 1]} : vector<1x512xf32> to vector<1x128xf32>
    %268 = arith.negf %267 : vector<1x128xf32>
    %269 = math.exp %268 : vector<1x128xf32>
    %cst_75 = arith.constant 1.000000e+00 : f32
    %270 = vector.broadcast %cst_75 : f32 to vector<1x128xf32>
    %271 = arith.addf %270, %269 : vector<1x128xf32>
    %272 = arith.divf %270, %271 : vector<1x128xf32>
    %273 = vector.extract_strided_slice %266 {offsets = [0, 128], sizes = [1, 128], strides = [1, 1]} : vector<1x512xf32> to vector<1x128xf32>
    %274 = arith.negf %273 : vector<1x128xf32>
    %275 = math.exp %274 : vector<1x128xf32>
    %cst_76 = arith.constant 1.000000e+00 : f32
    %276 = vector.broadcast %cst_76 : f32 to vector<1x128xf32>
    %277 = arith.addf %276, %275 : vector<1x128xf32>
    %278 = arith.divf %276, %277 : vector<1x128xf32>
    %279 = vector.extract_strided_slice %266 {offsets = [0, 256], sizes = [1, 128], strides = [1, 1]} : vector<1x512xf32> to vector<1x128xf32>
    %280 = math.tanh %279 : vector<1x128xf32>
    %281 = vector.extract_strided_slice %266 {offsets = [0, 384], sizes = [1, 128], strides = [1, 1]} : vector<1x512xf32> to vector<1x128xf32>
    %282 = arith.negf %281 : vector<1x128xf32>
    %283 = math.exp %282 : vector<1x128xf32>
    %cst_77 = arith.constant 1.000000e+00 : f32
    %284 = vector.broadcast %cst_77 : f32 to vector<1x128xf32>
    %285 = arith.addf %284, %283 : vector<1x128xf32>
    %286 = arith.divf %284, %285 : vector<1x128xf32>
    %287 = arith.mulf %278, %227 : vector<1x128xf32>
    %288 = arith.mulf %272, %280 : vector<1x128xf32>
    %289 = arith.addf %287, %288 : vector<1x128xf32>
    %290 = math.tanh %289 : vector<1x128xf32>
    %291 = arith.mulf %286, %290 : vector<1x128xf32>
    %292 = vector.extract_strided_slice %5 {offsets = [5, 0], sizes = [1, 512], strides = [1, 1]} : vector<8x512xf32> to vector<1x512xf32>
    %293 = arith.truncf %259 : vector<1x128xf32> to vector<1x128xbf16>
    %c0_78 = arith.constant 0 : index
    %c0_79 = arith.constant 0 : index
    %294 = vector.load %arg4[%c0_78, %c0_79] : memref<128x512xbf16, #tpu.memory_space<vmem>>, vector<128x512xbf16>
    %cst_80 = arith.constant dense<0.000000e+00> : vector<1x512xf32>
    %295 = tpu.matmul %293, %294, %cst_80 {dimension_numbers = #tpu.dot_dimension_numbers<[1], [0], [0], [1], [0, 0, 1, 1], [], []>} : vector<1x128xbf16>, vector<128x512xbf16>, vector<1x512xf32> -> vector<1x512xf32>
    %296 = arith.addf %292, %295 : vector<1x512xf32>
    %297 = vector.extract_strided_slice %296 {offsets = [0, 0], sizes = [1, 128], strides = [1, 1]} : vector<1x512xf32> to vector<1x128xf32>
    %298 = arith.negf %297 : vector<1x128xf32>
    %299 = math.exp %298 : vector<1x128xf32>
    %cst_81 = arith.constant 1.000000e+00 : f32
    %300 = vector.broadcast %cst_81 : f32 to vector<1x128xf32>
    %301 = arith.addf %300, %299 : vector<1x128xf32>
    %302 = arith.divf %300, %301 : vector<1x128xf32>
    %303 = vector.extract_strided_slice %296 {offsets = [0, 128], sizes = [1, 128], strides = [1, 1]} : vector<1x512xf32> to vector<1x128xf32>
    %304 = arith.negf %303 : vector<1x128xf32>
    %305 = math.exp %304 : vector<1x128xf32>
    %cst_82 = arith.constant 1.000000e+00 : f32
    %306 = vector.broadcast %cst_82 : f32 to vector<1x128xf32>
    %307 = arith.addf %306, %305 : vector<1x128xf32>
    %308 = arith.divf %306, %307 : vector<1x128xf32>
    %309 = vector.extract_strided_slice %296 {offsets = [0, 256], sizes = [1, 128], strides = [1, 1]} : vector<1x512xf32> to vector<1x128xf32>
    %310 = math.tanh %309 : vector<1x128xf32>
    %311 = vector.extract_strided_slice %296 {offsets = [0, 384], sizes = [1, 128], strides = [1, 1]} : vector<1x512xf32> to vector<1x128xf32>
    %312 = arith.negf %311 : vector<1x128xf32>
    %313 = math.exp %312 : vector<1x128xf32>
    %cst_83 = arith.constant 1.000000e+00 : f32
    %314 = vector.broadcast %cst_83 : f32 to vector<1x128xf32>
    %315 = arith.addf %314, %313 : vector<1x128xf32>
    %316 = arith.divf %314, %315 : vector<1x128xf32>
    %317 = arith.mulf %308, %257 : vector<1x128xf32>
    %318 = arith.mulf %302, %310 : vector<1x128xf32>
    %319 = arith.addf %317, %318 : vector<1x128xf32>
    %320 = math.tanh %319 : vector<1x128xf32>
    %321 = arith.mulf %316, %320 : vector<1x128xf32>
    %322 = arith.truncf %259 : vector<1x128xf32> to vector<1x128xbf16>
    %323 = arith.truncf %291 : vector<1x128xf32> to vector<1x128xbf16>
    %324 = tpu.concatenate %322, %323 in 1 : vector<1x128xbf16>, vector<1x128xbf16> -> vector<1x256xbf16>
    %c0_84 = arith.constant 0 : index
    %c0_85 = arith.constant 0 : index
    %325 = vector.load %arg6[%c0_84, %c0_85] : memref<256x512xbf16, #tpu.memory_space<vmem>>, vector<256x512xbf16>
    %cst_86 = arith.constant dense<0.000000e+00> : vector<1x512xf32>
    %326 = tpu.matmul %324, %325, %cst_86 {dimension_numbers = #tpu.dot_dimension_numbers<[1], [0], [0], [1], [0, 0, 1, 1], [], []>} : vector<1x256xbf16>, vector<256x512xbf16>, vector<1x512xf32> -> vector<1x512xf32>
    %c0_87 = arith.constant 0 : index
    %c0_88 = arith.constant 0 : index
    %327 = vector.load %arg7[%c0_87, %c0_88] : memref<1x512xf32, #tpu.memory_space<vmem>>, vector<1x512xf32>
    %328 = arith.addf %326, %327 : vector<1x512xf32>
    %329 = vector.extract_strided_slice %328 {offsets = [0, 0], sizes = [1, 128], strides = [1, 1]} : vector<1x512xf32> to vector<1x128xf32>
    %330 = arith.negf %329 : vector<1x128xf32>
    %331 = math.exp %330 : vector<1x128xf32>
    %cst_89 = arith.constant 1.000000e+00 : f32
    %332 = vector.broadcast %cst_89 : f32 to vector<1x128xf32>
    %333 = arith.addf %332, %331 : vector<1x128xf32>
    %334 = arith.divf %332, %333 : vector<1x128xf32>
    %335 = vector.extract_strided_slice %328 {offsets = [0, 128], sizes = [1, 128], strides = [1, 1]} : vector<1x512xf32> to vector<1x128xf32>
    %336 = arith.negf %335 : vector<1x128xf32>
    %337 = math.exp %336 : vector<1x128xf32>
    %cst_90 = arith.constant 1.000000e+00 : f32
    %338 = vector.broadcast %cst_90 : f32 to vector<1x128xf32>
    %339 = arith.addf %338, %337 : vector<1x128xf32>
    %340 = arith.divf %338, %339 : vector<1x128xf32>
    %341 = vector.extract_strided_slice %328 {offsets = [0, 256], sizes = [1, 128], strides = [1, 1]} : vector<1x512xf32> to vector<1x128xf32>
    %342 = math.tanh %341 : vector<1x128xf32>
    %343 = vector.extract_strided_slice %328 {offsets = [0, 384], sizes = [1, 128], strides = [1, 1]} : vector<1x512xf32> to vector<1x128xf32>
    %344 = arith.negf %343 : vector<1x128xf32>
    %345 = math.exp %344 : vector<1x128xf32>
    %cst_91 = arith.constant 1.000000e+00 : f32
    %346 = vector.broadcast %cst_91 : f32 to vector<1x128xf32>
    %347 = arith.addf %346, %345 : vector<1x128xf32>
    %348 = arith.divf %346, %347 : vector<1x128xf32>
    %349 = arith.mulf %340, %289 : vector<1x128xf32>
    %350 = arith.mulf %334, %342 : vector<1x128xf32>
    %351 = arith.addf %349, %350 : vector<1x128xf32>
    %352 = math.tanh %351 : vector<1x128xf32>
    %353 = arith.mulf %348, %352 : vector<1x128xf32>
    %354 = vector.extract_strided_slice %5 {offsets = [6, 0], sizes = [1, 512], strides = [1, 1]} : vector<8x512xf32> to vector<1x512xf32>
    %355 = arith.truncf %321 : vector<1x128xf32> to vector<1x128xbf16>
    %c0_92 = arith.constant 0 : index
    %c0_93 = arith.constant 0 : index
    %356 = vector.load %arg4[%c0_92, %c0_93] : memref<128x512xbf16, #tpu.memory_space<vmem>>, vector<128x512xbf16>
    %cst_94 = arith.constant dense<0.000000e+00> : vector<1x512xf32>
    %357 = tpu.matmul %355, %356, %cst_94 {dimension_numbers = #tpu.dot_dimension_numbers<[1], [0], [0], [1], [0, 0, 1, 1], [], []>} : vector<1x128xbf16>, vector<128x512xbf16>, vector<1x512xf32> -> vector<1x512xf32>
    %358 = arith.addf %354, %357 : vector<1x512xf32>
    %359 = vector.extract_strided_slice %358 {offsets = [0, 0], sizes = [1, 128], strides = [1, 1]} : vector<1x512xf32> to vector<1x128xf32>
    %360 = arith.negf %359 : vector<1x128xf32>
    %361 = math.exp %360 : vector<1x128xf32>
    %cst_95 = arith.constant 1.000000e+00 : f32
    %362 = vector.broadcast %cst_95 : f32 to vector<1x128xf32>
    %363 = arith.addf %362, %361 : vector<1x128xf32>
    %364 = arith.divf %362, %363 : vector<1x128xf32>
    %365 = vector.extract_strided_slice %358 {offsets = [0, 128], sizes = [1, 128], strides = [1, 1]} : vector<1x512xf32> to vector<1x128xf32>
    %366 = arith.negf %365 : vector<1x128xf32>
    %367 = math.exp %366 : vector<1x128xf32>
    %cst_96 = arith.constant 1.000000e+00 : f32
    %368 = vector.broadcast %cst_96 : f32 to vector<1x128xf32>
    %369 = arith.addf %368, %367 : vector<1x128xf32>
    %370 = arith.divf %368, %369 : vector<1x128xf32>
    %371 = vector.extract_strided_slice %358 {offsets = [0, 256], sizes = [1, 128], strides = [1, 1]} : vector<1x512xf32> to vector<1x128xf32>
    %372 = math.tanh %371 : vector<1x128xf32>
    %373 = vector.extract_strided_slice %358 {offsets = [0, 384], sizes = [1, 128], strides = [1, 1]} : vector<1x512xf32> to vector<1x128xf32>
    %374 = arith.negf %373 : vector<1x128xf32>
    %375 = math.exp %374 : vector<1x128xf32>
    %cst_97 = arith.constant 1.000000e+00 : f32
    %376 = vector.broadcast %cst_97 : f32 to vector<1x128xf32>
    %377 = arith.addf %376, %375 : vector<1x128xf32>
    %378 = arith.divf %376, %377 : vector<1x128xf32>
    %379 = arith.mulf %370, %319 : vector<1x128xf32>
    %380 = arith.mulf %364, %372 : vector<1x128xf32>
    %381 = arith.addf %379, %380 : vector<1x128xf32>
    %382 = math.tanh %381 : vector<1x128xf32>
    %383 = arith.mulf %378, %382 : vector<1x128xf32>
    %384 = arith.truncf %321 : vector<1x128xf32> to vector<1x128xbf16>
    %385 = arith.truncf %353 : vector<1x128xf32> to vector<1x128xbf16>
    %386 = tpu.concatenate %384, %385 in 1 : vector<1x128xbf16>, vector<1x128xbf16> -> vector<1x256xbf16>
    %c0_98 = arith.constant 0 : index
    %c0_99 = arith.constant 0 : index
    %387 = vector.load %arg6[%c0_98, %c0_99] : memref<256x512xbf16, #tpu.memory_space<vmem>>, vector<256x512xbf16>
    %cst_100 = arith.constant dense<0.000000e+00> : vector<1x512xf32>
    %388 = tpu.matmul %386, %387, %cst_100 {dimension_numbers = #tpu.dot_dimension_numbers<[1], [0], [0], [1], [0, 0, 1, 1], [], []>} : vector<1x256xbf16>, vector<256x512xbf16>, vector<1x512xf32> -> vector<1x512xf32>
    %c0_101 = arith.constant 0 : index
    %c0_102 = arith.constant 0 : index
    %389 = vector.load %arg7[%c0_101, %c0_102] : memref<1x512xf32, #tpu.memory_space<vmem>>, vector<1x512xf32>
    %390 = arith.addf %388, %389 : vector<1x512xf32>
    %391 = vector.extract_strided_slice %390 {offsets = [0, 0], sizes = [1, 128], strides = [1, 1]} : vector<1x512xf32> to vector<1x128xf32>
    %392 = arith.negf %391 : vector<1x128xf32>
    %393 = math.exp %392 : vector<1x128xf32>
    %cst_103 = arith.constant 1.000000e+00 : f32
    %394 = vector.broadcast %cst_103 : f32 to vector<1x128xf32>
    %395 = arith.addf %394, %393 : vector<1x128xf32>
    %396 = arith.divf %394, %395 : vector<1x128xf32>
    %397 = vector.extract_strided_slice %390 {offsets = [0, 128], sizes = [1, 128], strides = [1, 1]} : vector<1x512xf32> to vector<1x128xf32>
    %398 = arith.negf %397 : vector<1x128xf32>
    %399 = math.exp %398 : vector<1x128xf32>
    %cst_104 = arith.constant 1.000000e+00 : f32
    %400 = vector.broadcast %cst_104 : f32 to vector<1x128xf32>
    %401 = arith.addf %400, %399 : vector<1x128xf32>
    %402 = arith.divf %400, %401 : vector<1x128xf32>
    %403 = vector.extract_strided_slice %390 {offsets = [0, 256], sizes = [1, 128], strides = [1, 1]} : vector<1x512xf32> to vector<1x128xf32>
    %404 = math.tanh %403 : vector<1x128xf32>
    %405 = vector.extract_strided_slice %390 {offsets = [0, 384], sizes = [1, 128], strides = [1, 1]} : vector<1x512xf32> to vector<1x128xf32>
    %406 = arith.negf %405 : vector<1x128xf32>
    %407 = math.exp %406 : vector<1x128xf32>
    %cst_105 = arith.constant 1.000000e+00 : f32
    %408 = vector.broadcast %cst_105 : f32 to vector<1x128xf32>
    %409 = arith.addf %408, %407 : vector<1x128xf32>
    %410 = arith.divf %408, %409 : vector<1x128xf32>
    %411 = arith.mulf %402, %351 : vector<1x128xf32>
    %412 = arith.mulf %396, %404 : vector<1x128xf32>
    %413 = arith.addf %411, %412 : vector<1x128xf32>
    %414 = math.tanh %413 : vector<1x128xf32>
    %415 = arith.mulf %410, %414 : vector<1x128xf32>
    %416 = vector.extract_strided_slice %5 {offsets = [7, 0], sizes = [1, 512], strides = [1, 1]} : vector<8x512xf32> to vector<1x512xf32>
    %417 = arith.truncf %383 : vector<1x128xf32> to vector<1x128xbf16>
    %c0_106 = arith.constant 0 : index
    %c0_107 = arith.constant 0 : index
    %418 = vector.load %arg4[%c0_106, %c0_107] : memref<128x512xbf16, #tpu.memory_space<vmem>>, vector<128x512xbf16>
    %cst_108 = arith.constant dense<0.000000e+00> : vector<1x512xf32>
    %419 = tpu.matmul %417, %418, %cst_108 {dimension_numbers = #tpu.dot_dimension_numbers<[1], [0], [0], [1], [0, 0, 1, 1], [], []>} : vector<1x128xbf16>, vector<128x512xbf16>, vector<1x512xf32> -> vector<1x512xf32>
    %420 = arith.addf %416, %419 : vector<1x512xf32>
    %421 = vector.extract_strided_slice %420 {offsets = [0, 0], sizes = [1, 128], strides = [1, 1]} : vector<1x512xf32> to vector<1x128xf32>
    %422 = arith.negf %421 : vector<1x128xf32>
    %423 = math.exp %422 : vector<1x128xf32>
    %cst_109 = arith.constant 1.000000e+00 : f32
    %424 = vector.broadcast %cst_109 : f32 to vector<1x128xf32>
    %425 = arith.addf %424, %423 : vector<1x128xf32>
    %426 = arith.divf %424, %425 : vector<1x128xf32>
    %427 = vector.extract_strided_slice %420 {offsets = [0, 128], sizes = [1, 128], strides = [1, 1]} : vector<1x512xf32> to vector<1x128xf32>
    %428 = arith.negf %427 : vector<1x128xf32>
    %429 = math.exp %428 : vector<1x128xf32>
    %cst_110 = arith.constant 1.000000e+00 : f32
    %430 = vector.broadcast %cst_110 : f32 to vector<1x128xf32>
    %431 = arith.addf %430, %429 : vector<1x128xf32>
    %432 = arith.divf %430, %431 : vector<1x128xf32>
    %433 = vector.extract_strided_slice %420 {offsets = [0, 256], sizes = [1, 128], strides = [1, 1]} : vector<1x512xf32> to vector<1x128xf32>
    %434 = math.tanh %433 : vector<1x128xf32>
    %435 = vector.extract_strided_slice %420 {offsets = [0, 384], sizes = [1, 128], strides = [1, 1]} : vector<1x512xf32> to vector<1x128xf32>
    %436 = arith.negf %435 : vector<1x128xf32>
    %437 = math.exp %436 : vector<1x128xf32>
    %cst_111 = arith.constant 1.000000e+00 : f32
    %438 = vector.broadcast %cst_111 : f32 to vector<1x128xf32>
    %439 = arith.addf %438, %437 : vector<1x128xf32>
    %440 = arith.divf %438, %439 : vector<1x128xf32>
    %441 = arith.mulf %432, %381 : vector<1x128xf32>
    %442 = arith.mulf %426, %434 : vector<1x128xf32>
    %443 = arith.addf %441, %442 : vector<1x128xf32>
    %444 = math.tanh %443 : vector<1x128xf32>
    %445 = arith.mulf %440, %444 : vector<1x128xf32>
    %446 = arith.truncf %383 : vector<1x128xf32> to vector<1x128xbf16>
    %447 = arith.truncf %415 : vector<1x128xf32> to vector<1x128xbf16>
    %448 = tpu.concatenate %446, %447 in 1 : vector<1x128xbf16>, vector<1x128xbf16> -> vector<1x256xbf16>
    %c0_112 = arith.constant 0 : index
    %c0_113 = arith.constant 0 : index
    %449 = vector.load %arg6[%c0_112, %c0_113] : memref<256x512xbf16, #tpu.memory_space<vmem>>, vector<256x512xbf16>
    %cst_114 = arith.constant dense<0.000000e+00> : vector<1x512xf32>
    %450 = tpu.matmul %448, %449, %cst_114 {dimension_numbers = #tpu.dot_dimension_numbers<[1], [0], [0], [1], [0, 0, 1, 1], [], []>} : vector<1x256xbf16>, vector<256x512xbf16>, vector<1x512xf32> -> vector<1x512xf32>
    %c0_115 = arith.constant 0 : index
    %c0_116 = arith.constant 0 : index
    %451 = vector.load %arg7[%c0_115, %c0_116] : memref<1x512xf32, #tpu.memory_space<vmem>>, vector<1x512xf32>
    %452 = arith.addf %450, %451 : vector<1x512xf32>
    %453 = vector.extract_strided_slice %452 {offsets = [0, 0], sizes = [1, 128], strides = [1, 1]} : vector<1x512xf32> to vector<1x128xf32>
    %454 = arith.negf %453 : vector<1x128xf32>
    %455 = math.exp %454 : vector<1x128xf32>
    %cst_117 = arith.constant 1.000000e+00 : f32
    %456 = vector.broadcast %cst_117 : f32 to vector<1x128xf32>
    %457 = arith.addf %456, %455 : vector<1x128xf32>
    %458 = arith.divf %456, %457 : vector<1x128xf32>
    %459 = vector.extract_strided_slice %452 {offsets = [0, 128], sizes = [1, 128], strides = [1, 1]} : vector<1x512xf32> to vector<1x128xf32>
    %460 = arith.negf %459 : vector<1x128xf32>
    %461 = math.exp %460 : vector<1x128xf32>
    %cst_118 = arith.constant 1.000000e+00 : f32
    %462 = vector.broadcast %cst_118 : f32 to vector<1x128xf32>
    %463 = arith.addf %462, %461 : vector<1x128xf32>
    %464 = arith.divf %462, %463 : vector<1x128xf32>
    %465 = vector.extract_strided_slice %452 {offsets = [0, 256], sizes = [1, 128], strides = [1, 1]} : vector<1x512xf32> to vector<1x128xf32>
    %466 = math.tanh %465 : vector<1x128xf32>
    %467 = vector.extract_strided_slice %452 {offsets = [0, 384], sizes = [1, 128], strides = [1, 1]} : vector<1x512xf32> to vector<1x128xf32>
    %468 = arith.negf %467 : vector<1x128xf32>
    %469 = math.exp %468 : vector<1x128xf32>
    %cst_119 = arith.constant 1.000000e+00 : f32
    %470 = vector.broadcast %cst_119 : f32 to vector<1x128xf32>
    %471 = arith.addf %470, %469 : vector<1x128xf32>
    %472 = arith.divf %470, %471 : vector<1x128xf32>
    %473 = arith.mulf %464, %413 : vector<1x128xf32>
    %474 = arith.mulf %458, %466 : vector<1x128xf32>
    %475 = arith.addf %473, %474 : vector<1x128xf32>
    %476 = math.tanh %475 : vector<1x128xf32>
    %477 = arith.mulf %472, %476 : vector<1x128xf32>
    %478 = arith.truncf %445 : vector<1x128xf32> to vector<1x128xbf16>
    %479 = arith.truncf %477 : vector<1x128xf32> to vector<1x128xbf16>
    %480 = tpu.concatenate %478, %479 in 1 : vector<1x128xbf16>, vector<1x128xbf16> -> vector<1x256xbf16>
    %c0_120 = arith.constant 0 : index
    %c0_121 = arith.constant 0 : index
    %481 = vector.load %arg6[%c0_120, %c0_121] : memref<256x512xbf16, #tpu.memory_space<vmem>>, vector<256x512xbf16>
    %cst_122 = arith.constant dense<0.000000e+00> : vector<1x512xf32>
    %482 = tpu.matmul %480, %481, %cst_122 {dimension_numbers = #tpu.dot_dimension_numbers<[1], [0], [0], [1], [0, 0, 1, 1], [], []>} : vector<1x256xbf16>, vector<256x512xbf16>, vector<1x512xf32> -> vector<1x512xf32>
    %c0_123 = arith.constant 0 : index
    %c0_124 = arith.constant 0 : index
    %483 = vector.load %arg7[%c0_123, %c0_124] : memref<1x512xf32, #tpu.memory_space<vmem>>, vector<1x512xf32>
    %484 = arith.addf %482, %483 : vector<1x512xf32>
    %485 = vector.extract_strided_slice %484 {offsets = [0, 0], sizes = [1, 128], strides = [1, 1]} : vector<1x512xf32> to vector<1x128xf32>
    %486 = arith.negf %485 : vector<1x128xf32>
    %487 = math.exp %486 : vector<1x128xf32>
    %cst_125 = arith.constant 1.000000e+00 : f32
    %488 = vector.broadcast %cst_125 : f32 to vector<1x128xf32>
    %489 = arith.addf %488, %487 : vector<1x128xf32>
    %490 = arith.divf %488, %489 : vector<1x128xf32>
    %491 = vector.extract_strided_slice %484 {offsets = [0, 128], sizes = [1, 128], strides = [1, 1]} : vector<1x512xf32> to vector<1x128xf32>
    %492 = arith.negf %491 : vector<1x128xf32>
    %493 = math.exp %492 : vector<1x128xf32>
    %cst_126 = arith.constant 1.000000e+00 : f32
    %494 = vector.broadcast %cst_126 : f32 to vector<1x128xf32>
    %495 = arith.addf %494, %493 : vector<1x128xf32>
    %496 = arith.divf %494, %495 : vector<1x128xf32>
    %497 = vector.extract_strided_slice %484 {offsets = [0, 256], sizes = [1, 128], strides = [1, 1]} : vector<1x512xf32> to vector<1x128xf32>
    %498 = math.tanh %497 : vector<1x128xf32>
    %499 = vector.extract_strided_slice %484 {offsets = [0, 384], sizes = [1, 128], strides = [1, 1]} : vector<1x512xf32> to vector<1x128xf32>
    %500 = arith.negf %499 : vector<1x128xf32>
    %501 = math.exp %500 : vector<1x128xf32>
    %cst_127 = arith.constant 1.000000e+00 : f32
    %502 = vector.broadcast %cst_127 : f32 to vector<1x128xf32>
    %503 = arith.addf %502, %501 : vector<1x128xf32>
    %504 = arith.divf %502, %503 : vector<1x128xf32>
    %505 = arith.mulf %496, %475 : vector<1x128xf32>
    %506 = arith.mulf %490, %498 : vector<1x128xf32>
    %507 = arith.addf %505, %506 : vector<1x128xf32>
    %508 = math.tanh %507 : vector<1x128xf32>
    %509 = arith.mulf %504, %508 : vector<1x128xf32>
    %c0_128 = arith.constant 0 : index
    %c0_129 = arith.constant 0 : index
    %510 = vector.load %arg8[%c0_128, %c0_129] : memref<1x128xf32, #tpu.memory_space<vmem>>, vector<1x128xf32>
    tpu.vector_store %arg8[%c0_128, %c0_129], %509 {strides = array<i32>} : memref<1x128xf32, #tpu.memory_space<vmem>>, vector<1x128xf32>,
    return
  }
}

</mosaic_0001>

<llo_original>
// kernel: tpu_custom_call.1
$region0: #{tpu_custom_call.1}
  #allocation0 [shape = 'u32[]', space=smem, size = 0x4, offset = 0x4, fixed_abs, tag = 'smem constant byte address 0x4 - core index']
  #allocation1 [shape = 'u32[144,128]{1,0:T(1,128)}', space=vmem, size = 0x12000, scoped, tag = 'internal scratch']
  %s0 = inlined_call_operand.hbm [shape: bf16[8,16], index: 0, kind: input, shape index: {}]
  %s1 = inlined_call_operand.hbm [shape: f32[2,1,128], index: 1, kind: input, shape index: {}]
  %s2 = inlined_call_operand.hbm [shape: f32[2,1,128], index: 2, kind: input, shape index: {}]
  %s3 = inlined_call_operand.hbm [shape: bf16[16,512], index: 3, kind: input, shape index: {}]
  %s4 = inlined_call_operand.hbm [shape: bf16[128,512], index: 4, kind: input, shape index: {}]
  %s5 = inlined_call_operand.vmem [shape: f32[1,512], index: 5, kind: input, shape index: {}]
  %s6 = inlined_call_operand.hbm [shape: bf16[256,512], index: 6, kind: input, shape index: {}]
  %s7 = inlined_call_operand.vmem [shape: f32[1,512], index: 7, kind: input, shape index: {}]
  %s8 = inlined_call_operand.hbm [shape: f32[1,128], index: 8, kind: output, shape index: {}]
  %s9 = sld [smem:[#allocation0]]
  $region66: #{tpu_custom_call.1} parent=0
    _
  %s11 = ssub.s32 1, %s9
  %s12 = scalar_select 0, %s11, %s9
  $region1: #{tpu_custom_call.1} parent=0
    #allocation2 [shape = 'u8[2048]{0}', space=vmem, size = 0x800, scoped, tag = 'input window, operand 0, single buffered']
    #allocation3 [shape = 's32[1]{0}', space=sflag, size = 0x4, scoped, tag = 'scoped memory for tpu_custom_call.1']
    #allocation4 [shape = 's32[1]{0}', space=sflag, size = 0x4, scoped, tag = 'scoped memory for tpu_custom_call.1']
    #allocation5 [shape = 'u8[1024]{0}', space=vmem, size = 0x400, scoped, tag = 'input window, operand 1, single buffered']
    #allocation6 [shape = 's32[1]{0}', space=sflag, size = 0x4, scoped, tag = 'scoped memory for tpu_custom_call.1']
    #allocation7 [shape = 'u8[1024]{0}', space=vmem, size = 0x400, scoped, tag = 'input window, operand 2, single buffered']
    #allocation8 [shape = 'u8[16384]{0}', space=vmem, size = 0x4000, scoped, tag = 'input window, operand 3, single buffered']
    #allocation9 [shape = 's32[1]{0}', space=sflag, size = 0x4, scoped, tag = 'scoped memory for tpu_custom_call.1']
    #allocation10 [shape = 'u8[131072]{0}', space=vmem, size = 0x20000, scoped, tag = 'input window, operand 4, single buffered']
    #allocation11 [shape = 'u8[262144]{0}', space=vmem, size = 0x40000, scoped, tag = 'input window, operand 6, single buffered']
    #allocation12 [shape = 's32[1]{0}', space=sflag, size = 0x4, scoped, tag = 'scoped memory for tpu_custom_call.1']
    #allocation13 [shape = 'u8[512]{0}', space=vmem, size = 0x400, scoped, tag = 'output window, operand 0, single buffered']
    %13 = vsyncpa [#allocation3], 0
    %14 = vsyncpa [#allocation6], 0
    %15 = vsyncpa [#allocation9], 0
    %16 = vsyncpa [#allocation12], 0
    %17 = vsyncpa [#allocation4], 0
    // Predicated region
    $region2: #{tpu_custom_call.1} parent=1 // pred_check
      _
    $region3: #{tpu_custom_call.1} parent=1 // pred_check_branch
      %19 = sbr.rel (0) target = $region5
    $region4: #{tpu_custom_call.1} parent=1 // pred_region
      %s21 = ssub.s32 64, 64
      %22 = vsyncadd [#allocation3], %s21
      %s24 = sshll.u32 [#allocation2], 4
      %s25 = int_to_ptr.vmem [resolvable:$true] %s24
      %27 = dma.hbm_to_vmem [thread:$0]  %s0, 64, %s25, [#allocation3]
    $region5: #{tpu_custom_call.1} parent=1 // pred_fallthru
      _
    // Predicated region
    $region6: #{tpu_custom_call.1} parent=1 // pred_check
      _
    $region7: #{tpu_custom_call.1} parent=1 // pred_check_branch
      %29 = sbr.rel (0) target = $region9
    $region8: #{tpu_custom_call.1} parent=1 // pred_region
      %s31 = ssub.s32 32, 32
      %32 = vsyncadd [#allocation6], %s31
      %s33 = sshll.u32 [#allocation5], 4
      %s34 = int_to_ptr.vmem [resolvable:$true] %s33
      %39 = dma.hbm_to_vmem [thread:$0]  %s1, 32, %s34, [#allocation6], 16, 16, 1
    $region9: #{tpu_custom_call.1} parent=1 // pred_fallthru
      _
    // Predicated region
    $region10: #{tpu_custom_call.1} parent=1 // pred_check
      _
    $region11: #{tpu_custom_call.1} parent=1 // pred_check_branch
      %41 = sbr.rel (0) target = $region13
    $region12: #{tpu_custom_call.1} parent=1 // pred_region
      %s43 = ssub.s32 32, 32
      %44 = vsyncadd [#allocation6], %s43
      %s45 = sshll.u32 [#allocation7], 4
      %s46 = int_to_ptr.vmem [resolvable:$true] %s45
      %51 = dma.hbm_to_vmem [thread:$0]  %s2, 32, %s46, [#allocation6], 16, 16, 1
    $region13: #{tpu_custom_call.1} parent=1 // pred_fallthru
      _
    // Predicated region
    $region14: #{tpu_custom_call.1} parent=1 // pred_check
      _
    $region15: #{tpu_custom_call.1} parent=1 // pred_check_branch
      %53 = sbr.rel (0) target = $region17
    $region16: #{tpu_custom_call.1} parent=1 // pred_region
      %s55 = ssub.s32 512, 512
      %56 = vsyncadd [#allocation9], %s55
      %s57 = sshll.u32 [#allocation8], 4
      %s58 = int_to_ptr.vmem [resolvable:$true] %s57
      %63 = dma.hbm_to_vmem [thread:$0]  %s3, 512, %s58, [#allocation9], 256, 256, 16
    $region17: #{tpu_custom_call.1} parent=1 // pred_fallthru
      _
    // Predicated region
    $region18: #{tpu_custom_call.1} parent=1 // pred_check
      _
    $region19: #{tpu_custom_call.1} parent=1 // pred_check_branch
      %65 = sbr.rel (0) target = $region21
    $region20: #{tpu_custom_call.1} parent=1 // pred_region
      %s67 = ssub.s32 4096, 4096
      %68 = vsyncadd [#allocation9], %s67
      %s69 = sshll.u32 [#allocation10], 4
      %s70 = int_to_ptr.vmem [resolvable:$true] %s69
      %75 = dma.hbm_to_vmem [thread:$0]  %s4, 4096, %s70, [#allocation9], 256, 256, 16
    $region21: #{tpu_custom_call.1} parent=1 // pred_fallthru
      _
    // Predicated region
    $region22: #{tpu_custom_call.1} parent=1 // pred_check
      _
    $region23: #{tpu_custom_call.1} parent=1 // pred_check_branch
      %77 = sbr.rel (0) target = $region25
    $region24: #{tpu_custom_call.1} parent=1 // pred_region
      _
    $region25: #{tpu_custom_call.1} parent=1 // pred_fallthru
      _
    // Predicated region
    $region26: #{tpu_custom_call.1} parent=1 // pred_check
      _
    $region27: #{tpu_custom_call.1} parent=1 // pred_check_branch
      %79 = sbr.rel (0) target = $region29
    $region28: #{tpu_custom_call.1} parent=1 // pred_region
      %s81 = ssub.s32 8192, 8192
      %82 = vsyncadd [#allocation12], %s81
      %s83 = sshll.u32 [#allocation11], 4
      %s84 = int_to_ptr.vmem [resolvable:$true] %s83
      %89 = dma.hbm_to_vmem [thread:$0]  %s6, 8192, %s84, [#allocation12], 256, 256, 16
    $region29: #{tpu_custom_call.1} parent=1 // pred_fallthru
      _
    // Predicated region
    $region30: #{tpu_custom_call.1} parent=1 // pred_check
      _
    $region31: #{tpu_custom_call.1} parent=1 // pred_check_branch
      %91 = sbr.rel (0) target = $region33
    $region32: #{tpu_custom_call.1} parent=1 // pred_region
      _
    $region33: #{tpu_custom_call.1} parent=1 // pred_fallthru
      _
    // Predicated region
    $region34: #{tpu_custom_call.1} parent=1 // pred_check
      _
    $region35: #{tpu_custom_call.1} parent=1 // pred_check_branch
      %93 = sbr.rel (0) target = $region37
    $region36: #{tpu_custom_call.1} parent=1 // pred_region
      %94 = dma.done [#allocation3], 64
    $region37: #{tpu_custom_call.1} parent=1 // pred_fallthru
      _
    // Predicated region
    $region38: #{tpu_custom_call.1} parent=1 // pred_check
      _
    $region39: #{tpu_custom_call.1} parent=1 // pred_check_branch
      %96 = sbr.rel (0) target = $region41
    $region40: #{tpu_custom_call.1} parent=1 // pred_region
      %97 = dma.done [#allocation6], 32
    $region41: #{tpu_custom_call.1} parent=1 // pred_fallthru
      _
    // Predicated region
    $region42: #{tpu_custom_call.1} parent=1 // pred_check
      _
    $region43: #{tpu_custom_call.1} parent=1 // pred_check_branch
      %99 = sbr.rel (0) target = $region45
    $region44: #{tpu_custom_call.1} parent=1 // pred_region
      %100 = dma.done [#allocation6], 32
    $region45: #{tpu_custom_call.1} parent=1 // pred_fallthru
      _
    // Predicated region
    $region46: #{tpu_custom_call.1} parent=1 // pred_check
      _
    $region47: #{tpu_custom_call.1} parent=1 // pred_check_branch
      %102 = sbr.rel (0) target = $region49
    $region48: #{tpu_custom_call.1} parent=1 // pred_region
      %103 = dma.done [#allocation9], 512
    $region49: #{tpu_custom_call.1} parent=1 // pred_fallthru
      _
    // Predicated region
    $region50: #{tpu_custom_call.1} parent=1 // pred_check
      _
    $region51: #{tpu_custom_call.1} parent=1 // pred_check_branch
      %105 = sbr.rel (0) target = $region53
    $region52: #{tpu_custom_call.1} parent=1 // pred_region
      %106 = dma.done [#allocation9], 4096
    $region53: #{tpu_custom_call.1} parent=1 // pred_fallthru
      _
    // Predicated region
    $region54: #{tpu_custom_call.1} parent=1 // pred_check
      _
    $region55: #{tpu_custom_call.1} parent=1 // pred_check_branch
      %108 = sbr.rel (0) target = $region57
    $region56: #{tpu_custom_call.1} parent=1 // pred_region
      %109 = dma.done [#allocation12], 8192
    $region57: #{tpu_custom_call.1} parent=1 // pred_fallthru
      _
    %v111 = vld [vmem:[#allocation2] sm:$0xf]
    %v112 = vld [vmem:[#allocation8] sm:$0xff]
    %v113 = vld [vmem:[#allocation8 + $0x8] sm:$0xff]
    %v114 = vld [vmem:[#allocation8 + $0x10] sm:$0xff]
    %v115 = vld [vmem:[#allocation8 + $0x18] sm:$0xff]
    %v116 = vld [vmem:[%s5] sm:$0xf]
    %v118 = vlaneseq
    %v119 = vshrl.u32 %v118, 7
    %v120 = vsub.s32 0, %v119
    %v121 = vrot.slane %v116, %v120
    %v122 = vlaneseq
    %v123 = vshrl.u32 %v122, 7
    %v124 = vsub.s32 1, %v123
    %v125 = vrot.slane %v116, %v124
    %v126 = vlaneseq
    %v127 = vshrl.u32 %v126, 7
    %v128 = vsub.s32 2, %v127
    %v129 = vrot.slane %v116, %v128
    %v130 = vlaneseq
    %v131 = vshrl.u32 %v130, 7
    %v132 = vsub.s32 3, %v131
    %v133 = vrot.slane %v116, %v132
    %v142 = vunpack.c.l.b16 %v112
    %v143 = vunpack.c.h.b16 %v112
    %v144 = vunpack.c.l.b16 %v113
    %v145 = vunpack.c.h.b16 %v113
    %v146 = vunpack.c.l.b16 %v114
    %v147 = vunpack.c.h.b16 %v114
    %v148 = vunpack.c.l.b16 %v115
    %v149 = vunpack.c.h.b16 %v115
    %v150 = vpack.c.b16 %v146, %v142
    %v151 = vpack.c.b16 %v147, %v143
    %v152 = vpack.c.b16 %v148, %v144
    %v153 = vpack.c.b16 %v149, %v145
    %vm158 = vcmask 130048
    %v160 = vsel %vm158, %v111, 0
    %162 = vmatprep.subr.bf16.mxu0 0
    %163 = vmatpush1.bf16.msra.mxu0 0
    %164 = vmatprep.subr.bf16.mxu0 0
    %165 = vmatpush1.bf16.msra.mxu0 0
    %166 = vmatprep.subr.bf16.mxu0 0
    %167 = vmatpush1.bf16.msra.mxu0 0
    %168 = vmatprep.subr.bf16.mxu0 0
    %169 = vmatpush1.bf16.msra.mxu0 0
    %170 = vmatprep.subr.bf16.mxu0 0
    %171 = vmatpush1.bf16.msra.mxu0 0
    %172 = vmatprep.subr.bf16.mxu0 0
    %173 = vmatpush1.bf16.msra.mxu0 0
    %174 = vmatprep.subr.bf16.mxu0 0
    %175 = vmatpush1.bf16.msra.mxu0 0
    %176 = vmatprep.subr.bf16.mxu0 %v151
    %177 = vmatpush1.bf16.msra.mxu0 %v150
    %178 = vmatprep.subr.bf16.mxu0 0
    %179 = vmatpush2.bf16.msra.mxu0 0
    %180 = vmatprep.subr.bf16.mxu0 0
    %181 = vmatpush2.bf16.msra.mxu0 0
    %182 = vmatprep.subr.bf16.mxu0 0
    %183 = vmatpush2.bf16.msra.mxu0 0
    %184 = vmatprep.subr.bf16.mxu0 0
    %185 = vmatpush2.bf16.msra.mxu0 0
    %186 = vmatprep.subr.bf16.mxu0 0
    %187 = vmatpush2.bf16.msra.mxu0 0
    %188 = vmatprep.subr.bf16.mxu0 0
    %189 = vmatpush2.bf16.msra.mxu0 0
    %190 = vmatprep.subr.bf16.mxu0 0
    %191 = vmatpush2.bf16.msra.mxu0 0
    %192 = vmatprep.subr.bf16.mxu0 0
    %193 = vmatpush2.bf16.msra.mxu0 0
    %194 = vmatprep.mubr.bf16.mxu0 0
    %195 = vmatmul.mubr.bf16.gmra.mxu0 %v160
    %v196 = vpop.f32.mrf.mxu0
    %v197 = vadd.f32 %v121, %v196
    %v198 = vpop.f32.mrf.mxu0
    %v199 = vadd.f32 %v125, %v198
    %v200 = vpop.f32.mrf.mxu0
    %v201 = vpop.f32.mrf.mxu0
    %202 = vdwg.mxu0
    %203 = vmatprep.subr.bf16.mxu0 0
    %204 = vmatpush1.bf16.msra.mxu0 0
    %205 = vmatprep.subr.bf16.mxu0 0
    %206 = vmatpush1.bf16.msra.mxu0 0
    %207 = vmatprep.subr.bf16.mxu0 0
    %208 = vmatpush1.bf16.msra.mxu0 0
    %209 = vmatprep.subr.bf16.mxu0 0
    %210 = vmatpush1.bf16.msra.mxu0 0
    %211 = vmatprep.subr.bf16.mxu0 0
    %212 = vmatpush1.bf16.msra.mxu0 0
    %213 = vmatprep.subr.bf16.mxu0 0
    %214 = vmatpush1.bf16.msra.mxu0 0
    %215 = vmatprep.subr.bf16.mxu0 0
    %216 = vmatpush1.bf16.msra.mxu0 0
    %217 = vmatprep.subr.bf16.mxu0 %v153
    %218 = vmatpush1.bf16.msra.mxu0 %v152
    %219 = vmatprep.subr.bf16.mxu0 0
    %220 = vmatpush2.bf16.msra.mxu0 0
    %221 = vmatprep.subr.bf16.mxu0 0
    %222 = vmatpush2.bf16.msra.mxu0 0
    %223 = vmatprep.subr.bf16.mxu0 0
    %224 = vmatpush2.bf16.msra.mxu0 0
    %225 = vmatprep.subr.bf16.mxu0 0
    %226 = vmatpush2.bf16.msra.mxu0 0
    %227 = vmatprep.subr.bf16.mxu0 0
    %228 = vmatpush2.bf16.msra.mxu0 0
    %229 = vmatprep.subr.bf16.mxu0 0
    %230 = vmatpush2.bf16.msra.mxu0 0
    %231 = vmatprep.subr.bf16.mxu0 0
    %232 = vmatpush2.bf16.msra.mxu0 0
    %233 = vmatprep.subr.bf16.mxu0 0
    %234 = vmatpush2.bf16.msra.mxu0 0
    %235 = vmatprep.mubr.bf16.mxu0 0
    %236 = vmatmul.mubr.bf16.gmra.mxu0 %v160
    %v237 = vpop.f32.mrf.mxu0
    %v238 = vadd.f32 %v129, %v237
    %v239 = vpop.f32.mrf.mxu0
    %v240 = vadd.f32 %v133, %v239
    %v241 = vpop.f32.mrf.mxu0
    %v242 = vpop.f32.mrf.mxu0
    %243 = vdwg.mxu0
    %v244 = vld [vmem:[#allocation5] sm:$0x1]
    %s245 = scalar_lea.vmem [#allocation5], 1
    %v246 = vld [vmem:[%s245] sm:$0x1]
    %v247 = vld [vmem:[#allocation7] sm:$0x1]
    %s248 = scalar_lea.vmem [#allocation7], 1
    %v249 = vld [vmem:[%s248] sm:$0x1]
    %v250 = vpack.c.bf16 %v244, %v244
    %v251 = vld [vmem:[#allocation10] sm:$0xff]
    %v252 = vld [vmem:[#allocation10 + $0x8] sm:$0xff]
    %v253 = vld [vmem:[#allocation10 + $0x10] sm:$0xff]
    %v254 = vld [vmem:[#allocation10 + $0x18] sm:$0xff]
    %v255 = vld [vmem:[#allocation10 + $0x20] sm:$0xff]
    %v256 = vld [vmem:[#allocation10 + $0x28] sm:$0xff]
    %v257 = vld [vmem:[#allocation10 + $0x30] sm:$0xff]
    %v258 = vld [vmem:[#allocation10 + $0x38] sm:$0xff]
    %v259 = vld [vmem:[#allocation10 + $0x40] sm:$0xff]
    %v260 = vld [vmem:[#allocation10 + $0x48] sm:$0xff]
    %v261 = vld [vmem:[#allocation10 + $0x50] sm:$0xff]
    %v262 = vld [vmem:[#allocation10 + $0x58] sm:$0xff]
    %v263 = vld [vmem:[#allocation10 + $0x60] sm:$0xff]
    %v264 = vld [vmem:[#allocation10 + $0x68] sm:$0xff]
    %v265 = vld [vmem:[#allocation10 + $0x70] sm:$0xff]
    %v266 = vld [vmem:[#allocation10 + $0x78] sm:$0xff]
    %v267 = vld [vmem:[#allocation10 + $0x80] sm:$0xff]
    %v268 = vld [vmem:[#allocation10 + $0x88] sm:$0xff]
    %v269 = vld [vmem:[#allocation10 + $0x90] sm:$0xff]
    %v270 = vld [vmem:[#allocation10 + $0x98] sm:$0xff]
    %v271 = vld [vmem:[#allocation10 + $0xa0] sm:$0xff]
    %v272 = vld [vmem:[#allocation10 + $0xa8] sm:$0xff]
    %v273 = vld [vmem:[#allocation10 + $0xb0] sm:$0xff]
    %v274 = vld [vmem:[#allocation10 + $0xb8] sm:$0xff]
    %v275 = vld [vmem:[#allocation10 + $0xc0] sm:$0xff]
    %v276 = vld [vmem:[#allocation10 + $0xc8] sm:$0xff]
    %v277 = vld [vmem:[#allocation10 + $0xd0] sm:$0xff]
    %v278 = vld [vmem:[#allocation10 + $0xd8] sm:$0xff]
    %v279 = vld [vmem:[#allocation10 + $0xe0] sm:$0xff]
    %v280 = vld [vmem:[#allocation10 + $0xe8] sm:$0xff]
    %v281 = vld [vmem:[#allocation10 + $0xf0] sm:$0xff]
    %v282 = vld [vmem:[#allocation10 + $0xf8] sm:$0xff]
    %v315 = vunpack.c.l.b16 %v251
    %v316 = vunpack.c.h.b16 %v251
    %v317 = vunpack.c.l.b16 %v252
    %v318 = vunpack.c.h.b16 %v252
    %v319 = vunpack.c.l.b16 %v253
    %v320 = vunpack.c.h.b16 %v253
    %v321 = vunpack.c.l.b16 %v254
    %v322 = vunpack.c.h.b16 %v254
    %v323 = vunpack.c.l.b16 %v255
    %v324 = vunpack.c.h.b16 %v255
    %v325 = vunpack.c.l.b16 %v256
    %v326 = vunpack.c.h.b16 %v256
    %v327 = vunpack.c.l.b16 %v257
    %v328 = vunpack.c.h.b16 %v257
    %v329 = vunpack.c.l.b16 %v258
    %v330 = vunpack.c.h.b16 %v258
    %v331 = vunpack.c.l.b16 %v259
    %v332 = vunpack.c.h.b16 %v259
    %v333 = vunpack.c.l.b16 %v260
    %v334 = vunpack.c.h.b16 %v260
    %v335 = vunpack.c.l.b16 %v261
    %v336 = vunpack.c.h.b16 %v261
    %v337 = vunpack.c.l.b16 %v262
    %v338 = vunpack.c.h.b16 %v262
    %v339 = vunpack.c.l.b16 %v263
    %v340 = vunpack.c.h.b16 %v263
    %v341 = vunpack.c.l.b16 %v264
    %v342 = vunpack.c.h.b16 %v264
    %v343 = vunpack.c.l.b16 %v265
    %v344 = vunpack.c.h.b16 %v265
    %v345 = vunpack.c.l.b16 %v266
    %v346 = vunpack.c.h.b16 %v266
    %v347 = vunpack.c.l.b16 %v267
    %v348 = vunpack.c.h.b16 %v267
    %v349 = vunpack.c.l.b16 %v268
    %v350 = vunpack.c.h.b16 %v268
    %v351 = vunpack.c.l.b16 %v269
    %v352 = vunpack.c.h.b16 %v269
    %v353 = vunpack.c.l.b16 %v270
    %v354 = vunpack.c.h.b16 %v270
    %v355 = vunpack.c.l.b16 %v271
    %v356 = vunpack.c.h.b16 %v271
    %v357 = vunpack.c.l.b16 %v272
    %v358 = vunpack.c.h.b16 %v272
    %v359 = vunpack.c.l.b16 %v273
    %v360 = vunpack.c.h.b16 %v273
    %v361 = vunpack.c.l.b16 %v274
    %v362 = vunpack.c.h.b16 %v274
    %v363 = vunpack.c.l.b16 %v275
    %v364 = vunpack.c.h.b16 %v275
    %v365 = vunpack.c.l.b16 %v276
    %v366 = vunpack.c.h.b16 %v276
    %v367 = vunpack.c.l.b16 %v277
    %v368 = vunpack.c.h.b16 %v277
    %v369 = vunpack.c.l.b16 %v278
    %v370 = vunpack.c.h.b16 %v278
    %v371 = vunpack.c.l.b16 %v279
    %v372 = vunpack.c.h.b16 %v279
    %v373 = vunpack.c.l.b16 %v280
    %v374 = vunpack.c.h.b16 %v280
    %v375 = vunpack.c.l.b16 %v281
    %v376 = vunpack.c.h.b16 %v281
    %v377 = vunpack.c.l.b16 %v282
    %v378 = vunpack.c.h.b16 %v282
    %v379 = vpack.c.b16 %v319, %v315
    %v380 = vpack.c.b16 %v320, %v316
    %v381 = vpack.c.b16 %v321, %v317
    %v382 = vpack.c.b16 %v322, %v318
    %v383 = vpack.c.b16 %v327, %v323
    %v384 = vpack.c.b16 %v328, %v324
    %v385 = vpack.c.b16 %v329, %v325
    %v386 = vpack.c.b16 %v330, %v326
    %v387 = vpack.c.b16 %v335, %v331
    %v388 = vpack.c.b16 %v336, %v332
    %v389 = vpack.c.b16 %v337, %v333
    %v390 = vpack.c.b16 %v338, %v334
    %v391 = vpack.c.b16 %v343, %v339
    %v392 = vpack.c.b16 %v344, %v340
    %v393 = vpack.c.b16 %v345, %v341
    %v394 = vpack.c.b16 %v346, %v342
    %v395 = vpack.c.b16 %v351, %v347
    %v396 = vpack.c.b16 %v352, %v348
    %v397 = vpack.c.b16 %v353, %v349
    %v398 = vpack.c.b16 %v354, %v350
    %v399 = vpack.c.b16 %v359, %v355
    %v400 = vpack.c.b16 %v360, %v356
    %v401 = vpack.c.b16 %v361, %v357
    %v402 = vpack.c.b16 %v362, %v358
    %v403 = vpack.c.b16 %v367, %v363
    %v404 = vpack.c.b16 %v368, %v364
    %v405 = vpack.c.b16 %v369, %v365
    %v406 = vpack.c.b16 %v370, %v366
    %v407 = vpack.c.b16 %v375, %v371
    %v408 = vpack.c.b16 %v376, %v372
    %v409 = vpack.c.b16 %v377, %v373
    %v410 = vpack.c.b16 %v378, %v374
    %443 = vmatprep.subr.bf16.mxu0 %v408
    %444 = vmatpush1.bf16.msra.mxu0 %v407
    %445 = vmatprep.subr.bf16.mxu0 %v404
    %446 = vmatpush1.bf16.msra.mxu0 %v403
    %447 = vmatprep.subr.bf16.mxu0 %v400
    %448 = vmatpush1.bf16.msra.mxu0 %v399
    %449 = vmatprep.subr.bf16.mxu0 %v396
    %450 = vmatpush1.bf16.msra.mxu0 %v395
    %451 = vmatprep.subr.bf16.mxu0 %v392
    %452 = vmatpush1.bf16.msra.mxu0 %v391
    %453 = vmatprep.subr.bf16.mxu0 %v388
    %454 = vmatpush1.bf16.msra.mxu0 %v387
    %455 = vmatprep.subr.bf16.mxu0 %v384
    %456 = vmatpush1.bf16.msra.mxu0 %v383
    %457 = vmatprep.subr.bf16.mxu0 %v380
    %458 = vmatpush1.bf16.msra.mxu0 %v379
    %459 = vmatprep.subr.bf16.mxu0 0
    %460 = vmatpush2.bf16.msra.mxu0 0
    %461 = vmatprep.subr.bf16.mxu0 0
    %462 = vmatpush2.bf16.msra.mxu0 0
    %463 = vmatprep.subr.bf16.mxu0 0
    %464 = vmatpush2.bf16.msra.mxu0 0
    %465 = vmatprep.subr.bf16.mxu0 0
    %466 = vmatpush2.bf16.msra.mxu0 0
    %467 = vmatprep.subr.bf16.mxu0 0
    %468 = vmatpush2.bf16.msra.mxu0 0
    %469 = vmatprep.subr.bf16.mxu0 0
    %470 = vmatpush2.bf16.msra.mxu0 0
    %471 = vmatprep.subr.bf16.mxu0 0
    %472 = vmatpush2.bf16.msra.mxu0 0
    %473 = vmatprep.subr.bf16.mxu0 0
    %474 = vmatpush2.bf16.msra.mxu0 0
    %475 = vmatprep.mubr.bf16.mxu0 0
    %476 = vmatmul.mubr.bf16.gmra.mxu0 %v250
    %v477 = vpop.f32.mrf.mxu0
    %v478 = vadd.f32 0.0, %v477
    %v479 = vpop.f32.mrf.mxu0
    %v480 = vadd.f32 0.0, %v479
    %v481 = vpop.f32.mrf.mxu0
    %v482 = vpop.f32.mrf.mxu0
    %483 = vdwg.mxu0
    %484 = vmatprep.subr.bf16.mxu0 %v410
    %485 = vmatpush1.bf16.msra.mxu0 %v409
    %486 = vmatprep.subr.bf16.mxu0 %v406
    %487 = vmatpush1.bf16.msra.mxu0 %v405
    %488 = vmatprep.subr.bf16.mxu0 %v402
    %489 = vmatpush1.bf16.msra.mxu0 %v401
    %490 = vmatprep.subr.bf16.mxu0 %v398
    %491 = vmatpush1.bf16.msra.mxu0 %v397
    %492 = vmatprep.subr.bf16.mxu0 %v394
    %493 = vmatpush1.bf16.msra.mxu0 %v393
    %494 = vmatprep.subr.bf16.mxu0 %v390
    %495 = vmatpush1.bf16.msra.mxu0 %v389
    %496 = vmatprep.subr.bf16.mxu0 %v386
    %497 = vmatpush1.bf16.msra.mxu0 %v385
    %498 = vmatprep.subr.bf16.mxu0 %v382
    %499 = vmatpush1.bf16.msra.mxu0 %v381
    %500 = vmatprep.subr.bf16.mxu0 0
    %501 = vmatpush2.bf16.msra.mxu0 0
    %502 = vmatprep.subr.bf16.mxu0 0
    %503 = vmatpush2.bf16.msra.mxu0 0
    %504 = vmatprep.subr.bf16.mxu0 0
    %505 = vmatpush2.bf16.msra.mxu0 0
    %506 = vmatprep.subr.bf16.mxu0 0
    %507 = vmatpush2.bf16.msra.mxu0 0
    %508 = vmatprep.subr.bf16.mxu0 0
    %509 = vmatpush2.bf16.msra.mxu0 0
    %510 = vmatprep.subr.bf16.mxu0 0
    %511 = vmatpush2.bf16.msra.mxu0 0
    %512 = vmatprep.subr.bf16.mxu0 0
    %513 = vmatpush2.bf16.msra.mxu0 0
    %514 = vmatprep.subr.bf16.mxu0 0
    %515 = vmatpush2.bf16.msra.mxu0 0
    %516 = vmatprep.mubr.bf16.mxu0 0
    %517 = vmatmul.mubr.bf16.gmra.mxu0 %v250
    %v518 = vpop.f32.mrf.mxu0
    %v519 = vadd.f32 0.0, %v518
    %v520 = vpop.f32.mrf.mxu0
    %v521 = vadd.f32 0.0, %v520
    %v522 = vpop.f32.mrf.mxu0
    %v523 = vpop.f32.mrf.mxu0
    %524 = vdwg.mxu0
    %v525 = vadd.f32 %v197, %v478
    %v526 = vadd.f32 %v199, %v480
    %v527 = vadd.f32 %v238, %v519
    %v528 = vadd.f32 %v240, %v521
    %v529 = vxor.u32 %v525, 2147483648
    %v530 = vmul.f32 %v529, 1.442695
    %v531 = vpow.pop %v530
    %v532 = vadd.f32 %v531, 1.0
    %v533 = vrcp.pop %v532
    %v534 = vmul.f32 1.0, %v533
    %v535 = vxor.u32 %v526, 2147483648
    %v536 = vmul.f32 %v535, 1.442695
    %v537 = vpow.pop %v536
    %v538 = vadd.f32 %v537, 1.0
    %v539 = vrcp.pop %v538
    %v540 = vmul.f32 1.0, %v539
    %v541 = vtanh.pop %v527
    %v542 = vxor.u32 %v528, 2147483648
    %v543 = vmul.f32 %v542, 1.442695
    %v544 = vpow.pop %v543
    %v545 = vadd.f32 %v544, 1.0
    %v546 = vrcp.pop %v545
    %v547 = vmul.f32 1.0, %v546
    %v548 = vmul.f32 %v540, %v247
    %v549 = vmul.f32 %v534, %v541
    %v550 = vadd.f32 %v548, %v549
    %v551 = vtanh.pop %v550
    %v552 = vmul.f32 %v547, %v551
    %v553 = vpack.c.bf16 %v552, %v552
    %554 = vmatprep.subr.bf16.mxu0 %v408
    %555 = vmatpush1.bf16.msra.mxu0 %v407
    %556 = vmatprep.subr.bf16.mxu0 %v404
    %557 = vmatpush1.bf16.msra.mxu0 %v403
    %558 = vmatprep.subr.bf16.mxu0 %v400
    %559 = vmatpush1.bf16.msra.mxu0 %v399
    %560 = vmatprep.subr.bf16.mxu0 %v396
    %561 = vmatpush1.bf16.msra.mxu0 %v395
    %562 = vmatprep.subr.bf16.mxu0 %v392
    %563 = vmatpush1.bf16.msra.mxu0 %v391
    %564 = vmatprep.subr.bf16.mxu0 %v388
    %565 = vmatpush1.bf16.msra.mxu0 %v387
    %566 = vmatprep.subr.bf16.mxu0 %v384
    %567 = vmatpush1.bf16.msra.mxu0 %v383
    %568 = vmatprep.subr.bf16.mxu0 %v380
    %569 = vmatpush1.bf16.msra.mxu0 %v379
    %570 = vmatprep.subr.bf16.mxu0 0
    %571 = vmatpush2.bf16.msra.mxu0 0
    %572 = vmatprep.subr.bf16.mxu0 0
    %573 = vmatpush2.bf16.msra.mxu0 0
    %574 = vmatprep.subr.bf16.mxu0 0
    %575 = vmatpush2.bf16.msra.mxu0 0
    %576 = vmatprep.subr.bf16.mxu0 0
    %577 = vmatpush2.bf16.msra.mxu0 0
    %578 = vmatprep.subr.bf16.mxu0 0
    %579 = vmatpush2.bf16.msra.mxu0 0
    %580 = vmatprep.subr.bf16.mxu0 0
    %581 = vmatpush2.bf16.msra.mxu0 0
    %582 = vmatprep.subr.bf16.mxu0 0
    %583 = vmatpush2.bf16.msra.mxu0 0
    %584 = vmatprep.subr.bf16.mxu0 0
    %585 = vmatpush2.bf16.msra.mxu0 0
    %586 = vmatprep.mubr.bf16.mxu0 0
    %587 = vmatmul.mubr.bf16.gmra.mxu0 %v553
    %v588 = vpop.f32.mrf.mxu0
    %v589 = vadd.f32 0.0, %v588
    %v590 = vpop.f32.mrf.mxu0
    %v591 = vadd.f32 0.0, %v590
    %v592 = vpop.f32.mrf.mxu0
    %v593 = vpop.f32.mrf.mxu0
    %594 = vdwg.mxu0
    %595 = vmatprep.subr.bf16.mxu0 %v410
    %596 = vmatpush1.bf16.msra.mxu0 %v409
    %597 = vmatprep.subr.bf16.mxu0 %v406
    %598 = vmatpush1.bf16.msra.mxu0 %v405
    %599 = vmatprep.subr.bf16.mxu0 %v402
    %600 = vmatpush1.bf16.msra.mxu0 %v401
    %601 = vmatprep.subr.bf16.mxu0 %v398
    %602 = vmatpush1.bf16.msra.mxu0 %v397
    %603 = vmatprep.subr.bf16.mxu0 %v394
    %604 = vmatpush1.bf16.msra.mxu0 %v393
    %605 = vmatprep.subr.bf16.mxu0 %v390
    %606 = vmatpush1.bf16.msra.mxu0 %v389
    %607 = vmatprep.subr.bf16.mxu0 %v386
    %608 = vmatpush1.bf16.msra.mxu0 %v385
    %609 = vmatprep.subr.bf16.mxu0 %v382
    %610 = vmatpush1.bf16.msra.mxu0 %v381
    %611 = vmatprep.subr.bf16.mxu0 0
    %612 = vmatpush2.bf16.msra.mxu0 0
    %613 = vmatprep.subr.bf16.mxu0 0
    %614 = vmatpush2.bf16.msra.mxu0 0
    %615 = vmatprep.subr.bf16.mxu0 0
    %616 = vmatpush2.bf16.msra.mxu0 0
    %617 = vmatprep.subr.bf16.mxu0 0
    %618 = vmatpush2.bf16.msra.mxu0 0
    %619 = vmatprep.subr.bf16.mxu0 0
    %620 = vmatpush2.bf16.msra.mxu0 0
    %621 = vmatprep.subr.bf16.mxu0 0
    %622 = vmatpush2.bf16.msra.mxu0 0
    %623 = vmatprep.subr.bf16.mxu0 0
    %624 = vmatpush2.bf16.msra.mxu0 0
    %625 = vmatprep.subr.bf16.mxu0 0
    %626 = vmatpush2.bf16.msra.mxu0 0
    %627 = vmatprep.mubr.bf16.mxu0 0
    %628 = vmatmul.mubr.bf16.gmra.mxu0 %v553
    %v629 = vpop.f32.mrf.mxu0
    %v630 = vadd.f32 0.0, %v629
    %v631 = vpop.f32.mrf.mxu0
    %v632 = vadd.f32 0.0, %v631
    %v633 = vpop.f32.mrf.mxu0
    %v634 = vpop.f32.mrf.mxu0
    %635 = vdwg.mxu0
    %v640 = vrot.slane %v589, 7
    %v641 = vrot.slane %v591, 7
    %v642 = vrot.slane %v630, 7
    %v643 = vrot.slane %v632, 7
    %v648 = vadd.f32 %v197, %v640
    %v649 = vadd.f32 %v199, %v641
    %v650 = vadd.f32 %v238, %v642
    %v651 = vadd.f32 %v240, %v643
    %v652 = vxor.u32 %v648, 2147483648
    %v653 = vmul.f32 %v652, 1.442695
    %v654 = vpow.pop %v653
    %v655 = vadd.f32 %v654, 1.0
    %v656 = vrcp.pop %v655
    %v657 = vmul.f32 1.0, %v656
    %v658 = vxor.u32 %v649, 2147483648
    %v659 = vmul.f32 %v658, 1.442695
    %v660 = vpow.pop %v659
    %v661 = vadd.f32 %v660, 1.0
    %v662 = vrcp.pop %v661
    %v663 = vmul.f32 1.0, %v662
    %v664 = vtanh.pop %v650
    %v665 = vxor.u32 %v651, 2147483648
    %v666 = vmul.f32 %v665, 1.442695
    %v667 = vpow.pop %v666
    %v668 = vadd.f32 %v667, 1.0
    %v669 = vrcp.pop %v668
    %v670 = vmul.f32 1.0, %v669
    %v672 = vrot.slane %v550, 7
    %v674 = vmul.f32 %v663, %v672
    %v675 = vmul.f32 %v657, %v664
    %v676 = vadd.f32 %v674, %v675
    %v677 = vtanh.pop %v676
    %v678 = vmul.f32 %v670, %v677
    %v679 = vpack.c.bf16 %v246, %v246
    %v680 = vld [vmem:[#allocation11] sm:$0xff]
    %v681 = vld [vmem:[#allocation11 + $0x8] sm:$0xff]
    %v682 = vld [vmem:[#allocation11 + $0x10] sm:$0xff]
    %v683 = vld [vmem:[#allocation11 + $0x18] sm:$0xff]
    %v684 = vld [vmem:[#allocation11 + $0x20] sm:$0xff]
    %v685 = vld [vmem:[#allocation11 + $0x28] sm:$0xff]
    %v686 = vld [vmem:[#allocation11 + $0x30] sm:$0xff]
    %v687 = vld [vmem:[#allocation11 + $0x38] sm:$0xff]
    %v688 = vld [vmem:[#allocation11 + $0x40] sm:$0xff]
    %v689 = vld [vmem:[#allocation11 + $0x48] sm:$0xff]
    %v690 = vld [vmem:[#allocation11 + $0x50] sm:$0xff]
    %v691 = vld [vmem:[#allocation11 + $0x58] sm:$0xff]
    %v692 = vld [vmem:[#allocation11 + $0x60] sm:$0xff]
    %v693 = vld [vmem:[#allocation11 + $0x68] sm:$0xff]
    %v694 = vld [vmem:[#allocation11 + $0x70] sm:$0xff]
    %v695 = vld [vmem:[#allocation11 + $0x78] sm:$0xff]
    %v696 = vld [vmem:[#allocation11 + $0x80] sm:$0xff]
    %v697 = vld [vmem:[#allocation11 + $0x88] sm:$0xff]
    %v698 = vld [vmem:[#allocation11 + $0x90] sm:$0xff]
    %v699 = vld [vmem:[#allocation11 + $0x98] sm:$0xff]
    %v700 = vld [vmem:[#allocation11 + $0xa0] sm:$0xff]
    %v701 = vld [vmem:[#allocation11 + $0xa8] sm:$0xff]
    %v702 = vld [vmem:[#allocation11 + $0xb0] sm:$0xff]
    %v703 = vld [vmem:[#allocation11 + $0xb8] sm:$0xff]
    %v704 = vld [vmem:[#allocation11 + $0xc0] sm:$0xff]
    %v705 = vld [vmem:[#allocation11 + $0xc8] sm:$0xff]
    %v706 = vld [vmem:[#allocation11 + $0xd0] sm:$0xff]
    %v707 = vld [vmem:[#allocation11 + $0xd8] sm:$0xff]
    %v708 = vld [vmem:[#allocation11 + $0xe0] sm:$0xff]
    %v709 = vld [vmem:[#allocation11 + $0xe8] sm:$0xff]
    %v710 = vld [vmem:[#allocation11 + $0xf0] sm:$0xff]
    %v711 = vld [vmem:[#allocation11 + $0xf8] sm:$0xff]
    %v712 = vld [vmem:[#allocation11 + $0x100] sm:$0xff]
    %v713 = vld [vmem:[#allocation11 + $0x108] sm:$0xff]
    %v714 = vld [vmem:[#allocation11 + $0x110] sm:$0xff]
    %v715 = vld [vmem:[#allocation11 + $0x118] sm:$0xff]
    %v716 = vld [vmem:[#allocation11 + $0x120] sm:$0xff]
    %v717 = vld [vmem:[#allocation11 + $0x128] sm:$0xff]
    %v718 = vld [vmem:[#allocation11 + $0x130] sm:$0xff]
    %v719 = vld [vmem:[#allocation11 + $0x138] sm:$0xff]
    %v720 = vld [vmem:[#allocation11 + $0x140] sm:$0xff]
    %v721 = vld [vmem:[#allocation11 + $0x148] sm:$0xff]
    %v722 = vld [vmem:[#allocation11 + $0x150] sm:$0xff]
    %v723 = vld [vmem:[#allocation11 + $0x158] sm:$0xff]
    %v724 = vld [vmem:[#allocation11 + $0x160] sm:$0xff]
    %v725 = vld [vmem:[#allocation11 + $0x168] sm:$0xff]
    %v726 = vld [vmem:[#allocation11 + $0x170] sm:$0xff]
    %v727 = vld [vmem:[#allocation11 + $0x178] sm:$0xff]
    %v728 = vld [vmem:[#allocation11 + $0x180] sm:$0xff]
    %v729 = vld [vmem:[#allocation11 + $0x188] sm:$0xff]
    %v730 = vld [vmem:[#allocation11 + $0x190] sm:$0xff]
    %v731 = vld [vmem:[#allocation11 + $0x198] sm:$0xff]
    %v732 = vld [vmem:[#allocation11 + $0x1a0] sm:$0xff]
    %v733 = vld [vmem:[#allocation11 + $0x1a8] sm:$0xff]
    %v734 = vld [vmem:[#allocation11 + $0x1b0] sm:$0xff]
    %v735 = vld [vmem:[#allocation11 + $0x1b8] sm:$0xff]
    %v736 = vld [vmem:[#allocation11 + $0x1c0] sm:$0xff]
    %v737 = vld [vmem:[#allocation11 + $0x1c8] sm:$0xff]
    %v738 = vld [vmem:[#allocation11 + $0x1d0] sm:$0xff]
    %v739 = vld [vmem:[#allocation11 + $0x1d8] sm:$0xff]
    %v740 = vld [vmem:[#allocation11 + $0x1e0] sm:$0xff]
    %v741 = vld [vmem:[#allocation11 + $0x1e8] sm:$0xff]
    %v742 = vld [vmem:[#allocation11 + $0x1f0] sm:$0xff]
    %v743 = vld [vmem:[#allocation11 + $0x1f8] sm:$0xff]
    %v744 = vld [vmem:[%s7] sm:$0xf]
    %v809 = vunpack.c.l.b16 %v680
    %v810 = vunpack.c.h.b16 %v680
    %v811 = vunpack.c.l.b16 %v681
    %v812 = vunpack.c.h.b16 %v681
    %v813 = vunpack.c.l.b16 %v682
    %v814 = vunpack.c.h.b16 %v682
    %v815 = vunpack.c.l.b16 %v683
    %v816 = vunpack.c.h.b16 %v683
    %v817 = vunpack.c.l.b16 %v684
    %v818 = vunpack.c.h.b16 %v684
    %v819 = vunpack.c.l.b16 %v685
    %v820 = vunpack.c.h.b16 %v685
    %v821 = vunpack.c.l.b16 %v686
    %v822 = vunpack.c.h.b16 %v686
    %v823 = vunpack.c.l.b16 %v687
    %v824 = vunpack.c.h.b16 %v687
    %v825 = vunpack.c.l.b16 %v688
    %v826 = vunpack.c.h.b16 %v688
    %v827 = vunpack.c.l.b16 %v689
    %v828 = vunpack.c.h.b16 %v689
    %v829 = vunpack.c.l.b16 %v690
    %v830 = vunpack.c.h.b16 %v690
    %v831 = vunpack.c.l.b16 %v691
    %v832 = vunpack.c.h.b16 %v691
    %v833 = vunpack.c.l.b16 %v692
    %v834 = vunpack.c.h.b16 %v692
    %v835 = vunpack.c.l.b16 %v693
    %v836 = vunpack.c.h.b16 %v693
    %v837 = vunpack.c.l.b16 %v694
    %v838 = vunpack.c.h.b16 %v694
    %v839 = vunpack.c.l.b16 %v695
    %v840 = vunpack.c.h.b16 %v695
    %v841 = vunpack.c.l.b16 %v696
    %v842 = vunpack.c.h.b16 %v696
    %v843 = vunpack.c.l.b16 %v697
    %v844 = vunpack.c.h.b16 %v697
    %v845 = vunpack.c.l.b16 %v698
    %v846 = vunpack.c.h.b16 %v698
    %v847 = vunpack.c.l.b16 %v699
    %v848 = vunpack.c.h.b16 %v699
    %v849 = vunpack.c.l.b16 %v700
    %v850 = vunpack.c.h.b16 %v700
    %v851 = vunpack.c.l.b16 %v701
    %v852 = vunpack.c.h.b16 %v701
    %v853 = vunpack.c.l.b16 %v702
    %v854 = vunpack.c.h.b16 %v702
    %v855 = vunpack.c.l.b16 %v703
    %v856 = vunpack.c.h.b16 %v703
    %v857 = vunpack.c.l.b16 %v704
    %v858 = vunpack.c.h.b16 %v704
    %v859 = vunpack.c.l.b16 %v705
    %v860 = vunpack.c.h.b16 %v705
    %v861 = vunpack.c.l.b16 %v706
    %v862 = vunpack.c.h.b16 %v706
    %v863 = vunpack.c.l.b16 %v707
    %v864 = vunpack.c.h.b16 %v707
    %v865 = vunpack.c.l.b16 %v708
    %v866 = vunpack.c.h.b16 %v708
    %v867 = vunpack.c.l.b16 %v709
    %v868 = vunpack.c.h.b16 %v709
    %v869 = vunpack.c.l.b16 %v710
    %v870 = vunpack.c.h.b16 %v710
    %v871 = vunpack.c.l.b16 %v711
    %v872 = vunpack.c.h.b16 %v711
    %v873 = vunpack.c.l.b16 %v712
    %v874 = vunpack.c.h.b16 %v712
    %v875 = vunpack.c.l.b16 %v713
    %v876 = vunpack.c.h.b16 %v713
    %v877 = vunpack.c.l.b16 %v714
    %v878 = vunpack.c.h.b16 %v714
    %v879 = vunpack.c.l.b16 %v715
    %v880 = vunpack.c.h.b16 %v715
    %v881 = vunpack.c.l.b16 %v716
    %v882 = vunpack.c.h.b16 %v716
    %v883 = vunpack.c.l.b16 %v717
    %v884 = vunpack.c.h.b16 %v717
    %v885 = vunpack.c.l.b16 %v718
    %v886 = vunpack.c.h.b16 %v718
    %v887 = vunpack.c.l.b16 %v719
    %v888 = vunpack.c.h.b16 %v719
    %v889 = vunpack.c.l.b16 %v720
    %v890 = vunpack.c.h.b16 %v720
    %v891 = vunpack.c.l.b16 %v721
    %v892 = vunpack.c.h.b16 %v721
    %v893 = vunpack.c.l.b16 %v722
    %v894 = vunpack.c.h.b16 %v722
    %v895 = vunpack.c.l.b16 %v723
    %v896 = vunpack.c.h.b16 %v723
    %v897 = vunpack.c.l.b16 %v724
    %v898 = vunpack.c.h.b16 %v724
    %v899 = vunpack.c.l.b16 %v725
    %v900 = vunpack.c.h.b16 %v725
    %v901 = vunpack.c.l.b16 %v726
    %v902 = vunpack.c.h.b16 %v726
    %v903 = vunpack.c.l.b16 %v727
    %v904 = vunpack.c.h.b16 %v727
    %v905 = vunpack.c.l.b16 %v728
    %v906 = vunpack.c.h.b16 %v728
    %v907 = vunpack.c.l.b16 %v729
    %v908 = vunpack.c.h.b16 %v729
    %v909 = vunpack.c.l.b16 %v730
    %v910 = vunpack.c.h.b16 %v730
    %v911 = vunpack.c.l.b16 %v731
    %v912 = vunpack.c.h.b16 %v731
    %v913 = vunpack.c.l.b16 %v732
    %v914 = vunpack.c.h.b16 %v732
    %v915 = vunpack.c.l.b16 %v733
    %v916 = vunpack.c.h.b16 %v733
    %v917 = vunpack.c.l.b16 %v734
    %v918 = vunpack.c.h.b16 %v734
    %v919 = vunpack.c.l.b16 %v735
    %v920 = vunpack.c.h.b16 %v735
    %v921 = vunpack.c.l.b16 %v736
    %v922 = vunpack.c.h.b16 %v736
    %v923 = vunpack.c.l.b16 %v737
    %v924 = vunpack.c.h.b16 %v737
    %v925 = vunpack.c.l.b16 %v738
    %v926 = vunpack.c.h.b16 %v738
    %v927 = vunpack.c.l.b16 %v739
    %v928 = vunpack.c.h.b16 %v739
    %v929 = vunpack.c.l.b16 %v740
    %v930 = vunpack.c.h.b16 %v740
    %v931 = vunpack.c.l.b16 %v741
    %v932 = vunpack.c.h.b16 %v741
    %v933 = vunpack.c.l.b16 %v742
    %v934 = vunpack.c.h.b16 %v742
    %v935 = vunpack.c.l.b16 %v743
    %v936 = vunpack.c.h.b16 %v743
    %v937 = vpack.c.b16 %v813, %v809
    %v938 = vpack.c.b16 %v814, %v810
    %v939 = vpack.c.b16 %v815, %v811
    %v940 = vpack.c.b16 %v816, %v812
    %v941 = vpack.c.b16 %v821, %v817
    %v942 = vpack.c.b16 %v822, %v818
    %v943 = vpack.c.b16 %v823, %v819
    %v944 = vpack.c.b16 %v824, %v820
    %v945 = vpack.c.b16 %v829, %v825
    %v946 = vpack.c.b16 %v830, %v826
    %v947 = vpack.c.b16 %v831, %v827
    %v948 = vpack.c.b16 %v832, %v828
    %v949 = vpack.c.b16 %v837, %v833
    %v950 = vpack.c.b16 %v838, %v834
    %v951 = vpack.c.b16 %v839, %v835
    %v952 = vpack.c.b16 %v840, %v836
    %v953 = vpack.c.b16 %v845, %v841
    %v954 = vpack.c.b16 %v846, %v842
    %v955 = vpack.c.b16 %v847, %v843
    %v956 = vpack.c.b16 %v848, %v844
    %v957 = vpack.c.b16 %v853, %v849
    %v958 = vpack.c.b16 %v854, %v850
    %v959 = vpack.c.b16 %v855, %v851
    %v960 = vpack.c.b16 %v856, %v852
    %v961 = vpack.c.b16 %v861, %v857
    %v962 = vpack.c.b16 %v862, %v858
    %v963 = vpack.c.b16 %v863, %v859
    %v964 = vpack.c.b16 %v864, %v860
    %v965 = vpack.c.b16 %v869, %v865
    %v966 = vpack.c.b16 %v870, %v866
    %v967 = vpack.c.b16 %v871, %v867
    %v968 = vpack.c.b16 %v872, %v868
    %v969 = vpack.c.b16 %v877, %v873
    %v970 = vpack.c.b16 %v878, %v874
    %v971 = vpack.c.b16 %v879, %v875
    %v972 = vpack.c.b16 %v880, %v876
    %v973 = vpack.c.b16 %v885, %v881
    %v974 = vpack.c.b16 %v886, %v882
    %v975 = vpack.c.b16 %v887, %v883
    %v976 = vpack.c.b16 %v888, %v884
    %v977 = vpack.c.b16 %v893, %v889
    %v978 = vpack.c.b16 %v894, %v890
    %v979 = vpack.c.b16 %v895, %v891
    %v980 = vpack.c.b16 %v896, %v892
    %v981 = vpack.c.b16 %v901, %v897
    %v982 = vpack.c.b16 %v902, %v898
    %v983 = vpack.c.b16 %v903, %v899
    %v984 = vpack.c.b16 %v904, %v900
    %v985 = vpack.c.b16 %v909, %v905
    %v986 = vpack.c.b16 %v910, %v906
    %v987 = vpack.c.b16 %v911, %v907
    %v988 = vpack.c.b16 %v912, %v908
    %v989 = vpack.c.b16 %v917, %v913
    %v990 = vpack.c.b16 %v918, %v914
    %v991 = vpack.c.b16 %v919, %v915
    %v992 = vpack.c.b16 %v920, %v916
    %v993 = vpack.c.b16 %v925, %v921
    %v994 = vpack.c.b16 %v926, %v922
    %v995 = vpack.c.b16 %v927, %v923
    %v996 = vpack.c.b16 %v928, %v924
    %v997 = vpack.c.b16 %v933, %v929
    %v998 = vpack.c.b16 %v934, %v930
    %v999 = vpack.c.b16 %v935, %v931
    %v1000 = vpack.c.b16 %v936, %v932
    %v1066 = vlaneseq
    %v1067 = vshrl.u32 %v1066, 7
    %v1068 = vsub.s32 0, %v1067
    %v1069 = vrot.slane %v744, %v1068
    %v1070 = vlaneseq
    %v1071 = vshrl.u32 %v1070, 7
    %v1072 = vsub.s32 1, %v1071
    %v1073 = vrot.slane %v744, %v1072
    %v1074 = vlaneseq
    %v1075 = vshrl.u32 %v1074, 7
    %v1076 = vsub.s32 2, %v1075
    %v1077 = vrot.slane %v744, %v1076
    %v1078 = vlaneseq
    %v1079 = vshrl.u32 %v1078, 7
    %v1080 = vsub.s32 3, %v1079
    %v1081 = vrot.slane %v744, %v1080
    %1086 = vmatprep.subr.bf16.mxu0 %v966
    %1087 = vmatpush1.bf16.msra.mxu0 %v965
    %1088 = vmatprep.subr.bf16.mxu0 %v962
    %1089 = vmatpush1.bf16.msra.mxu0 %v961
    %1090 = vmatprep.subr.bf16.mxu0 %v958
    %1091 = vmatpush1.bf16.msra.mxu0 %v957
    %1092 = vmatprep.subr.bf16.mxu0 %v954
    %1093 = vmatpush1.bf16.msra.mxu0 %v953
    %1094 = vmatprep.subr.bf16.mxu0 %v950
    %1095 = vmatpush1.bf16.msra.mxu0 %v949
    %1096 = vmatprep.subr.bf16.mxu0 %v946
    %1097 = vmatpush1.bf16.msra.mxu0 %v945
    %1098 = vmatprep.subr.bf16.mxu0 %v942
    %1099 = vmatpush1.bf16.msra.mxu0 %v941
    %1100 = vmatprep.subr.bf16.mxu0 %v938
    %1101 = vmatpush1.bf16.msra.mxu0 %v937
    %1102 = vmatprep.subr.bf16.mxu0 %v998
    %1103 = vmatpush2.bf16.msra.mxu0 %v997
    %1104 = vmatprep.subr.bf16.mxu0 %v994
    %1105 = vmatpush2.bf16.msra.mxu0 %v993
    %1106 = vmatprep.subr.bf16.mxu0 %v990
    %1107 = vmatpush2.bf16.msra.mxu0 %v989
    %1108 = vmatprep.subr.bf16.mxu0 %v986
    %1109 = vmatpush2.bf16.msra.mxu0 %v985
    %1110 = vmatprep.subr.bf16.mxu0 %v982
    %1111 = vmatpush2.bf16.msra.mxu0 %v981
    %1112 = vmatprep.subr.bf16.mxu0 %v978
    %1113 = vmatpush2.bf16.msra.mxu0 %v977
    %1114 = vmatprep.subr.bf16.mxu0 %v974
    %1115 = vmatpush2.bf16.msra.mxu0 %v973
    %1116 = vmatprep.subr.bf16.mxu0 %v970
    %1117 = vmatpush2.bf16.msra.mxu0 %v969
    %1118 = vmatprep.mubr.bf16.mxu0 %v679
    %1119 = vmatmul.mubr.bf16.gmra.mxu0 %v553
    %v1120 = vpop.f32.mrf.mxu0
    %v1121 = vadd.f32 %v1069, %v1120
    %v1122 = vpop.f32.mrf.mxu0
    %v1123 = vadd.f32 %v1073, %v1122
    %v1124 = vpop.f32.mrf.mxu0
    %v1125 = vpop.f32.mrf.mxu0
    %1126 = vdwg.mxu0
    %1127 = vmatprep.subr.bf16.mxu0 %v968
    %1128 = vmatpush1.bf16.msra.mxu0 %v967
    %1129 = vmatprep.subr.bf16.mxu0 %v964
    %1130 = vmatpush1.bf16.msra.mxu0 %v963
    %1131 = vmatprep.subr.bf16.mxu0 %v960
    %1132 = vmatpush1.bf16.msra.mxu0 %v959
    %1133 = vmatprep.subr.bf16.mxu0 %v956
    %1134 = vmatpush1.bf16.msra.mxu0 %v955
    %1135 = vmatprep.subr.bf16.mxu0 %v952
    %1136 = vmatpush1.bf16.msra.mxu0 %v951
    %1137 = vmatprep.subr.bf16.mxu0 %v948
    %1138 = vmatpush1.bf16.msra.mxu0 %v947
    %1139 = vmatprep.subr.bf16.mxu0 %v944
    %1140 = vmatpush1.bf16.msra.mxu0 %v943
    %1141 = vmatprep.subr.bf16.mxu0 %v940
    %1142 = vmatpush1.bf16.msra.mxu0 %v939
    %1143 = vmatprep.subr.bf16.mxu0 %v1000
    %1144 = vmatpush2.bf16.msra.mxu0 %v999
    %1145 = vmatprep.subr.bf16.mxu0 %v996
    %1146 = vmatpush2.bf16.msra.mxu0 %v995
    %1147 = vmatprep.subr.bf16.mxu0 %v992
    %1148 = vmatpush2.bf16.msra.mxu0 %v991
    %1149 = vmatprep.subr.bf16.mxu0 %v988
    %1150 = vmatpush2.bf16.msra.mxu0 %v987
    %1151 = vmatprep.subr.bf16.mxu0 %v984
    %1152 = vmatpush2.bf16.msra.mxu0 %v983
    %1153 = vmatprep.subr.bf16.mxu0 %v980
    %1154 = vmatpush2.bf16.msra.mxu0 %v979
    %1155 = vmatprep.subr.bf16.mxu0 %v976
    %1156 = vmatpush2.bf16.msra.mxu0 %v975
    %1157 = vmatprep.subr.bf16.mxu0 %v972
    %1158 = vmatpush2.bf16.msra.mxu0 %v971
    %1159 = vmatprep.mubr.bf16.mxu0 %v679
    %1160 = vmatmul.mubr.bf16.gmra.mxu0 %v553
    %v1161 = vpop.f32.mrf.mxu0
    %v1162 = vadd.f32 %v1077, %v1161
    %v1163 = vpop.f32.mrf.mxu0
    %v1164 = vadd.f32 %v1081, %v1163
    %v1165 = vpop.f32.mrf.mxu0
    %v1166 = vpop.f32.mrf.mxu0
    %1167 = vdwg.mxu0
    %v1168 = vxor.u32 %v1121, 2147483648
    %v1169 = vmul.f32 %v1168, 1.442695
    %v1170 = vpow.pop %v1169
    %v1171 = vadd.f32 %v1170, 1.0
    %v1172 = vrcp.pop %v1171
    %v1173 = vmul.f32 1.0, %v1172
    %v1174 = vxor.u32 %v1123, 2147483648
    %v1175 = vmul.f32 %v1174, 1.442695
    %v1176 = vpow.pop %v1175
    %v1177 = vadd.f32 %v1176, 1.0
    %v1178 = vrcp.pop %v1177
    %v1179 = vmul.f32 1.0, %v1178
    %v1180 = vtanh.pop %v1162
    %v1181 = vxor.u32 %v1164, 2147483648
    %v1182 = vmul.f32 %v1181, 1.442695
    %v1183 = vpow.pop %v1182
    %v1184 = vadd.f32 %v1183, 1.0
    %v1185 = vrcp.pop %v1184
    %v1186 = vmul.f32 1.0, %v1185
    %v1187 = vmul.f32 %v1179, %v249
    %v1188 = vmul.f32 %v1173, %v1180
    %v1189 = vadd.f32 %v1187, %v1188
    %v1190 = vtanh.pop %v1189
    %v1191 = vmul.f32 %v1186, %v1190
    %v1192 = vpack.c.bf16 %v678, %v678
    %v1194 = vshrl.u32 %v1192, 16
    %1197 = vmatprep.subr.bf16.mxu0 %v408
    %1198 = vmatpush1.bf16.msra.mxu0 %v407
    %1199 = vmatprep.subr.bf16.mxu0 %v404
    %1200 = vmatpush1.bf16.msra.mxu0 %v403
    %1201 = vmatprep.subr.bf16.mxu0 %v400
    %1202 = vmatpush1.bf16.msra.mxu0 %v399
    %1203 = vmatprep.subr.bf16.mxu0 %v396
    %1204 = vmatpush1.bf16.msra.mxu0 %v395
    %1205 = vmatprep.subr.bf16.mxu0 %v392
    %1206 = vmatpush1.bf16.msra.mxu0 %v391
    %1207 = vmatprep.subr.bf16.mxu0 %v388
    %1208 = vmatpush1.bf16.msra.mxu0 %v387
    %1209 = vmatprep.subr.bf16.mxu0 %v384
    %1210 = vmatpush1.bf16.msra.mxu0 %v383
    %1211 = vmatprep.subr.bf16.mxu0 %v380
    %1212 = vmatpush1.bf16.msra.mxu0 %v379
    %1213 = vmatprep.subr.bf16.mxu0 0
    %1214 = vmatpush2.bf16.msra.mxu0 0
    %1215 = vmatprep.subr.bf16.mxu0 0
    %1216 = vmatpush2.bf16.msra.mxu0 0
    %1217 = vmatprep.subr.bf16.mxu0 0
    %1218 = vmatpush2.bf16.msra.mxu0 0
    %1219 = vmatprep.subr.bf16.mxu0 0
    %1220 = vmatpush2.bf16.msra.mxu0 0
    %1221 = vmatprep.subr.bf16.mxu0 0
    %1222 = vmatpush2.bf16.msra.mxu0 0
    %1223 = vmatprep.subr.bf16.mxu0 0
    %1224 = vmatpush2.bf16.msra.mxu0 0
    %1225 = vmatprep.subr.bf16.mxu0 0
    %1226 = vmatpush2.bf16.msra.mxu0 0
    %1227 = vmatprep.subr.bf16.mxu0 0
    %1228 = vmatpush2.bf16.msra.mxu0 0
    %1229 = vmatprep.mubr.bf16.mxu0 0
    %1230 = vmatmul.mubr.bf16.gmra.mxu0 %v1194
    %v1231 = vpop.f32.mrf.mxu0
    %v1232 = vadd.f32 0.0, %v1231
    %v1233 = vpop.f32.mrf.mxu0
    %v1234 = vadd.f32 0.0, %v1233
    %v1235 = vpop.f32.mrf.mxu0
    %v1236 = vpop.f32.mrf.mxu0
    %1237 = vdwg.mxu0
    %1238 = vmatprep.subr.bf16.mxu0 %v410
    %1239 = vmatpush1.bf16.msra.mxu0 %v409
    %1240 = vmatprep.subr.bf16.mxu0 %v406
    %1241 = vmatpush1.bf16.msra.mxu0 %v405
    %1242 = vmatprep.subr.bf16.mxu0 %v402
    %1243 = vmatpush1.bf16.msra.mxu0 %v401
    %1244 = vmatprep.subr.bf16.mxu0 %v398
    %1245 = vmatpush1.bf16.msra.mxu0 %v397
    %1246 = vmatprep.subr.bf16.mxu0 %v394
    %1247 = vmatpush1.bf16.msra.mxu0 %v393
    %1248 = vmatprep.subr.bf16.mxu0 %v390
    %1249 = vmatpush1.bf16.msra.mxu0 %v389
    %1250 = vmatprep.subr.bf16.mxu0 %v386
    %1251 = vmatpush1.bf16.msra.mxu0 %v385
    %1252 = vmatprep.subr.bf16.mxu0 %v382
    %1253 = vmatpush1.bf16.msra.mxu0 %v381
    %1254 = vmatprep.subr.bf16.mxu0 0
    %1255 = vmatpush2.bf16.msra.mxu0 0
    %1256 = vmatprep.subr.bf16.mxu0 0
    %1257 = vmatpush2.bf16.msra.mxu0 0
    %1258 = vmatprep.subr.bf16.mxu0 0
    %1259 = vmatpush2.bf16.msra.mxu0 0
    %1260 = vmatprep.subr.bf16.mxu0 0
    %1261 = vmatpush2.bf16.msra.mxu0 0
    %1262 = vmatprep.subr.bf16.mxu0 0
    %1263 = vmatpush2.bf16.msra.mxu0 0
    %1264 = vmatprep.subr.bf16.mxu0 0
    %1265 = vmatpush2.bf16.msra.mxu0 0
    %1266 = vmatprep.subr.bf16.mxu0 0
    %1267 = vmatpush2.bf16.msra.mxu0 0
    %1268 = vmatprep.subr.bf16.mxu0 0
    %1269 = vmatpush2.bf16.msra.mxu0 0
    %1270 = vmatprep.mubr.bf16.mxu0 0
    %1271 = vmatmul.mubr.bf16.gmra.mxu0 %v1194
    %v1272 = vpop.f32.mrf.mxu0
    %v1273 = vadd.f32 0.0, %v1272
    %v1274 = vpop.f32.mrf.mxu0
    %v1275 = vadd.f32 0.0, %v1274
    %v1276 = vpop.f32.mrf.mxu0
    %v1277 = vpop.f32.mrf.mxu0
    %1278 = vdwg.mxu0
    %v1283 = vrot.slane %v1232, 6
    %v1284 = vrot.slane %v1234, 6
    %v1285 = vrot.slane %v1273, 6
    %v1286 = vrot.slane %v1275, 6
    %v1291 = vadd.f32 %v197, %v1283
    %v1292 = vadd.f32 %v199, %v1284
    %v1293 = vadd.f32 %v238, %v1285
    %v1294 = vadd.f32 %v240, %v1286
    %v1295 = vxor.u32 %v1291, 2147483648
    %v1296 = vmul.f32 %v1295, 1.442695
    %v1297 = vpow.pop %v1296
    %v1298 = vadd.f32 %v1297, 1.0
    %v1299 = vrcp.pop %v1298
    %v1300 = vmul.f32 1.0, %v1299
    %v1301 = vxor.u32 %v1292, 2147483648
    %v1302 = vmul.f32 %v1301, 1.442695
    %v1303 = vpow.pop %v1302
    %v1304 = vadd.f32 %v1303, 1.0
    %v1305 = vrcp.pop %v1304
    %v1306 = vmul.f32 1.0, %v1305
    %v1307 = vtanh.pop %v1293
    %v1308 = vxor.u32 %v1294, 2147483648
    %v1309 = vmul.f32 %v1308, 1.442695
    %v1310 = vpow.pop %v1309
    %v1311 = vadd.f32 %v1310, 1.0
    %v1312 = vrcp.pop %v1311
    %v1313 = vmul.f32 1.0, %v1312
    %v1315 = vrot.slane %v676, 7
    %v1317 = vmul.f32 %v1306, %v1315
    %v1318 = vmul.f32 %v1300, %v1307
    %v1319 = vadd.f32 %v1317, %v1318
    %v1320 = vtanh.pop %v1319
    %v1321 = vmul.f32 %v1313, %v1320
    %v1322 = vpack.c.bf16 %v1191, %v1191
    %v1324 = vshll.u32 %v1322, 16
    %v1327 = vshrl.u32 %v1324, 16
    %1330 = vmatprep.subr.bf16.mxu0 %v966
    %1331 = vmatpush1.bf16.msra.mxu0 %v965
    %1332 = vmatprep.subr.bf16.mxu0 %v962
    %1333 = vmatpush1.bf16.msra.mxu0 %v961
    %1334 = vmatprep.subr.bf16.mxu0 %v958
    %1335 = vmatpush1.bf16.msra.mxu0 %v957
    %1336 = vmatprep.subr.bf16.mxu0 %v954
    %1337 = vmatpush1.bf16.msra.mxu0 %v953
    %1338 = vmatprep.subr.bf16.mxu0 %v950
    %1339 = vmatpush1.bf16.msra.mxu0 %v949
    %1340 = vmatprep.subr.bf16.mxu0 %v946
    %1341 = vmatpush1.bf16.msra.mxu0 %v945
    %1342 = vmatprep.subr.bf16.mxu0 %v942
    %1343 = vmatpush1.bf16.msra.mxu0 %v941
    %1344 = vmatprep.subr.bf16.mxu0 %v938
    %1345 = vmatpush1.bf16.msra.mxu0 %v937
    %1346 = vmatprep.subr.bf16.mxu0 %v998
    %1347 = vmatpush2.bf16.msra.mxu0 %v997
    %1348 = vmatprep.subr.bf16.mxu0 %v994
    %1349 = vmatpush2.bf16.msra.mxu0 %v993
    %1350 = vmatprep.subr.bf16.mxu0 %v990
    %1351 = vmatpush2.bf16.msra.mxu0 %v989
    %1352 = vmatprep.subr.bf16.mxu0 %v986
    %1353 = vmatpush2.bf16.msra.mxu0 %v985
    %1354 = vmatprep.subr.bf16.mxu0 %v982
    %1355 = vmatpush2.bf16.msra.mxu0 %v981
    %1356 = vmatprep.subr.bf16.mxu0 %v978
    %1357 = vmatpush2.bf16.msra.mxu0 %v977
    %1358 = vmatprep.subr.bf16.mxu0 %v974
    %1359 = vmatpush2.bf16.msra.mxu0 %v973
    %1360 = vmatprep.subr.bf16.mxu0 %v970
    %1361 = vmatpush2.bf16.msra.mxu0 %v969
    %1362 = vmatprep.mubr.bf16.mxu0 %v1327
    %1363 = vmatmul.mubr.bf16.gmra.mxu0 %v1194
    %v1364 = vpop.f32.mrf.mxu0
    %v1365 = vadd.f32 %v1069, %v1364
    %v1366 = vpop.f32.mrf.mxu0
    %v1367 = vadd.f32 %v1073, %v1366
    %v1368 = vpop.f32.mrf.mxu0
    %v1369 = vpop.f32.mrf.mxu0
    %1370 = vdwg.mxu0
    %1371 = vmatprep.subr.bf16.mxu0 %v968
    %1372 = vmatpush1.bf16.msra.mxu0 %v967
    %1373 = vmatprep.subr.bf16.mxu0 %v964
    %1374 = vmatpush1.bf16.msra.mxu0 %v963
    %1375 = vmatprep.subr.bf16.mxu0 %v960
    %1376 = vmatpush1.bf16.msra.mxu0 %v959
    %1377 = vmatprep.subr.bf16.mxu0 %v956
    %1378 = vmatpush1.bf16.msra.mxu0 %v955
    %1379 = vmatprep.subr.bf16.mxu0 %v952
    %1380 = vmatpush1.bf16.msra.mxu0 %v951
    %1381 = vmatprep.subr.bf16.mxu0 %v948
    %1382 = vmatpush1.bf16.msra.mxu0 %v947
    %1383 = vmatprep.subr.bf16.mxu0 %v944
    %1384 = vmatpush1.bf16.msra.mxu0 %v943
    %1385 = vmatprep.subr.bf16.mxu0 %v940
    %1386 = vmatpush1.bf16.msra.mxu0 %v939
    %1387 = vmatprep.subr.bf16.mxu0 %v1000
    %1388 = vmatpush2.bf16.msra.mxu0 %v999
    %1389 = vmatprep.subr.bf16.mxu0 %v996
    %1390 = vmatpush2.bf16.msra.mxu0 %v995
    %1391 = vmatprep.subr.bf16.mxu0 %v992
    %1392 = vmatpush2.bf16.msra.mxu0 %v991
    %1393 = vmatprep.subr.bf16.mxu0 %v988
    %1394 = vmatpush2.bf16.msra.mxu0 %v987
    %1395 = vmatprep.subr.bf16.mxu0 %v984
    %1396 = vmatpush2.bf16.msra.mxu0 %v983
    %1397 = vmatprep.subr.bf16.mxu0 %v980
    %1398 = vmatpush2.bf16.msra.mxu0 %v979
    %1399 = vmatprep.subr.bf16.mxu0 %v976
    %1400 = vmatpush2.bf16.msra.mxu0 %v975
    %1401 = vmatprep.subr.bf16.mxu0 %v972
    %1402 = vmatpush2.bf16.msra.mxu0 %v971
    %1403 = vmatprep.mubr.bf16.mxu0 %v1327
    %1404 = vmatmul.mubr.bf16.gmra.mxu0 %v1194
    %v1405 = vpop.f32.mrf.mxu0
    %v1406 = vadd.f32 %v1077, %v1405
    %v1407 = vpop.f32.mrf.mxu0
    %v1408 = vadd.f32 %v1081, %v1407
    %v1409 = vpop.f32.mrf.mxu0
    %v1410 = vpop.f32.mrf.mxu0
    %1411 = vdwg.mxu0
    %v1412 = vxor.u32 %v1365, 2147483648
    %v1413 = vmul.f32 %v1412, 1.442695
    %v1414 = vpow.pop %v1413
    %v1415 = vadd.f32 %v1414, 1.0
    %v1416 = vrcp.pop %v1415
    %v1417 = vmul.f32 1.0, %v1416
    %v1418 = vxor.u32 %v1367, 2147483648
    %v1419 = vmul.f32 %v1418, 1.442695
    %v1420 = vpow.pop %v1419
    %v1421 = vadd.f32 %v1420, 1.0
    %v1422 = vrcp.pop %v1421
    %v1423 = vmul.f32 1.0, %v1422
    %v1424 = vtanh.pop %v1406
    %v1425 = vxor.u32 %v1408, 2147483648
    %v1426 = vmul.f32 %v1425, 1.442695
    %v1427 = vpow.pop %v1426
    %v1428 = vadd.f32 %v1427, 1.0
    %v1429 = vrcp.pop %v1428
    %v1430 = vmul.f32 1.0, %v1429
    %v1431 = vmul.f32 %v1423, %v1189
    %v1432 = vmul.f32 %v1417, %v1424
    %v1433 = vadd.f32 %v1431, %v1432
    %v1434 = vtanh.pop %v1433
    %v1435 = vmul.f32 %v1430, %v1434
    %v1436 = vpack.c.bf16 %v1321, %v1321
    %v1438 = vrot.slane %v1436, 1
    %1440 = vmatprep.subr.bf16.mxu0 %v408
    %1441 = vmatpush1.bf16.msra.mxu0 %v407
    %1442 = vmatprep.subr.bf16.mxu0 %v404
    %1443 = vmatpush1.bf16.msra.mxu0 %v403
    %1444 = vmatprep.subr.bf16.mxu0 %v400
    %1445 = vmatpush1.bf16.msra.mxu0 %v399
    %1446 = vmatprep.subr.bf16.mxu0 %v396
    %1447 = vmatpush1.bf16.msra.mxu0 %v395
    %1448 = vmatprep.subr.bf16.mxu0 %v392
    %1449 = vmatpush1.bf16.msra.mxu0 %v391
    %1450 = vmatprep.subr.bf16.mxu0 %v388
    %1451 = vmatpush1.bf16.msra.mxu0 %v387
    %1452 = vmatprep.subr.bf16.mxu0 %v384
    %1453 = vmatpush1.bf16.msra.mxu0 %v383
    %1454 = vmatprep.subr.bf16.mxu0 %v380
    %1455 = vmatpush1.bf16.msra.mxu0 %v379
    %1456 = vmatprep.subr.bf16.mxu0 0
    %1457 = vmatpush2.bf16.msra.mxu0 0
    %1458 = vmatprep.subr.bf16.mxu0 0
    %1459 = vmatpush2.bf16.msra.mxu0 0
    %1460 = vmatprep.subr.bf16.mxu0 0
    %1461 = vmatpush2.bf16.msra.mxu0 0
    %1462 = vmatprep.subr.bf16.mxu0 0
    %1463 = vmatpush2.bf16.msra.mxu0 0
    %1464 = vmatprep.subr.bf16.mxu0 0
    %1465 = vmatpush2.bf16.msra.mxu0 0
    %1466 = vmatprep.subr.bf16.mxu0 0
    %1467 = vmatpush2.bf16.msra.mxu0 0
    %1468 = vmatprep.subr.bf16.mxu0 0
    %1469 = vmatpush2.bf16.msra.mxu0 0
    %1470 = vmatprep.subr.bf16.mxu0 0
    %1471 = vmatpush2.bf16.msra.mxu0 0
    %1472 = vmatprep.mubr.bf16.mxu0 0
    %1473 = vmatmul.mubr.bf16.gmra.mxu0 %v1438
    %v1474 = vpop.f32.mrf.mxu0
    %v1475 = vadd.f32 0.0, %v1474
    %v1476 = vpop.f32.mrf.mxu0
    %v1477 = vadd.f32 0.0, %v1476
    %v1478 = vpop.f32.mrf.mxu0
    %v1479 = vpop.f32.mrf.mxu0
    %1480 = vdwg.mxu0
    %1481 = vmatprep.subr.bf16.mxu0 %v410
    %1482 = vmatpush1.bf16.msra.mxu0 %v409
    %1483 = vmatprep.subr.bf16.mxu0 %v406
    %1484 = vmatpush1.bf16.msra.mxu0 %v405
    %1485 = vmatprep.subr.bf16.mxu0 %v402
    %1486 = vmatpush1.bf16.msra.mxu0 %v401
    %1487 = vmatprep.subr.bf16.mxu0 %v398
    %1488 = vmatpush1.bf16.msra.mxu0 %v397
    %1489 = vmatprep.subr.bf16.mxu0 %v394
    %1490 = vmatpush1.bf16.msra.mxu0 %v393
    %1491 = vmatprep.subr.bf16.mxu0 %v390
    %1492 = vmatpush1.bf16.msra.mxu0 %v389
    %1493 = vmatprep.subr.bf16.mxu0 %v386
    %1494 = vmatpush1.bf16.msra.mxu0 %v385
    %1495 = vmatprep.subr.bf16.mxu0 %v382
    %1496 = vmatpush1.bf16.msra.mxu0 %v381
    %1497 = vmatprep.subr.bf16.mxu0 0
    %1498 = vmatpush2.bf16.msra.mxu0 0
    %1499 = vmatprep.subr.bf16.mxu0 0
    %1500 = vmatpush2.bf16.msra.mxu0 0
    %1501 = vmatprep.subr.bf16.mxu0 0
    %1502 = vmatpush2.bf16.msra.mxu0 0
    %1503 = vmatprep.subr.bf16.mxu0 0
    %1504 = vmatpush2.bf16.msra.mxu0 0
    %1505 = vmatprep.subr.bf16.mxu0 0
    %1506 = vmatpush2.bf16.msra.mxu0 0
    %1507 = vmatprep.subr.bf16.mxu0 0
    %1508 = vmatpush2.bf16.msra.mxu0 0
    %1509 = vmatprep.subr.bf16.mxu0 0
    %1510 = vmatpush2.bf16.msra.mxu0 0
    %1511 = vmatprep.subr.bf16.mxu0 0
    %1512 = vmatpush2.bf16.msra.mxu0 0
    %1513 = vmatprep.mubr.bf16.mxu0 0
    %1514 = vmatmul.mubr.bf16.gmra.mxu0 %v1438
    %v1515 = vpop.f32.mrf.mxu0
    %v1516 = vadd.f32 0.0, %v1515
    %v1517 = vpop.f32.mrf.mxu0
    %v1518 = vadd.f32 0.0, %v1517
    %v1519 = vpop.f32.mrf.mxu0
    %v1520 = vpop.f32.mrf.mxu0
    %1521 = vdwg.mxu0
    %v1526 = vrot.slane %v1475, 5
    %v1527 = vrot.slane %v1477, 5
    %v1528 = vrot.slane %v1516, 5
    %v1529 = vrot.slane %v1518, 5
    %v1534 = vadd.f32 %v197, %v1526
    %v1535 = vadd.f32 %v199, %v1527
    %v1536 = vadd.f32 %v238, %v1528
    %v1537 = vadd.f32 %v240, %v1529
    %v1538 = vxor.u32 %v1534, 2147483648
    %v1539 = vmul.f32 %v1538, 1.442695
    %v1540 = vpow.pop %v1539
    %v1541 = vadd.f32 %v1540, 1.0
    %v1542 = vrcp.pop %v1541
    %v1543 = vmul.f32 1.0, %v1542
    %v1544 = vxor.u32 %v1535, 2147483648
    %v1545 = vmul.f32 %v1544, 1.442695
    %v1546 = vpow.pop %v1545
    %v1547 = vadd.f32 %v1546, 1.0
    %v1548 = vrcp.pop %v1547
    %v1549 = vmul.f32 1.0, %v1548
    %v1550 = vtanh.pop %v1536
    %v1551 = vxor.u32 %v1537, 2147483648
    %v1552 = vmul.f32 %v1551, 1.442695
    %v1553 = vpow.pop %v1552
    %v1554 = vadd.f32 %v1553, 1.0
    %v1555 = vrcp.pop %v1554
    %v1556 = vmul.f32 1.0, %v1555
    %v1558 = vrot.slane %v1319, 7
    %v1560 = vmul.f32 %v1549, %v1558
    %v1561 = vmul.f32 %v1543, %v1550
    %v1562 = vadd.f32 %v1560, %v1561
    %v1563 = vtanh.pop %v1562
    %v1564 = vmul.f32 %v1556, %v1563
    %v1565 = vpack.c.bf16 %v1435, %v1435
    %v1567 = vrot.slane %v1565, 7
    %v1568 = vrot.slane %v1567, 1
    %1570 = vmatprep.subr.bf16.mxu0 %v966
    %1571 = vmatpush1.bf16.msra.mxu0 %v965
    %1572 = vmatprep.subr.bf16.mxu0 %v962
    %1573 = vmatpush1.bf16.msra.mxu0 %v961
    %1574 = vmatprep.subr.bf16.mxu0 %v958
    %1575 = vmatpush1.bf16.msra.mxu0 %v957
    %1576 = vmatprep.subr.bf16.mxu0 %v954
    %1577 = vmatpush1.bf16.msra.mxu0 %v953
    %1578 = vmatprep.subr.bf16.mxu0 %v950
    %1579 = vmatpush1.bf16.msra.mxu0 %v949
    %1580 = vmatprep.subr.bf16.mxu0 %v946
    %1581 = vmatpush1.bf16.msra.mxu0 %v945
    %1582 = vmatprep.subr.bf16.mxu0 %v942
    %1583 = vmatpush1.bf16.msra.mxu0 %v941
    %1584 = vmatprep.subr.bf16.mxu0 %v938
    %1585 = vmatpush1.bf16.msra.mxu0 %v937
    %1586 = vmatprep.subr.bf16.mxu0 %v998
    %1587 = vmatpush2.bf16.msra.mxu0 %v997
    %1588 = vmatprep.subr.bf16.mxu0 %v994
    %1589 = vmatpush2.bf16.msra.mxu0 %v993
    %1590 = vmatprep.subr.bf16.mxu0 %v990
    %1591 = vmatpush2.bf16.msra.mxu0 %v989
    %1592 = vmatprep.subr.bf16.mxu0 %v986
    %1593 = vmatpush2.bf16.msra.mxu0 %v985
    %1594 = vmatprep.subr.bf16.mxu0 %v982
    %1595 = vmatpush2.bf16.msra.mxu0 %v981
    %1596 = vmatprep.subr.bf16.mxu0 %v978
    %1597 = vmatpush2.bf16.msra.mxu0 %v977
    %1598 = vmatprep.subr.bf16.mxu0 %v974
    %1599 = vmatpush2.bf16.msra.mxu0 %v973
    %1600 = vmatprep.subr.bf16.mxu0 %v970
    %1601 = vmatpush2.bf16.msra.mxu0 %v969
    %1602 = vmatprep.mubr.bf16.mxu0 %v1568
    %1603 = vmatmul.mubr.bf16.gmra.mxu0 %v1438
    %v1604 = vpop.f32.mrf.mxu0
    %v1605 = vadd.f32 %v1069, %v1604
    %v1606 = vpop.f32.mrf.mxu0
    %v1607 = vadd.f32 %v1073, %v1606
    %v1608 = vpop.f32.mrf.mxu0
    %v1609 = vpop.f32.mrf.mxu0
    %1610 = vdwg.mxu0
    %1611 = vmatprep.subr.bf16.mxu0 %v968
    %1612 = vmatpush1.bf16.msra.mxu0 %v967
    %1613 = vmatprep.subr.bf16.mxu0 %v964
    %1614 = vmatpush1.bf16.msra.mxu0 %v963
    %1615 = vmatprep.subr.bf16.mxu0 %v960
    %1616 = vmatpush1.bf16.msra.mxu0 %v959
    %1617 = vmatprep.subr.bf16.mxu0 %v956
    %1618 = vmatpush1.bf16.msra.mxu0 %v955
    %1619 = vmatprep.subr.bf16.mxu0 %v952
    %1620 = vmatpush1.bf16.msra.mxu0 %v951
    %1621 = vmatprep.subr.bf16.mxu0 %v948
    %1622 = vmatpush1.bf16.msra.mxu0 %v947
    %1623 = vmatprep.subr.bf16.mxu0 %v944
    %1624 = vmatpush1.bf16.msra.mxu0 %v943
    %1625 = vmatprep.subr.bf16.mxu0 %v940
    %1626 = vmatpush1.bf16.msra.mxu0 %v939
    %1627 = vmatprep.subr.bf16.mxu0 %v1000
    %1628 = vmatpush2.bf16.msra.mxu0 %v999
    %1629 = vmatprep.subr.bf16.mxu0 %v996
    %1630 = vmatpush2.bf16.msra.mxu0 %v995
    %1631 = vmatprep.subr.bf16.mxu0 %v992
    %1632 = vmatpush2.bf16.msra.mxu0 %v991
    %1633 = vmatprep.subr.bf16.mxu0 %v988
    %1634 = vmatpush2.bf16.msra.mxu0 %v987
    %1635 = vmatprep.subr.bf16.mxu0 %v984
    %1636 = vmatpush2.bf16.msra.mxu0 %v983
    %1637 = vmatprep.subr.bf16.mxu0 %v980
    %1638 = vmatpush2.bf16.msra.mxu0 %v979
    %1639 = vmatprep.subr.bf16.mxu0 %v976
    %1640 = vmatpush2.bf16.msra.mxu0 %v975
    %1641 = vmatprep.subr.bf16.mxu0 %v972
    %1642 = vmatpush2.bf16.msra.mxu0 %v971
    %1643 = vmatprep.mubr.bf16.mxu0 %v1568
    %1644 = vmatmul.mubr.bf16.gmra.mxu0 %v1438
    %v1645 = vpop.f32.mrf.mxu0
    %v1646 = vadd.f32 %v1077, %v1645
    %v1647 = vpop.f32.mrf.mxu0
    %v1648 = vadd.f32 %v1081, %v1647
    %v1649 = vpop.f32.mrf.mxu0
    %v1650 = vpop.f32.mrf.mxu0
    %1651 = vdwg.mxu0
    %v1652 = vxor.u32 %v1605, 2147483648
    %v1653 = vmul.f32 %v1652, 1.442695
    %v1654 = vpow.pop %v1653
    %v1655 = vadd.f32 %v1654, 1.0
    %v1656 = vrcp.pop %v1655
    %v1657 = vmul.f32 1.0, %v1656
    %v1658 = vxor.u32 %v1607, 2147483648
    %v1659 = vmul.f32 %v1658, 1.442695
    %v1660 = vpow.pop %v1659
    %v1661 = vadd.f32 %v1660, 1.0
    %v1662 = vrcp.pop %v1661
    %v1663 = vmul.f32 1.0, %v1662
    %v1664 = vtanh.pop %v1646
    %v1665 = vxor.u32 %v1648, 2147483648
    %v1666 = vmul.f32 %v1665, 1.442695
    %v1667 = vpow.pop %v1666
    %v1668 = vadd.f32 %v1667, 1.0
    %v1669 = vrcp.pop %v1668
    %v1670 = vmul.f32 1.0, %v1669
    %v1671 = vmul.f32 %v1663, %v1433
    %v1672 = vmul.f32 %v1657, %v1664
    %v1673 = vadd.f32 %v1671, %v1672
    %v1674 = vtanh.pop %v1673
    %v1675 = vmul.f32 %v1670, %v1674
    %v1676 = vpack.c.bf16 %v1564, %v1564
    %v1678 = vshrl.u32 %v1676, 16
    %v1680 = vrot.slane %v1678, 1
    %1682 = vmatprep.subr.bf16.mxu0 %v408
    %1683 = vmatpush1.bf16.msra.mxu0 %v407
    %1684 = vmatprep.subr.bf16.mxu0 %v404
    %1685 = vmatpush1.bf16.msra.mxu0 %v403
    %1686 = vmatprep.subr.bf16.mxu0 %v400
    %1687 = vmatpush1.bf16.msra.mxu0 %v399
    %1688 = vmatprep.subr.bf16.mxu0 %v396
    %1689 = vmatpush1.bf16.msra.mxu0 %v395
    %1690 = vmatprep.subr.bf16.mxu0 %v392
    %1691 = vmatpush1.bf16.msra.mxu0 %v391
    %1692 = vmatprep.subr.bf16.mxu0 %v388
    %1693 = vmatpush1.bf16.msra.mxu0 %v387
    %1694 = vmatprep.subr.bf16.mxu0 %v384
    %1695 = vmatpush1.bf16.msra.mxu0 %v383
    %1696 = vmatprep.subr.bf16.mxu0 %v380
    %1697 = vmatpush1.bf16.msra.mxu0 %v379
    %1698 = vmatprep.subr.bf16.mxu0 0
    %1699 = vmatpush2.bf16.msra.mxu0 0
    %1700 = vmatprep.subr.bf16.mxu0 0
    %1701 = vmatpush2.bf16.msra.mxu0 0
    %1702 = vmatprep.subr.bf16.mxu0 0
    %1703 = vmatpush2.bf16.msra.mxu0 0
    %1704 = vmatprep.subr.bf16.mxu0 0
    %1705 = vmatpush2.bf16.msra.mxu0 0
    %1706 = vmatprep.subr.bf16.mxu0 0
    %1707 = vmatpush2.bf16.msra.mxu0 0
    %1708 = vmatprep.subr.bf16.mxu0 0
    %1709 = vmatpush2.bf16.msra.mxu0 0
    %1710 = vmatprep.subr.bf16.mxu0 0
    %1711 = vmatpush2.bf16.msra.mxu0 0
    %1712 = vmatprep.subr.bf16.mxu0 0
    %1713 = vmatpush2.bf16.msra.mxu0 0
    %1714 = vmatprep.mubr.bf16.mxu0 0
    %1715 = vmatmul.mubr.bf16.gmra.mxu0 %v1680
    %v1716 = vpop.f32.mrf.mxu0
    %v1717 = vadd.f32 0.0, %v1716
    %v1718 = vpop.f32.mrf.mxu0
    %v1719 = vadd.f32 0.0, %v1718
    %v1720 = vpop.f32.mrf.mxu0
    %v1721 = vpop.f32.mrf.mxu0
    %1722 = vdwg.mxu0
    %1723 = vmatprep.subr.bf16.mxu0 %v410
    %1724 = vmatpush1.bf16.msra.mxu0 %v409
    %1725 = vmatprep.subr.bf16.mxu0 %v406
    %1726 = vmatpush1.bf16.msra.mxu0 %v405
    %1727 = vmatprep.subr.bf16.mxu0 %v402
    %1728 = vmatpush1.bf16.msra.mxu0 %v401
    %1729 = vmatprep.subr.bf16.mxu0 %v398
    %1730 = vmatpush1.bf16.msra.mxu0 %v397
    %1731 = vmatprep.subr.bf16.mxu0 %v394
    %1732 = vmatpush1.bf16.msra.mxu0 %v393
    %1733 = vmatprep.subr.bf16.mxu0 %v390
    %1734 = vmatpush1.bf16.msra.mxu0 %v389
    %1735 = vmatprep.subr.bf16.mxu0 %v386
    %1736 = vmatpush1.bf16.msra.mxu0 %v385
    %1737 = vmatprep.subr.bf16.mxu0 %v382
    %1738 = vmatpush1.bf16.msra.mxu0 %v381
    %1739 = vmatprep.subr.bf16.mxu0 0
    %1740 = vmatpush2.bf16.msra.mxu0 0
    %1741 = vmatprep.subr.bf16.mxu0 0
    %1742 = vmatpush2.bf16.msra.mxu0 0
    %1743 = vmatprep.subr.bf16.mxu0 0
    %1744 = vmatpush2.bf16.msra.mxu0 0
    %1745 = vmatprep.subr.bf16.mxu0 0
    %1746 = vmatpush2.bf16.msra.mxu0 0
    %1747 = vmatprep.subr.bf16.mxu0 0
    %1748 = vmatpush2.bf16.msra.mxu0 0
    %1749 = vmatprep.subr.bf16.mxu0 0
    %1750 = vmatpush2.bf16.msra.mxu0 0
    %1751 = vmatprep.subr.bf16.mxu0 0
    %1752 = vmatpush2.bf16.msra.mxu0 0
    %1753 = vmatprep.subr.bf16.mxu0 0
    %1754 = vmatpush2.bf16.msra.mxu0 0
    %1755 = vmatprep.mubr.bf16.mxu0 0
    %1756 = vmatmul.mubr.bf16.gmra.mxu0 %v1680
    %v1757 = vpop.f32.mrf.mxu0
    %v1758 = vadd.f32 0.0, %v1757
    %v1759 = vpop.f32.mrf.mxu0
    %v1760 = vadd.f32 0.0, %v1759
    %v1761 = vpop.f32.mrf.mxu0
    %v1762 = vpop.f32.mrf.mxu0
    %1763 = vdwg.mxu0
    %v1768 = vrot.slane %v1717, 4
    %v1769 = vrot.slane %v1719, 4
    %v1770 = vrot.slane %v1758, 4
    %v1771 = vrot.slane %v1760, 4
    %v1776 = vadd.f32 %v197, %v1768
    %v1777 = vadd.f32 %v199, %v1769
    %v1778 = vadd.f32 %v238, %v1770
    %v1779 = vadd.f32 %v240, %v1771
    %v1780 = vxor.u32 %v1776, 2147483648
    %v1781 = vmul.f32 %v1780, 1.442695
    %v1782 = vpow.pop %v1781
    %v1783 = vadd.f32 %v1782, 1.0
    %v1784 = vrcp.pop %v1783
    %v1785 = vmul.f32 1.0, %v1784
    %v1786 = vxor.u32 %v1777, 2147483648
    %v1787 = vmul.f32 %v1786, 1.442695
    %v1788 = vpow.pop %v1787
    %v1789 = vadd.f32 %v1788, 1.0
    %v1790 = vrcp.pop %v1789
    %v1791 = vmul.f32 1.0, %v1790
    %v1792 = vtanh.pop %v1778
    %v1793 = vxor.u32 %v1779, 2147483648
    %v1794 = vmul.f32 %v1793, 1.442695
    %v1795 = vpow.pop %v1794
    %v1796 = vadd.f32 %v1795, 1.0
    %v1797 = vrcp.pop %v1796
    %v1798 = vmul.f32 1.0, %v1797
    %v1800 = vrot.slane %v1562, 7
    %v1802 = vmul.f32 %v1791, %v1800
    %v1803 = vmul.f32 %v1785, %v1792
    %v1804 = vadd.f32 %v1802, %v1803
    %v1805 = vtanh.pop %v1804
    %v1806 = vmul.f32 %v1798, %v1805
    %v1807 = vpack.c.bf16 %v1675, %v1675
    %v1809 = vshll.u32 %v1807, 16
    %v1811 = vrot.slane %v1809, 7
    %v1813 = vshrl.u32 %v1811, 16
    %v1815 = vrot.slane %v1813, 1
    %1817 = vmatprep.subr.bf16.mxu0 %v966
    %1818 = vmatpush1.bf16.msra.mxu0 %v965
    %1819 = vmatprep.subr.bf16.mxu0 %v962
    %1820 = vmatpush1.bf16.msra.mxu0 %v961
    %1821 = vmatprep.subr.bf16.mxu0 %v958
    %1822 = vmatpush1.bf16.msra.mxu0 %v957
    %1823 = vmatprep.subr.bf16.mxu0 %v954
    %1824 = vmatpush1.bf16.msra.mxu0 %v953
    %1825 = vmatprep.subr.bf16.mxu0 %v950
    %1826 = vmatpush1.bf16.msra.mxu0 %v949
    %1827 = vmatprep.subr.bf16.mxu0 %v946
    %1828 = vmatpush1.bf16.msra.mxu0 %v945
    %1829 = vmatprep.subr.bf16.mxu0 %v942
    %1830 = vmatpush1.bf16.msra.mxu0 %v941
    %1831 = vmatprep.subr.bf16.mxu0 %v938
    %1832 = vmatpush1.bf16.msra.mxu0 %v937
    %1833 = vmatprep.subr.bf16.mxu0 %v998
    %1834 = vmatpush2.bf16.msra.mxu0 %v997
    %1835 = vmatprep.subr.bf16.mxu0 %v994
    %1836 = vmatpush2.bf16.msra.mxu0 %v993
    %1837 = vmatprep.subr.bf16.mxu0 %v990
    %1838 = vmatpush2.bf16.msra.mxu0 %v989
    %1839 = vmatprep.subr.bf16.mxu0 %v986
    %1840 = vmatpush2.bf16.msra.mxu0 %v985
    %1841 = vmatprep.subr.bf16.mxu0 %v982
    %1842 = vmatpush2.bf16.msra.mxu0 %v981
    %1843 = vmatprep.subr.bf16.mxu0 %v978
    %1844 = vmatpush2.bf16.msra.mxu0 %v977
    %1845 = vmatprep.subr.bf16.mxu0 %v974
    %1846 = vmatpush2.bf16.msra.mxu0 %v973
    %1847 = vmatprep.subr.bf16.mxu0 %v970
    %1848 = vmatpush2.bf16.msra.mxu0 %v969
    %1849 = vmatprep.mubr.bf16.mxu0 %v1815
    %1850 = vmatmul.mubr.bf16.gmra.mxu0 %v1680
    %v1851 = vpop.f32.mrf.mxu0
    %v1852 = vadd.f32 %v1069, %v1851
    %v1853 = vpop.f32.mrf.mxu0
    %v1854 = vadd.f32 %v1073, %v1853
    %v1855 = vpop.f32.mrf.mxu0
    %v1856 = vpop.f32.mrf.mxu0
    %1857 = vdwg.mxu0
    %1858 = vmatprep.subr.bf16.mxu0 %v968
    %1859 = vmatpush1.bf16.msra.mxu0 %v967
    %1860 = vmatprep.subr.bf16.mxu0 %v964
    %1861 = vmatpush1.bf16.msra.mxu0 %v963
    %1862 = vmatprep.subr.bf16.mxu0 %v960
    %1863 = vmatpush1.bf16.msra.mxu0 %v959
    %1864 = vmatprep.subr.bf16.mxu0 %v956
    %1865 = vmatpush1.bf16.msra.mxu0 %v955
    %1866 = vmatprep.subr.bf16.mxu0 %v952
    %1867 = vmatpush1.bf16.msra.mxu0 %v951
    %1868 = vmatprep.subr.bf16.mxu0 %v948
    %1869 = vmatpush1.bf16.msra.mxu0 %v947
    %1870 = vmatprep.subr.bf16.mxu0 %v944
    %1871 = vmatpush1.bf16.msra.mxu0 %v943
    %1872 = vmatprep.subr.bf16.mxu0 %v940
    %1873 = vmatpush1.bf16.msra.mxu0 %v939
    %1874 = vmatprep.subr.bf16.mxu0 %v1000
    %1875 = vmatpush2.bf16.msra.mxu0 %v999
    %1876 = vmatprep.subr.bf16.mxu0 %v996
    %1877 = vmatpush2.bf16.msra.mxu0 %v995
    %1878 = vmatprep.subr.bf16.mxu0 %v992
    %1879 = vmatpush2.bf16.msra.mxu0 %v991
    %1880 = vmatprep.subr.bf16.mxu0 %v988
    %1881 = vmatpush2.bf16.msra.mxu0 %v987
    %1882 = vmatprep.subr.bf16.mxu0 %v984
    %1883 = vmatpush2.bf16.msra.mxu0 %v983
    %1884 = vmatprep.subr.bf16.mxu0 %v980
    %1885 = vmatpush2.bf16.msra.mxu0 %v979
    %1886 = vmatprep.subr.bf16.mxu0 %v976
    %1887 = vmatpush2.bf16.msra.mxu0 %v975
    %1888 = vmatprep.subr.bf16.mxu0 %v972
    %1889 = vmatpush2.bf16.msra.mxu0 %v971
    %1890 = vmatprep.mubr.bf16.mxu0 %v1815
    %1891 = vmatmul.mubr.bf16.gmra.mxu0 %v1680
    %v1892 = vpop.f32.mrf.mxu0
    %v1893 = vadd.f32 %v1077, %v1892
    %v1894 = vpop.f32.mrf.mxu0
    %v1895 = vadd.f32 %v1081, %v1894
    %v1896 = vpop.f32.mrf.mxu0
    %v1897 = vpop.f32.mrf.mxu0
    %1898 = vdwg.mxu0
    %v1899 = vxor.u32 %v1852, 2147483648
    %v1900 = vmul.f32 %v1899, 1.442695
    %v1901 = vpow.pop %v1900
    %v1902 = vadd.f32 %v1901, 1.0
    %v1903 = vrcp.pop %v1902
    %v1904 = vmul.f32 1.0, %v1903
    %v1905 = vxor.u32 %v1854, 2147483648
    %v1906 = vmul.f32 %v1905, 1.442695
    %v1907 = vpow.pop %v1906
    %v1908 = vadd.f32 %v1907, 1.0
    %v1909 = vrcp.pop %v1908
    %v1910 = vmul.f32 1.0, %v1909
    %v1911 = vtanh.pop %v1893
    %v1912 = vxor.u32 %v1895, 2147483648
    %v1913 = vmul.f32 %v1912, 1.442695
    %v1914 = vpow.pop %v1913
    %v1915 = vadd.f32 %v1914, 1.0
    %v1916 = vrcp.pop %v1915
    %v1917 = vmul.f32 1.0, %v1916
    %v1918 = vmul.f32 %v1910, %v1673
    %v1919 = vmul.f32 %v1904, %v1911
    %v1920 = vadd.f32 %v1918, %v1919
    %v1921 = vtanh.pop %v1920
    %v1922 = vmul.f32 %v1917, %v1921
    %v1923 = vpack.c.bf16 %v1806, %v1806
    %v1925 = vrot.slane %v1923, 2
    %1927 = vmatprep.subr.bf16.mxu0 %v408
    %1928 = vmatpush1.bf16.msra.mxu0 %v407
    %1929 = vmatprep.subr.bf16.mxu0 %v404
    %1930 = vmatpush1.bf16.msra.mxu0 %v403
    %1931 = vmatprep.subr.bf16.mxu0 %v400
    %1932 = vmatpush1.bf16.msra.mxu0 %v399
    %1933 = vmatprep.subr.bf16.mxu0 %v396
    %1934 = vmatpush1.bf16.msra.mxu0 %v395
    %1935 = vmatprep.subr.bf16.mxu0 %v392
    %1936 = vmatpush1.bf16.msra.mxu0 %v391
    %1937 = vmatprep.subr.bf16.mxu0 %v388
    %1938 = vmatpush1.bf16.msra.mxu0 %v387
    %1939 = vmatprep.subr.bf16.mxu0 %v384
    %1940 = vmatpush1.bf16.msra.mxu0 %v383
    %1941 = vmatprep.subr.bf16.mxu0 %v380
    %1942 = vmatpush1.bf16.msra.mxu0 %v379
    %1943 = vmatprep.subr.bf16.mxu0 0
    %1944 = vmatpush2.bf16.msra.mxu0 0
    %1945 = vmatprep.subr.bf16.mxu0 0
    %1946 = vmatpush2.bf16.msra.mxu0 0
    %1947 = vmatprep.subr.bf16.mxu0 0
    %1948 = vmatpush2.bf16.msra.mxu0 0
    %1949 = vmatprep.subr.bf16.mxu0 0
    %1950 = vmatpush2.bf16.msra.mxu0 0
    %1951 = vmatprep.subr.bf16.mxu0 0
    %1952 = vmatpush2.bf16.msra.mxu0 0
    %1953 = vmatprep.subr.bf16.mxu0 0
    %1954 = vmatpush2.bf16.msra.mxu0 0
    %1955 = vmatprep.subr.bf16.mxu0 0
    %1956 = vmatpush2.bf16.msra.mxu0 0
    %1957 = vmatprep.subr.bf16.mxu0 0
    %1958 = vmatpush2.bf16.msra.mxu0 0
    %1959 = vmatprep.mubr.bf16.mxu0 0
    %1960 = vmatmul.mubr.bf16.gmra.mxu0 %v1925
    %v1961 = vpop.f32.mrf.mxu0
    %v1962 = vadd.f32 0.0, %v1961
    %v1963 = vpop.f32.mrf.mxu0
    %v1964 = vadd.f32 0.0, %v1963
    %v1965 = vpop.f32.mrf.mxu0
    %v1966 = vpop.f32.mrf.mxu0
    %1967 = vdwg.mxu0
    %1968 = vmatprep.subr.bf16.mxu0 %v410
    %1969 = vmatpush1.bf16.msra.mxu0 %v409
    %1970 = vmatprep.subr.bf16.mxu0 %v406
    %1971 = vmatpush1.bf16.msra.mxu0 %v405
    %1972 = vmatprep.subr.bf16.mxu0 %v402
    %1973 = vmatpush1.bf16.msra.mxu0 %v401
    %1974 = vmatprep.subr.bf16.mxu0 %v398
    %1975 = vmatpush1.bf16.msra.mxu0 %v397
    %1976 = vmatprep.subr.bf16.mxu0 %v394
    %1977 = vmatpush1.bf16.msra.mxu0 %v393
    %1978 = vmatprep.subr.bf16.mxu0 %v390
    %1979 = vmatpush1.bf16.msra.mxu0 %v389
    %1980 = vmatprep.subr.bf16.mxu0 %v386
    %1981 = vmatpush1.bf16.msra.mxu0 %v385
    %1982 = vmatprep.subr.bf16.mxu0 %v382
    %1983 = vmatpush1.bf16.msra.mxu0 %v381
    %1984 = vmatprep.subr.bf16.mxu0 0
    %1985 = vmatpush2.bf16.msra.mxu0 0
    %1986 = vmatprep.subr.bf16.mxu0 0
    %1987 = vmatpush2.bf16.msra.mxu0 0
    %1988 = vmatprep.subr.bf16.mxu0 0
    %1989 = vmatpush2.bf16.msra.mxu0 0
    %1990 = vmatprep.subr.bf16.mxu0 0
    %1991 = vmatpush2.bf16.msra.mxu0 0
    %1992 = vmatprep.subr.bf16.mxu0 0
    %1993 = vmatpush2.bf16.msra.mxu0 0
    %1994 = vmatprep.subr.bf16.mxu0 0
    %1995 = vmatpush2.bf16.msra.mxu0 0
    %1996 = vmatprep.subr.bf16.mxu0 0
    %1997 = vmatpush2.bf16.msra.mxu0 0
    %1998 = vmatprep.subr.bf16.mxu0 0
    %1999 = vmatpush2.bf16.msra.mxu0 0
    %2000 = vmatprep.mubr.bf16.mxu0 0
    %2001 = vmatmul.mubr.bf16.gmra.mxu0 %v1925
    %v2002 = vpop.f32.mrf.mxu0
    %v2003 = vadd.f32 0.0, %v2002
    %v2004 = vpop.f32.mrf.mxu0
    %v2005 = vadd.f32 0.0, %v2004
    %v2006 = vpop.f32.mrf.mxu0
    %v2007 = vpop.f32.mrf.mxu0
    %2008 = vdwg.mxu0
    %v2013 = vrot.slane %v1962, 3
    %v2014 = vrot.slane %v1964, 3
    %v2015 = vrot.slane %v2003, 3
    %v2016 = vrot.slane %v2005, 3
    %v2021 = vadd.f32 %v197, %v2013
    %v2022 = vadd.f32 %v199, %v2014
    %v2023 = vadd.f32 %v238, %v2015
    %v2024 = vadd.f32 %v240, %v2016
    %v2025 = vxor.u32 %v2021, 2147483648
    %v2026 = vmul.f32 %v2025, 1.442695
    %v2027 = vpow.pop %v2026
    %v2028 = vadd.f32 %v2027, 1.0
    %v2029 = vrcp.pop %v2028
    %v2030 = vmul.f32 1.0, %v2029
    %v2031 = vxor.u32 %v2022, 2147483648
    %v2032 = vmul.f32 %v2031, 1.442695
    %v2033 = vpow.pop %v2032
    %v2034 = vadd.f32 %v2033, 1.0
    %v2035 = vrcp.pop %v2034
    %v2036 = vmul.f32 1.0, %v2035
    %v2037 = vtanh.pop %v2023
    %v2038 = vxor.u32 %v2024, 2147483648
    %v2039 = vmul.f32 %v2038, 1.442695
    %v2040 = vpow.pop %v2039
    %v2041 = vadd.f32 %v2040, 1.0
    %v2042 = vrcp.pop %v2041
    %v2043 = vmul.f32 1.0, %v2042
    %v2045 = vrot.slane %v1804, 7
    %v2047 = vmul.f32 %v2036, %v2045
    %v2048 = vmul.f32 %v2030, %v2037
    %v2049 = vadd.f32 %v2047, %v2048
    %v2050 = vtanh.pop %v2049
    %v2051 = vmul.f32 %v2043, %v2050
    %v2052 = vpack.c.bf16 %v1922, %v1922
    %v2054 = vrot.slane %v2052, 6
    %v2055 = vrot.slane %v2054, 2
    %2057 = vmatprep.subr.bf16.mxu0 %v966
    %2058 = vmatpush1.bf16.msra.mxu0 %v965
    %2059 = vmatprep.subr.bf16.mxu0 %v962
    %2060 = vmatpush1.bf16.msra.mxu0 %v961
    %2061 = vmatprep.subr.bf16.mxu0 %v958
    %2062 = vmatpush1.bf16.msra.mxu0 %v957
    %2063 = vmatprep.subr.bf16.mxu0 %v954
    %2064 = vmatpush1.bf16.msra.mxu0 %v953
    %2065 = vmatprep.subr.bf16.mxu0 %v950
    %2066 = vmatpush1.bf16.msra.mxu0 %v949
    %2067 = vmatprep.subr.bf16.mxu0 %v946
    %2068 = vmatpush1.bf16.msra.mxu0 %v945
    %2069 = vmatprep.subr.bf16.mxu0 %v942
    %2070 = vmatpush1.bf16.msra.mxu0 %v941
    %2071 = vmatprep.subr.bf16.mxu0 %v938
    %2072 = vmatpush1.bf16.msra.mxu0 %v937
    %2073 = vmatprep.subr.bf16.mxu0 %v998
    %2074 = vmatpush2.bf16.msra.mxu0 %v997
    %2075 = vmatprep.subr.bf16.mxu0 %v994
    %2076 = vmatpush2.bf16.msra.mxu0 %v993
    %2077 = vmatprep.subr.bf16.mxu0 %v990
    %2078 = vmatpush2.bf16.msra.mxu0 %v989
    %2079 = vmatprep.subr.bf16.mxu0 %v986
    %2080 = vmatpush2.bf16.msra.mxu0 %v985
    %2081 = vmatprep.subr.bf16.mxu0 %v982
    %2082 = vmatpush2.bf16.msra.mxu0 %v981
    %2083 = vmatprep.subr.bf16.mxu0 %v978
    %2084 = vmatpush2.bf16.msra.mxu0 %v977
    %2085 = vmatprep.subr.bf16.mxu0 %v974
    %2086 = vmatpush2.bf16.msra.mxu0 %v973
    %2087 = vmatprep.subr.bf16.mxu0 %v970
    %2088 = vmatpush2.bf16.msra.mxu0 %v969
    %2089 = vmatprep.mubr.bf16.mxu0 %v2055
    %2090 = vmatmul.mubr.bf16.gmra.mxu0 %v1925
    %v2091 = vpop.f32.mrf.mxu0
    %v2092 = vadd.f32 %v1069, %v2091
    %v2093 = vpop.f32.mrf.mxu0
    %v2094 = vadd.f32 %v1073, %v2093
    %v2095 = vpop.f32.mrf.mxu0
    %v2096 = vpop.f32.mrf.mxu0
    %2097 = vdwg.mxu0
    %2098 = vmatprep.subr.bf16.mxu0 %v968
    %2099 = vmatpush1.bf16.msra.mxu0 %v967
    %2100 = vmatprep.subr.bf16.mxu0 %v964
    %2101 = vmatpush1.bf16.msra.mxu0 %v963
    %2102 = vmatprep.subr.bf16.mxu0 %v960
    %2103 = vmatpush1.bf16.msra.mxu0 %v959
    %2104 = vmatprep.subr.bf16.mxu0 %v956
    %2105 = vmatpush1.bf16.msra.mxu0 %v955
    %2106 = vmatprep.subr.bf16.mxu0 %v952
    %2107 = vmatpush1.bf16.msra.mxu0 %v951
    %2108 = vmatprep.subr.bf16.mxu0 %v948
    %2109 = vmatpush1.bf16.msra.mxu0 %v947
    %2110 = vmatprep.subr.bf16.mxu0 %v944
    %2111 = vmatpush1.bf16.msra.mxu0 %v943
    %2112 = vmatprep.subr.bf16.mxu0 %v940
    %2113 = vmatpush1.bf16.msra.mxu0 %v939
    %2114 = vmatprep.subr.bf16.mxu0 %v1000
    %2115 = vmatpush2.bf16.msra.mxu0 %v999
    %2116 = vmatprep.subr.bf16.mxu0 %v996
    %2117 = vmatpush2.bf16.msra.mxu0 %v995
    %2118 = vmatprep.subr.bf16.mxu0 %v992
    %2119 = vmatpush2.bf16.msra.mxu0 %v991
    %2120 = vmatprep.subr.bf16.mxu0 %v988
    %2121 = vmatpush2.bf16.msra.mxu0 %v987
    %2122 = vmatprep.subr.bf16.mxu0 %v984
    %2123 = vmatpush2.bf16.msra.mxu0 %v983
    %2124 = vmatprep.subr.bf16.mxu0 %v980
    %2125 = vmatpush2.bf16.msra.mxu0 %v979
    %2126 = vmatprep.subr.bf16.mxu0 %v976
    %2127 = vmatpush2.bf16.msra.mxu0 %v975
    %2128 = vmatprep.subr.bf16.mxu0 %v972
    %2129 = vmatpush2.bf16.msra.mxu0 %v971
    %2130 = vmatprep.mubr.bf16.mxu0 %v2055
    %2131 = vmatmul.mubr.bf16.gmra.mxu0 %v1925
    %v2132 = vpop.f32.mrf.mxu0
    %v2133 = vadd.f32 %v1077, %v2132
    %v2134 = vpop.f32.mrf.mxu0
    %v2135 = vadd.f32 %v1081, %v2134
    %v2136 = vpop.f32.mrf.mxu0
    %v2137 = vpop.f32.mrf.mxu0
    %2138 = vdwg.mxu0
    %v2139 = vxor.u32 %v2092, 2147483648
    %v2140 = vmul.f32 %v2139, 1.442695
    %v2141 = vpow.pop %v2140
    %v2142 = vadd.f32 %v2141, 1.0
    %v2143 = vrcp.pop %v2142
    %v2144 = vmul.f32 1.0, %v2143
    %v2145 = vxor.u32 %v2094, 2147483648
    %v2146 = vmul.f32 %v2145, 1.442695
    %v2147 = vpow.pop %v2146
    %v2148 = vadd.f32 %v2147, 1.0
    %v2149 = vrcp.pop %v2148
    %v2150 = vmul.f32 1.0, %v2149
    %v2151 = vtanh.pop %v2133
    %v2152 = vxor.u32 %v2135, 2147483648
    %v2153 = vmul.f32 %v2152, 1.442695
    %v2154 = vpow.pop %v2153
    %v2155 = vadd.f32 %v2154, 1.0
    %v2156 = vrcp.pop %v2155
    %v2157 = vmul.f32 1.0, %v2156
    %v2158 = vmul.f32 %v2150, %v1920
    %v2159 = vmul.f32 %v2144, %v2151
    %v2160 = vadd.f32 %v2158, %v2159
    %v2161 = vtanh.pop %v2160
    %v2162 = vmul.f32 %v2157, %v2161
    %v2163 = vpack.c.bf16 %v2051, %v2051
    %v2165 = vshrl.u32 %v2163, 16
    %v2167 = vrot.slane %v2165, 2
    %2169 = vmatprep.subr.bf16.mxu0 %v408
    %2170 = vmatpush1.bf16.msra.mxu0 %v407
    %2171 = vmatprep.subr.bf16.mxu0 %v404
    %2172 = vmatpush1.bf16.msra.mxu0 %v403
    %2173 = vmatprep.subr.bf16.mxu0 %v400
    %2174 = vmatpush1.bf16.msra.mxu0 %v399
    %2175 = vmatprep.subr.bf16.mxu0 %v396
    %2176 = vmatpush1.bf16.msra.mxu0 %v395
    %2177 = vmatprep.subr.bf16.mxu0 %v392
    %2178 = vmatpush1.bf16.msra.mxu0 %v391
    %2179 = vmatprep.subr.bf16.mxu0 %v388
    %2180 = vmatpush1.bf16.msra.mxu0 %v387
    %2181 = vmatprep.subr.bf16.mxu0 %v384
    %2182 = vmatpush1.bf16.msra.mxu0 %v383
    %2183 = vmatprep.subr.bf16.mxu0 %v380
    %2184 = vmatpush1.bf16.msra.mxu0 %v379
    %2185 = vmatprep.subr.bf16.mxu0 0
    %2186 = vmatpush2.bf16.msra.mxu0 0
    %2187 = vmatprep.subr.bf16.mxu0 0
    %2188 = vmatpush2.bf16.msra.mxu0 0
    %2189 = vmatprep.subr.bf16.mxu0 0
    %2190 = vmatpush2.bf16.msra.mxu0 0
    %2191 = vmatprep.subr.bf16.mxu0 0
    %2192 = vmatpush2.bf16.msra.mxu0 0
    %2193 = vmatprep.subr.bf16.mxu0 0
    %2194 = vmatpush2.bf16.msra.mxu0 0
    %2195 = vmatprep.subr.bf16.mxu0 0
    %2196 = vmatpush2.bf16.msra.mxu0 0
    %2197 = vmatprep.subr.bf16.mxu0 0
    %2198 = vmatpush2.bf16.msra.mxu0 0
    %2199 = vmatprep.subr.bf16.mxu0 0
    %2200 = vmatpush2.bf16.msra.mxu0 0
    %2201 = vmatprep.mubr.bf16.mxu0 0
    %2202 = vmatmul.mubr.bf16.gmra.mxu0 %v2167
    %v2203 = vpop.f32.mrf.mxu0
    %v2204 = vadd.f32 0.0, %v2203
    %v2205 = vpop.f32.mrf.mxu0
    %v2206 = vadd.f32 0.0, %v2205
    %v2207 = vpop.f32.mrf.mxu0
    %v2208 = vpop.f32.mrf.mxu0
    %2209 = vdwg.mxu0
    %2210 = vmatprep.subr.bf16.mxu0 %v410
    %2211 = vmatpush1.bf16.msra.mxu0 %v409
    %2212 = vmatprep.subr.bf16.mxu0 %v406
    %2213 = vmatpush1.bf16.msra.mxu0 %v405
    %2214 = vmatprep.subr.bf16.mxu0 %v402
    %2215 = vmatpush1.bf16.msra.mxu0 %v401
    %2216 = vmatprep.subr.bf16.mxu0 %v398
    %2217 = vmatpush1.bf16.msra.mxu0 %v397
    %2218 = vmatprep.subr.bf16.mxu0 %v394
    %2219 = vmatpush1.bf16.msra.mxu0 %v393
    %2220 = vmatprep.subr.bf16.mxu0 %v390
    %2221 = vmatpush1.bf16.msra.mxu0 %v389
    %2222 = vmatprep.subr.bf16.mxu0 %v386
    %2223 = vmatpush1.bf16.msra.mxu0 %v385
    %2224 = vmatprep.subr.bf16.mxu0 %v382
    %2225 = vmatpush1.bf16.msra.mxu0 %v381
    %2226 = vmatprep.subr.bf16.mxu0 0
    %2227 = vmatpush2.bf16.msra.mxu0 0
    %2228 = vmatprep.subr.bf16.mxu0 0
    %2229 = vmatpush2.bf16.msra.mxu0 0
    %2230 = vmatprep.subr.bf16.mxu0 0
    %2231 = vmatpush2.bf16.msra.mxu0 0
    %2232 = vmatprep.subr.bf16.mxu0 0
    %2233 = vmatpush2.bf16.msra.mxu0 0
    %2234 = vmatprep.subr.bf16.mxu0 0
    %2235 = vmatpush2.bf16.msra.mxu0 0
    %2236 = vmatprep.subr.bf16.mxu0 0
    %2237 = vmatpush2.bf16.msra.mxu0 0
    %2238 = vmatprep.subr.bf16.mxu0 0
    %2239 = vmatpush2.bf16.msra.mxu0 0
    %2240 = vmatprep.subr.bf16.mxu0 0
    %2241 = vmatpush2.bf16.msra.mxu0 0
    %2242 = vmatprep.mubr.bf16.mxu0 0
    %2243 = vmatmul.mubr.bf16.gmra.mxu0 %v2167
    %v2244 = vpop.f32.mrf.mxu0
    %v2245 = vadd.f32 0.0, %v2244
    %v2246 = vpop.f32.mrf.mxu0
    %v2247 = vadd.f32 0.0, %v2246
    %v2248 = vpop.f32.mrf.mxu0
    %v2249 = vpop.f32.mrf.mxu0
    %2250 = vdwg.mxu0
    %v2255 = vrot.slane %v2204, 2
    %v2256 = vrot.slane %v2206, 2
    %v2257 = vrot.slane %v2245, 2
    %v2258 = vrot.slane %v2247, 2
    %v2263 = vadd.f32 %v197, %v2255
    %v2264 = vadd.f32 %v199, %v2256
    %v2265 = vadd.f32 %v238, %v2257
    %v2266 = vadd.f32 %v240, %v2258
    %v2267 = vxor.u32 %v2263, 2147483648
    %v2268 = vmul.f32 %v2267, 1.442695
    %v2269 = vpow.pop %v2268
    %v2270 = vadd.f32 %v2269, 1.0
    %v2271 = vrcp.pop %v2270
    %v2272 = vmul.f32 1.0, %v2271
    %v2273 = vxor.u32 %v2264, 2147483648
    %v2274 = vmul.f32 %v2273, 1.442695
    %v2275 = vpow.pop %v2274
    %v2276 = vadd.f32 %v2275, 1.0
    %v2277 = vrcp.pop %v2276
    %v2278 = vmul.f32 1.0, %v2277
    %v2279 = vtanh.pop %v2265
    %v2280 = vxor.u32 %v2266, 2147483648
    %v2281 = vmul.f32 %v2280, 1.442695
    %v2282 = vpow.pop %v2281
    %v2283 = vadd.f32 %v2282, 1.0
    %v2284 = vrcp.pop %v2283
    %v2285 = vmul.f32 1.0, %v2284
    %v2287 = vrot.slane %v2049, 7
    %v2289 = vmul.f32 %v2278, %v2287
    %v2290 = vmul.f32 %v2272, %v2279
    %v2291 = vadd.f32 %v2289, %v2290
    %v2292 = vtanh.pop %v2291
    %v2293 = vmul.f32 %v2285, %v2292
    %v2294 = vpack.c.bf16 %v2162, %v2162
    %v2296 = vshll.u32 %v2294, 16
    %v2298 = vrot.slane %v2296, 6
    %v2300 = vshrl.u32 %v2298, 16
    %v2302 = vrot.slane %v2300, 2
    %2304 = vmatprep.subr.bf16.mxu0 %v966
    %2305 = vmatpush1.bf16.msra.mxu0 %v965
    %2306 = vmatprep.subr.bf16.mxu0 %v962
    %2307 = vmatpush1.bf16.msra.mxu0 %v961
    %2308 = vmatprep.subr.bf16.mxu0 %v958
    %2309 = vmatpush1.bf16.msra.mxu0 %v957
    %2310 = vmatprep.subr.bf16.mxu0 %v954
    %2311 = vmatpush1.bf16.msra.mxu0 %v953
    %2312 = vmatprep.subr.bf16.mxu0 %v950
    %2313 = vmatpush1.bf16.msra.mxu0 %v949
    %2314 = vmatprep.subr.bf16.mxu0 %v946
    %2315 = vmatpush1.bf16.msra.mxu0 %v945
    %2316 = vmatprep.subr.bf16.mxu0 %v942
    %2317 = vmatpush1.bf16.msra.mxu0 %v941
    %2318 = vmatprep.subr.bf16.mxu0 %v938
    %2319 = vmatpush1.bf16.msra.mxu0 %v937
    %2320 = vmatprep.subr.bf16.mxu0 %v998
    %2321 = vmatpush2.bf16.msra.mxu0 %v997
    %2322 = vmatprep.subr.bf16.mxu0 %v994
    %2323 = vmatpush2.bf16.msra.mxu0 %v993
    %2324 = vmatprep.subr.bf16.mxu0 %v990
    %2325 = vmatpush2.bf16.msra.mxu0 %v989
    %2326 = vmatprep.subr.bf16.mxu0 %v986
    %2327 = vmatpush2.bf16.msra.mxu0 %v985
    %2328 = vmatprep.subr.bf16.mxu0 %v982
    %2329 = vmatpush2.bf16.msra.mxu0 %v981
    %2330 = vmatprep.subr.bf16.mxu0 %v978
    %2331 = vmatpush2.bf16.msra.mxu0 %v977
    %2332 = vmatprep.subr.bf16.mxu0 %v974
    %2333 = vmatpush2.bf16.msra.mxu0 %v973
    %2334 = vmatprep.subr.bf16.mxu0 %v970
    %2335 = vmatpush2.bf16.msra.mxu0 %v969
    %2336 = vmatprep.mubr.bf16.mxu0 %v2302
    %2337 = vmatmul.mubr.bf16.gmra.mxu0 %v2167
    %v2338 = vpop.f32.mrf.mxu0
    %v2339 = vadd.f32 %v1069, %v2338
    %v2340 = vpop.f32.mrf.mxu0
    %v2341 = vadd.f32 %v1073, %v2340
    %v2342 = vpop.f32.mrf.mxu0
    %v2343 = vpop.f32.mrf.mxu0
    %2344 = vdwg.mxu0
    %2345 = vmatprep.subr.bf16.mxu0 %v968
    %2346 = vmatpush1.bf16.msra.mxu0 %v967
    %2347 = vmatprep.subr.bf16.mxu0 %v964
    %2348 = vmatpush1.bf16.msra.mxu0 %v963
    %2349 = vmatprep.subr.bf16.mxu0 %v960
    %2350 = vmatpush1.bf16.msra.mxu0 %v959
    %2351 = vmatprep.subr.bf16.mxu0 %v956
    %2352 = vmatpush1.bf16.msra.mxu0 %v955
    %2353 = vmatprep.subr.bf16.mxu0 %v952
    %2354 = vmatpush1.bf16.msra.mxu0 %v951
    %2355 = vmatprep.subr.bf16.mxu0 %v948
    %2356 = vmatpush1.bf16.msra.mxu0 %v947
    %2357 = vmatprep.subr.bf16.mxu0 %v944
    %2358 = vmatpush1.bf16.msra.mxu0 %v943
    %2359 = vmatprep.subr.bf16.mxu0 %v940
    %2360 = vmatpush1.bf16.msra.mxu0 %v939
    %2361 = vmatprep.subr.bf16.mxu0 %v1000
    %2362 = vmatpush2.bf16.msra.mxu0 %v999
    %2363 = vmatprep.subr.bf16.mxu0 %v996
    %2364 = vmatpush2.bf16.msra.mxu0 %v995
    %2365 = vmatprep.subr.bf16.mxu0 %v992
    %2366 = vmatpush2.bf16.msra.mxu0 %v991
    %2367 = vmatprep.subr.bf16.mxu0 %v988
    %2368 = vmatpush2.bf16.msra.mxu0 %v987
    %2369 = vmatprep.subr.bf16.mxu0 %v984
    %2370 = vmatpush2.bf16.msra.mxu0 %v983
    %2371 = vmatprep.subr.bf16.mxu0 %v980
    %2372 = vmatpush2.bf16.msra.mxu0 %v979
    %2373 = vmatprep.subr.bf16.mxu0 %v976
    %2374 = vmatpush2.bf16.msra.mxu0 %v975
    %2375 = vmatprep.subr.bf16.mxu0 %v972
    %2376 = vmatpush2.bf16.msra.mxu0 %v971
    %2377 = vmatprep.mubr.bf16.mxu0 %v2302
    %2378 = vmatmul.mubr.bf16.gmra.mxu0 %v2167
    %v2379 = vpop.f32.mrf.mxu0
    %v2380 = vadd.f32 %v1077, %v2379
    %v2381 = vpop.f32.mrf.mxu0
    %v2382 = vadd.f32 %v1081, %v2381
    %v2383 = vpop.f32.mrf.mxu0
    %v2384 = vpop.f32.mrf.mxu0
    %2385 = vdwg.mxu0
    %v2386 = vxor.u32 %v2339, 2147483648
    %v2387 = vmul.f32 %v2386, 1.442695
    %v2388 = vpow.pop %v2387
    %v2389 = vadd.f32 %v2388, 1.0
    %v2390 = vrcp.pop %v2389
    %v2391 = vmul.f32 1.0, %v2390
    %v2392 = vxor.u32 %v2341, 2147483648
    %v2393 = vmul.f32 %v2392, 1.442695
    %v2394 = vpow.pop %v2393
    %v2395 = vadd.f32 %v2394, 1.0
    %v2396 = vrcp.pop %v2395
    %v2397 = vmul.f32 1.0, %v2396
    %v2398 = vtanh.pop %v2380
    %v2399 = vxor.u32 %v2382, 2147483648
    %v2400 = vmul.f32 %v2399, 1.442695
    %v2401 = vpow.pop %v2400
    %v2402 = vadd.f32 %v2401, 1.0
    %v2403 = vrcp.pop %v2402
    %v2404 = vmul.f32 1.0, %v2403
    %v2405 = vmul.f32 %v2397, %v2160
    %v2406 = vmul.f32 %v2391, %v2398
    %v2407 = vadd.f32 %v2405, %v2406
    %v2408 = vtanh.pop %v2407
    %v2409 = vmul.f32 %v2404, %v2408
    %v2410 = vpack.c.bf16 %v2293, %v2293
    %v2412 = vrot.slane %v2410, 3
    %2414 = vmatprep.subr.bf16.mxu0 %v408
    %2415 = vmatpush1.bf16.msra.mxu0 %v407
    %2416 = vmatprep.subr.bf16.mxu0 %v404
    %2417 = vmatpush1.bf16.msra.mxu0 %v403
    %2418 = vmatprep.subr.bf16.mxu0 %v400
    %2419 = vmatpush1.bf16.msra.mxu0 %v399
    %2420 = vmatprep.subr.bf16.mxu0 %v396
    %2421 = vmatpush1.bf16.msra.mxu0 %v395
    %2422 = vmatprep.subr.bf16.mxu0 %v392
    %2423 = vmatpush1.bf16.msra.mxu0 %v391
    %2424 = vmatprep.subr.bf16.mxu0 %v388
    %2425 = vmatpush1.bf16.msra.mxu0 %v387
    %2426 = vmatprep.subr.bf16.mxu0 %v384
    %2427 = vmatpush1.bf16.msra.mxu0 %v383
    %2428 = vmatprep.subr.bf16.mxu0 %v380
    %2429 = vmatpush1.bf16.msra.mxu0 %v379
    %2430 = vmatprep.subr.bf16.mxu0 0
    %2431 = vmatpush2.bf16.msra.mxu0 0
    %2432 = vmatprep.subr.bf16.mxu0 0
    %2433 = vmatpush2.bf16.msra.mxu0 0
    %2434 = vmatprep.subr.bf16.mxu0 0
    %2435 = vmatpush2.bf16.msra.mxu0 0
    %2436 = vmatprep.subr.bf16.mxu0 0
    %2437 = vmatpush2.bf16.msra.mxu0 0
    %2438 = vmatprep.subr.bf16.mxu0 0
    %2439 = vmatpush2.bf16.msra.mxu0 0
    %2440 = vmatprep.subr.bf16.mxu0 0
    %2441 = vmatpush2.bf16.msra.mxu0 0
    %2442 = vmatprep.subr.bf16.mxu0 0
    %2443 = vmatpush2.bf16.msra.mxu0 0
    %2444 = vmatprep.subr.bf16.mxu0 0
    %2445 = vmatpush2.bf16.msra.mxu0 0
    %2446 = vmatprep.mubr.bf16.mxu0 0
    %2447 = vmatmul.mubr.bf16.gmra.mxu0 %v2412
    %v2448 = vpop.f32.mrf.mxu0
    %v2449 = vadd.f32 0.0, %v2448
    %v2450 = vpop.f32.mrf.mxu0
    %v2451 = vadd.f32 0.0, %v2450
    %v2452 = vpop.f32.mrf.mxu0
    %v2453 = vpop.f32.mrf.mxu0
    %2454 = vdwg.mxu0
    %2455 = vmatprep.subr.bf16.mxu0 %v410
    %2456 = vmatpush1.bf16.msra.mxu0 %v409
    %2457 = vmatprep.subr.bf16.mxu0 %v406
    %2458 = vmatpush1.bf16.msra.mxu0 %v405
    %2459 = vmatprep.subr.bf16.mxu0 %v402
    %2460 = vmatpush1.bf16.msra.mxu0 %v401
    %2461 = vmatprep.subr.bf16.mxu0 %v398
    %2462 = vmatpush1.bf16.msra.mxu0 %v397
    %2463 = vmatprep.subr.bf16.mxu0 %v394
    %2464 = vmatpush1.bf16.msra.mxu0 %v393
    %2465 = vmatprep.subr.bf16.mxu0 %v390
    %2466 = vmatpush1.bf16.msra.mxu0 %v389
    %2467 = vmatprep.subr.bf16.mxu0 %v386
    %2468 = vmatpush1.bf16.msra.mxu0 %v385
    %2469 = vmatprep.subr.bf16.mxu0 %v382
    %2470 = vmatpush1.bf16.msra.mxu0 %v381
    %2471 = vmatprep.subr.bf16.mxu0 0
    %2472 = vmatpush2.bf16.msra.mxu0 0
    %2473 = vmatprep.subr.bf16.mxu0 0
    %2474 = vmatpush2.bf16.msra.mxu0 0
    %2475 = vmatprep.subr.bf16.mxu0 0
    %2476 = vmatpush2.bf16.msra.mxu0 0
    %2477 = vmatprep.subr.bf16.mxu0 0
    %2478 = vmatpush2.bf16.msra.mxu0 0
    %2479 = vmatprep.subr.bf16.mxu0 0
    %2480 = vmatpush2.bf16.msra.mxu0 0
    %2481 = vmatprep.subr.bf16.mxu0 0
    %2482 = vmatpush2.bf16.msra.mxu0 0
    %2483 = vmatprep.subr.bf16.mxu0 0
    %2484 = vmatpush2.bf16.msra.mxu0 0
    %2485 = vmatprep.subr.bf16.mxu0 0
    %2486 = vmatpush2.bf16.msra.mxu0 0
    %2487 = vmatprep.mubr.bf16.mxu0 0
    %2488 = vmatmul.mubr.bf16.gmra.mxu0 %v2412
    %v2489 = vpop.f32.mrf.mxu0
    %v2490 = vadd.f32 0.0, %v2489
    %v2491 = vpop.f32.mrf.mxu0
    %v2492 = vadd.f32 0.0, %v2491
    %v2493 = vpop.f32.mrf.mxu0
    %v2494 = vpop.f32.mrf.mxu0
    %2495 = vdwg.mxu0
    %v2500 = vrot.slane %v2449, 1
    %v2501 = vrot.slane %v2451, 1
    %v2502 = vrot.slane %v2490, 1
    %v2503 = vrot.slane %v2492, 1
    %v2508 = vadd.f32 %v197, %v2500
    %v2509 = vadd.f32 %v199, %v2501
    %v2510 = vadd.f32 %v238, %v2502
    %v2511 = vadd.f32 %v240, %v2503
    %v2512 = vxor.u32 %v2508, 2147483648
    %v2513 = vmul.f32 %v2512, 1.442695
    %v2514 = vpow.pop %v2513
    %v2515 = vadd.f32 %v2514, 1.0
    %v2516 = vrcp.pop %v2515
    %v2517 = vmul.f32 1.0, %v2516
    %v2518 = vxor.u32 %v2509, 2147483648
    %v2519 = vmul.f32 %v2518, 1.442695
    %v2520 = vpow.pop %v2519
    %v2521 = vadd.f32 %v2520, 1.0
    %v2522 = vrcp.pop %v2521
    %v2523 = vmul.f32 1.0, %v2522
    %v2524 = vtanh.pop %v2510
    %v2525 = vxor.u32 %v2511, 2147483648
    %v2526 = vmul.f32 %v2525, 1.442695
    %v2527 = vpow.pop %v2526
    %v2528 = vadd.f32 %v2527, 1.0
    %v2529 = vrcp.pop %v2528
    %v2530 = vmul.f32 1.0, %v2529
    %v2532 = vrot.slane %v2291, 7
    %v2534 = vmul.f32 %v2523, %v2532
    %v2535 = vmul.f32 %v2517, %v2524
    %v2536 = vadd.f32 %v2534, %v2535
    %v2537 = vtanh.pop %v2536
    %v2538 = vmul.f32 %v2530, %v2537
    %v2539 = vpack.c.bf16 %v2409, %v2409
    %v2541 = vrot.slane %v2539, 5
    %v2542 = vrot.slane %v2541, 3
    %2544 = vmatprep.subr.bf16.mxu0 %v966
    %2545 = vmatpush1.bf16.msra.mxu0 %v965
    %2546 = vmatprep.subr.bf16.mxu0 %v962
    %2547 = vmatpush1.bf16.msra.mxu0 %v961
    %2548 = vmatprep.subr.bf16.mxu0 %v958
    %2549 = vmatpush1.bf16.msra.mxu0 %v957
    %2550 = vmatprep.subr.bf16.mxu0 %v954
    %2551 = vmatpush1.bf16.msra.mxu0 %v953
    %2552 = vmatprep.subr.bf16.mxu0 %v950
    %2553 = vmatpush1.bf16.msra.mxu0 %v949
    %2554 = vmatprep.subr.bf16.mxu0 %v946
    %2555 = vmatpush1.bf16.msra.mxu0 %v945
    %2556 = vmatprep.subr.bf16.mxu0 %v942
    %2557 = vmatpush1.bf16.msra.mxu0 %v941
    %2558 = vmatprep.subr.bf16.mxu0 %v938
    %2559 = vmatpush1.bf16.msra.mxu0 %v937
    %2560 = vmatprep.subr.bf16.mxu0 %v998
    %2561 = vmatpush2.bf16.msra.mxu0 %v997
    %2562 = vmatprep.subr.bf16.mxu0 %v994
    %2563 = vmatpush2.bf16.msra.mxu0 %v993
    %2564 = vmatprep.subr.bf16.mxu0 %v990
    %2565 = vmatpush2.bf16.msra.mxu0 %v989
    %2566 = vmatprep.subr.bf16.mxu0 %v986
    %2567 = vmatpush2.bf16.msra.mxu0 %v985
    %2568 = vmatprep.subr.bf16.mxu0 %v982
    %2569 = vmatpush2.bf16.msra.mxu0 %v981
    %2570 = vmatprep.subr.bf16.mxu0 %v978
    %2571 = vmatpush2.bf16.msra.mxu0 %v977
    %2572 = vmatprep.subr.bf16.mxu0 %v974
    %2573 = vmatpush2.bf16.msra.mxu0 %v973
    %2574 = vmatprep.subr.bf16.mxu0 %v970
    %2575 = vmatpush2.bf16.msra.mxu0 %v969
    %2576 = vmatprep.mubr.bf16.mxu0 %v2542
    %2577 = vmatmul.mubr.bf16.gmra.mxu0 %v2412
    %v2578 = vpop.f32.mrf.mxu0
    %v2579 = vadd.f32 %v1069, %v2578
    %v2580 = vpop.f32.mrf.mxu0
    %v2581 = vadd.f32 %v1073, %v2580
    %v2582 = vpop.f32.mrf.mxu0
    %v2583 = vpop.f32.mrf.mxu0
    %2584 = vdwg.mxu0
    %2585 = vmatprep.subr.bf16.mxu0 %v968
    %2586 = vmatpush1.bf16.msra.mxu0 %v967
    %2587 = vmatprep.subr.bf16.mxu0 %v964
    %2588 = vmatpush1.bf16.msra.mxu0 %v963
    %2589 = vmatprep.subr.bf16.mxu0 %v960
    %2590 = vmatpush1.bf16.msra.mxu0 %v959
    %2591 = vmatprep.subr.bf16.mxu0 %v956
    %2592 = vmatpush1.bf16.msra.mxu0 %v955
    %2593 = vmatprep.subr.bf16.mxu0 %v952
    %2594 = vmatpush1.bf16.msra.mxu0 %v951
    %2595 = vmatprep.subr.bf16.mxu0 %v948
    %2596 = vmatpush1.bf16.msra.mxu0 %v947
    %2597 = vmatprep.subr.bf16.mxu0 %v944
    %2598 = vmatpush1.bf16.msra.mxu0 %v943
    %2599 = vmatprep.subr.bf16.mxu0 %v940
    %2600 = vmatpush1.bf16.msra.mxu0 %v939
    %2601 = vmatprep.subr.bf16.mxu0 %v1000
    %2602 = vmatpush2.bf16.msra.mxu0 %v999
    %2603 = vmatprep.subr.bf16.mxu0 %v996
    %2604 = vmatpush2.bf16.msra.mxu0 %v995
    %2605 = vmatprep.subr.bf16.mxu0 %v992
    %2606 = vmatpush2.bf16.msra.mxu0 %v991
    %2607 = vmatprep.subr.bf16.mxu0 %v988
    %2608 = vmatpush2.bf16.msra.mxu0 %v987
    %2609 = vmatprep.subr.bf16.mxu0 %v984
    %2610 = vmatpush2.bf16.msra.mxu0 %v983
    %2611 = vmatprep.subr.bf16.mxu0 %v980
    %2612 = vmatpush2.bf16.msra.mxu0 %v979
    %2613 = vmatprep.subr.bf16.mxu0 %v976
    %2614 = vmatpush2.bf16.msra.mxu0 %v975
    %2615 = vmatprep.subr.bf16.mxu0 %v972
    %2616 = vmatpush2.bf16.msra.mxu0 %v971
    %2617 = vmatprep.mubr.bf16.mxu0 %v2542
    %2618 = vmatmul.mubr.bf16.gmra.mxu0 %v2412
    %v2619 = vpop.f32.mrf.mxu0
    %v2620 = vadd.f32 %v1077, %v2619
    %v2621 = vpop.f32.mrf.mxu0
    %v2622 = vadd.f32 %v1081, %v2621
    %v2623 = vpop.f32.mrf.mxu0
    %v2624 = vpop.f32.mrf.mxu0
    %2625 = vdwg.mxu0
    %v2626 = vxor.u32 %v2579, 2147483648
    %v2627 = vmul.f32 %v2626, 1.442695
    %v2628 = vpow.pop %v2627
    %v2629 = vadd.f32 %v2628, 1.0
    %v2630 = vrcp.pop %v2629
    %v2631 = vmul.f32 1.0, %v2630
    %v2632 = vxor.u32 %v2581, 2147483648
    %v2633 = vmul.f32 %v2632, 1.442695
    %v2634 = vpow.pop %v2633
    %v2635 = vadd.f32 %v2634, 1.0
    %v2636 = vrcp.pop %v2635
    %v2637 = vmul.f32 1.0, %v2636
    %v2638 = vtanh.pop %v2620
    %v2639 = vxor.u32 %v2622, 2147483648
    %v2640 = vmul.f32 %v2639, 1.442695
    %v2641 = vpow.pop %v2640
    %v2642 = vadd.f32 %v2641, 1.0
    %v2643 = vrcp.pop %v2642
    %v2644 = vmul.f32 1.0, %v2643
    %v2645 = vmul.f32 %v2637, %v2407
    %v2646 = vmul.f32 %v2631, %v2638
    %v2647 = vadd.f32 %v2645, %v2646
    %v2648 = vtanh.pop %v2647
    %v2649 = vmul.f32 %v2644, %v2648
    %v2650 = vpack.c.bf16 %v2538, %v2538
    %v2651 = vpack.c.bf16 %v2649, %v2649
    %v2653 = vshll.u32 %v2651, 16
    %v2655 = vrot.slane %v2653, 5
    %v2657 = vshrl.u32 %v2650, 16
    %v2659 = vrot.slane %v2657, 3
    %v2661 = vshrl.u32 %v2655, 16
    %v2663 = vrot.slane %v2661, 3
    %2666 = vmatprep.subr.bf16.mxu0 %v966
    %2667 = vmatpush1.bf16.msra.mxu0 %v965
    %2668 = vmatprep.subr.bf16.mxu0 %v962
    %2669 = vmatpush1.bf16.msra.mxu0 %v961
    %2670 = vmatprep.subr.bf16.mxu0 %v958
    %2671 = vmatpush1.bf16.msra.mxu0 %v957
    %2672 = vmatprep.subr.bf16.mxu0 %v954
    %2673 = vmatpush1.bf16.msra.mxu0 %v953
    %2674 = vmatprep.subr.bf16.mxu0 %v950
    %2675 = vmatpush1.bf16.msra.mxu0 %v949
    %2676 = vmatprep.subr.bf16.mxu0 %v946
    %2677 = vmatpush1.bf16.msra.mxu0 %v945
    %2678 = vmatprep.subr.bf16.mxu0 %v942
    %2679 = vmatpush1.bf16.msra.mxu0 %v941
    %2680 = vmatprep.subr.bf16.mxu0 %v938
    %2681 = vmatpush1.bf16.msra.mxu0 %v937
    %2682 = vmatprep.subr.bf16.mxu0 %v998
    %2683 = vmatpush2.bf16.msra.mxu0 %v997
    %2684 = vmatprep.subr.bf16.mxu0 %v994
    %2685 = vmatpush2.bf16.msra.mxu0 %v993
    %2686 = vmatprep.subr.bf16.mxu0 %v990
    %2687 = vmatpush2.bf16.msra.mxu0 %v989
    %2688 = vmatprep.subr.bf16.mxu0 %v986
    %2689 = vmatpush2.bf16.msra.mxu0 %v985
    %2690 = vmatprep.subr.bf16.mxu0 %v982
    %2691 = vmatpush2.bf16.msra.mxu0 %v981
    %2692 = vmatprep.subr.bf16.mxu0 %v978
    %2693 = vmatpush2.bf16.msra.mxu0 %v977
    %2694 = vmatprep.subr.bf16.mxu0 %v974
    %2695 = vmatpush2.bf16.msra.mxu0 %v973
    %2696 = vmatprep.subr.bf16.mxu0 %v970
    %2697 = vmatpush2.bf16.msra.mxu0 %v969
    %2698 = vmatprep.mubr.bf16.mxu0 %v2663
    %2699 = vmatmul.mubr.bf16.gmra.mxu0 %v2659
    %v2700 = vpop.f32.mrf.mxu0
    %v2701 = vadd.f32 %v1069, %v2700
    %v2702 = vpop.f32.mrf.mxu0
    %v2703 = vadd.f32 %v1073, %v2702
    %v2704 = vpop.f32.mrf.mxu0
    %v2705 = vpop.f32.mrf.mxu0
    %2706 = vdwg.mxu0
    %2707 = vmatprep.subr.bf16.mxu0 %v968
    %2708 = vmatpush1.bf16.msra.mxu0 %v967
    %2709 = vmatprep.subr.bf16.mxu0 %v964
    %2710 = vmatpush1.bf16.msra.mxu0 %v963
    %2711 = vmatprep.subr.bf16.mxu0 %v960
    %2712 = vmatpush1.bf16.msra.mxu0 %v959
    %2713 = vmatprep.subr.bf16.mxu0 %v956
    %2714 = vmatpush1.bf16.msra.mxu0 %v955
    %2715 = vmatprep.subr.bf16.mxu0 %v952
    %2716 = vmatpush1.bf16.msra.mxu0 %v951
    %2717 = vmatprep.subr.bf16.mxu0 %v948
    %2718 = vmatpush1.bf16.msra.mxu0 %v947
    %2719 = vmatprep.subr.bf16.mxu0 %v944
    %2720 = vmatpush1.bf16.msra.mxu0 %v943
    %2721 = vmatprep.subr.bf16.mxu0 %v940
    %2722 = vmatpush1.bf16.msra.mxu0 %v939
    %2723 = vmatprep.subr.bf16.mxu0 %v1000
    %2724 = vmatpush2.bf16.msra.mxu0 %v999
    %2725 = vmatprep.subr.bf16.mxu0 %v996
    %2726 = vmatpush2.bf16.msra.mxu0 %v995
    %2727 = vmatprep.subr.bf16.mxu0 %v992
    %2728 = vmatpush2.bf16.msra.mxu0 %v991
    %2729 = vmatprep.subr.bf16.mxu0 %v988
    %2730 = vmatpush2.bf16.msra.mxu0 %v987
    %2731 = vmatprep.subr.bf16.mxu0 %v984
    %2732 = vmatpush2.bf16.msra.mxu0 %v983
    %2733 = vmatprep.subr.bf16.mxu0 %v980
    %2734 = vmatpush2.bf16.msra.mxu0 %v979
    %2735 = vmatprep.subr.bf16.mxu0 %v976
    %2736 = vmatpush2.bf16.msra.mxu0 %v975
    %2737 = vmatprep.subr.bf16.mxu0 %v972
    %2738 = vmatpush2.bf16.msra.mxu0 %v971
    %2739 = vmatprep.mubr.bf16.mxu0 %v2663
    %2740 = vmatmul.mubr.bf16.gmra.mxu0 %v2659
    %v2741 = vpop.f32.mrf.mxu0
    %v2742 = vadd.f32 %v1077, %v2741
    %v2743 = vpop.f32.mrf.mxu0
    %v2744 = vadd.f32 %v1081, %v2743
    %v2745 = vpop.f32.mrf.mxu0
    %v2746 = vpop.f32.mrf.mxu0
    %2747 = vdwg.mxu0
    %v2748 = vxor.u32 %v2701, 2147483648
    %v2749 = vmul.f32 %v2748, 1.442695
    %v2750 = vpow.pop %v2749
    %v2751 = vadd.f32 %v2750, 1.0
    %v2752 = vrcp.pop %v2751
    %v2753 = vmul.f32 1.0, %v2752
    %v2754 = vxor.u32 %v2703, 2147483648
    %v2755 = vmul.f32 %v2754, 1.442695
    %v2756 = vpow.pop %v2755
    %v2757 = vadd.f32 %v2756, 1.0
    %v2758 = vrcp.pop %v2757
    %v2759 = vmul.f32 1.0, %v2758
    %v2760 = vtanh.pop %v2742
    %v2761 = vxor.u32 %v2744, 2147483648
    %v2762 = vmul.f32 %v2761, 1.442695
    %v2763 = vpow.pop %v2762
    %v2764 = vadd.f32 %v2763, 1.0
    %v2765 = vrcp.pop %v2764
    %v2766 = vmul.f32 1.0, %v2765
    %v2767 = vmul.f32 %v2759, %v2647
    %v2768 = vmul.f32 %v2753, %v2760
    %v2769 = vadd.f32 %v2767, %v2768
    %v2770 = vtanh.pop %v2769
    %v2771 = vmul.f32 %v2766, %v2770
    %2772 = vst [vmem:[#allocation13] sm:$0x1] %v2771
    // Predicated region
    $region58: #{tpu_custom_call.1} parent=1 // pred_check
      _
    $region59: #{tpu_custom_call.1} parent=1 // pred_check_branch
      %2774 = sbr.rel (0) target = $region61
    $region60: #{tpu_custom_call.1} parent=1 // pred_region
      %s2776 = ssub.s32 16, 16
      %2777 = vsyncadd [#allocation4], %s2776
      %s2779 = sshll.u32 [#allocation13], 4
      %s2780 = int_to_ptr.vmem [resolvable:$true] %s2779
      %2782 = dma.vmem_to_hbm [thread:$0]  %s2780, 16, %s8, [#allocation4]
    $region61: #{tpu_custom_call.1} parent=1 // pred_fallthru
      _
    // Predicated region
    $region62: #{tpu_custom_call.1} parent=1 // pred_check
      _
    $region63: #{tpu_custom_call.1} parent=1 // pred_check_branch
      %2784 = sbr.rel (0) target = $region65
    $region64: #{tpu_custom_call.1} parent=1 // pred_region
      %2785 = dma.done [#allocation4], 16
    $region65: #{tpu_custom_call.1} parent=1 // pred_fallthru
      _
    %2786 = vsyncpa [#allocation3], 1
    %2787 = vsyncpa [#allocation6], 1
    %2788 = vsyncpa [#allocation9], 1
    %2789 = vsyncpa [#allocation12], 1
    %2790 = vsyncpa [#allocation4], 1

</llo_original>
